<compile_context>
chip_gen: v5e
topology: v5e:2x2
jax: 0.10.0
libtpu: 0.0.40
codegen_flags: <defaults>
</compile_context>

<pallas_src>
import functools
import numpy as np

import jax
import jax.numpy as jnp
from jax import lax
from jax.experimental import pallas as pl
from jax.experimental.pallas import tpu as pltpu

_MM_PREC = lax.Precision.HIGHEST  # keep kernel & reference numerically aligned


# -----------------------------------------------------------------------------
# Fused SMLayer kernel.  One grid step == `m` batch elements, block (m*C, H*W).
#   x_ref      : (m*C, N)   input block  (N = H*W; channels on sublanes)
#   coords_ref : (2, N)     f32 pixel row / col indices (for border masks)
#   ln*_ref    : (C, 1)     BiasFree LayerNorm weights
#   w1*_ref    : (Hd, C/2)  first 1x1 conv (channels-first matmul W @ X)
#   b1*_ref    : (Hd, 1)
#   w2*_ref    : (C/2, Hd)  second 1x1 conv
#   b2*_ref    : (C/2, 1)
#   pm1/pm2    : (C, C/2)   one-hot channel-shuffle permutation halves
#   dww_ref    : (C, k*k)   depthwise conv taps (per channel)
#   dwb_ref    : (C, 1)     depthwise conv bias
#   o_ref      : (m*C, N)   output block
# -----------------------------------------------------------------------------
def _sm_layer_kernel(x_ref, coords_ref, ln1_ref, w1a_ref, b1a_ref, w2a_ref,
                     b2a_ref, ln2_ref, w1b_ref, b1b_ref, w2b_ref, b2b_ref,
                     pm1_ref, pm2_ref, dww_ref, dwb_ref, o_ref,
                     *, c, h, w, k, m):
    n = h * w
    c_half = c // 2
    pad = k // 2

    # Pixel row / col indices (f32, lane axis) for the in-kernel border masks.
    row = coords_ref[0:1, :]
    col = coords_ref[1:2, :]

    # Hoisted parameter loads (shared by all m batch elements in this step).
    ln1 = ln1_ref[...]
    ln2 = ln2_ref[...]
    w1a, b1a, w2a, b2a = w1a_ref[...], b1a_ref[...], w2a_ref[...], b2a_ref[...]
    w1b, b1b, w2b, b2b = w1b_ref[...], b1b_ref[...], w2b_ref[...], b2b_ref[...]
    pm1, pm2 = pm1_ref[...], pm2_ref[...]
    dww, dwb = dww_ref[...], dwb_ref[...]

    def layer_norm(v, gamma):
        # BiasFree LayerNorm over channels (sublane axis), single pass:
        # var = E[x^2] - mu^2; rsqrt runs on the EUP slot.
        mu = jnp.mean(v, axis=0, keepdims=True)
        ms = jnp.mean(v * v, axis=0, keepdims=True)
        var = ms - mu * mu
        return (v - mu) * lax.rsqrt(var + 1e-5) * gamma

    def split_mlp_shuffle_res(v, gamma, w1, b1, w2, b2):
        # LN -> 1x1 conv -> SiLU -> 1x1 conv on the first channel half, then
        # channel shuffle as two one-hot permutation matmuls (MXU has slack;
        # exact 0/1 weights), then residual add -> one full-block value.
        vn = layer_norm(v, gamma)
        x1 = vn[:c_half, :]
        x2 = vn[c_half:, :]
        hid = jnp.dot(w1, x1, preferred_element_type=jnp.float32,
                      precision=_MM_PREC) + b1
        hid = hid * jax.nn.sigmoid(hid)                      # SiLU
        y1 = jnp.dot(w2, hid, preferred_element_type=jnp.float32,
                     precision=_MM_PREC) + b2
        shuffled = (jnp.dot(pm1, y1, preferred_element_type=jnp.float32,
                            precision=_MM_PREC)
                    + jnp.dot(pm2, x2, preferred_element_type=jnp.float32,
                              precision=_MM_PREC))
        return shuffled + v                                  # residual

    def depthwise(a):
        # Depthwise k x k conv on the flattened (C, N) block: static circular
        # lane rolls (XLU) + border masks from VPU compares.  Every wrapped
        # lane corresponds to a tap reading outside the image, and the mask
        # zeroes exactly those lanes, so the circular shift is exact.
        ctr = pad * k + pad
        acc = a * dww[:, ctr:ctr + 1] + dwb      # center tap: no roll, no mask
        for i in range(k):
            for j in range(k):
                if i == pad and j == pad:
                    continue
                t = i * k + j
                di, dj = i - pad, j - pad
                s = di * w + dj
                # shifted[:, p] = a[:, (p + s) % n]
                shifted = pltpu.roll(a, (-s) % n, axis=1)
                conds = []
                if di > 0:
                    conds.append(row < float(h - di))
                elif di < 0:
                    conds.append(row >= float(-di))
                if dj > 0:
                    conds.append(col < float(w - dj))
                elif dj < 0:
                    conds.append(col >= float(-dj))
                mask = conds[0]
                for extra in conds[1:]:
                    mask = jnp.logical_and(mask, extra)
                shifted = jnp.where(mask, shifted, 0.0)
                acc = acc + shifted * dww[:, t:t + 1]
        return acc

    for e in range(m):                                       # static unroll, m small
        lo = e * c
        xb = x_ref[lo:lo + c, :]
        a = split_mlp_shuffle_res(xb, ln1, w1a, b1a, w2a, b2a)   # stage 1
        conv = depthwise(a)                                      # stage 2
        o_ref[lo:lo + c, :] = split_mlp_shuffle_res(              # stage 3
            conv, ln2, w1b, b1b, w2b, b2b)


# -----------------------------------------------------------------------------
# SMLayer forward (Pallas path).  Input / output are NCHW like PyTorch.
# -----------------------------------------------------------------------------
def sm_layer_forward(x_nchw, params, *, kernel_size):
    b, c, h, w = x_nchw.shape
    assert c % 8 == 0, "channels must be divisible by 8 (shuffle groups / sublanes)"
    assert kernel_size % 2 == 1, "SMLayer assumes an odd depthwise kernel"
    n = h * w
    c_half = c // 2
    k = kernel_size
    hd = params["mlp1_w1"].shape[1]
    d = c // 8

    # Native NCHW view -> (B*C, H*W): channels on sublanes, pixels on lanes.
    x2d = x_nchw.astype(jnp.float32).reshape(b * c, n)

    # Parameter plumbing (trace-time reshapes / transposes only).
    ln1 = params["ln1_w"].reshape(c, 1).astype(jnp.float32)
    ln2 = params["ln2_w"].reshape(c, 1).astype(jnp.float32)
    w1a = params["mlp1_w1"].T                      # (Hd, C/2)
    b1a = params["mlp1_b1"].reshape(hd, 1)
    w2a = params["mlp1_w2"].T                      # (C/2, Hd)
    b2a = params["mlp1_b2"].reshape(c_half, 1)
    w1b = params["mlp2_w1"].T
    b1b = params["mlp2_b1"].reshape(hd, 1)
    w2b = params["mlp2_w2"].T
    b2b = params["mlp2_b2"].reshape(c_half, 1)
    dww = params["dw_w"].reshape(k * k, c).T       # (C, k*k)
    dwb = params["dw_b"].reshape(c, 1)

    # One-hot channel-shuffle permutation: out[co] <- in[(co%8)*d + co//8].
    perm = np.array([(co % 8) * d + (co // 8) for co in range(c)], np.int64)
    pm = np.zeros((c, c), np.float32)
    pm[np.arange(c), perm] = 1.0
    pm1 = jnp.asarray(pm[:, :c_half])              # acts on y1 (first half)
    pm2 = jnp.asarray(pm[:, c_half:])              # acts on x2 (second half)

    # Pixel row / col coordinates (f32) for in-kernel border masks.
    rows = np.repeat(np.arange(h, dtype=np.float32), w)
    cols = np.tile(np.arange(w, dtype=np.float32), h)
    coords = jnp.asarray(np.stack([rows, cols], axis=0))   # (2, N)

    # ---- VMEM budget (per generation) & batch packing ----------------------
    block_bytes = c * n * 4
    try:
        info = pltpu.get_tpu_info()
        phys_vmem = int(getattr(info, "vmem_capacity_bytes", 64 << 20))
    except Exception:  # pragma: no cover - conservative fallback
        phys_vmem = 64 << 20
    # ~25% headroom: ~48 MiB on v7x (64 MiB phys), ~96 MiB on v5e/v6e (128 MiB).
    vmem_cap = max(min(phys_vmem * 3 // 4, 112 << 20), 32 << 20)

    def _fits(mm):
        # 2x double-buffered in + out blocks plus ~10 live full-(C,N) temporaries
        # for the element being processed, plus params / compiler slack.
        return (4 * mm + 10) * block_bytes + (4 << 20) <= vmem_cap

    m = 1
    for cand in range(1, b + 1):
        # keep >= 2 grid steps when B >= 2 (megacore sharding + DMA pipelining)
        if b % cand == 0 and _fits(cand) and (b // cand >= 2 or b == 1):
            m = cand
    assert _fits(m), "per-step block exceeds VMEM; needs row-block tiling (see TODO)"
    # TODO(synk): row-block tiling with a `pad`-row halo for very large H*W.

    kernel = functools.partial(_sm_layer_kernel, c=c, h=h, w=w, k=k, m=m)

    def _const_spec(arr):
        return pl.BlockSpec(tuple(arr.shape), lambda bb: (0, 0))

    out2d = pl.pallas_call(
        kernel,
        out_shape=jax.ShapeDtypeStruct((b * c, n), jnp.float32),
        grid_spec=pltpu.PrefetchScalarGridSpec(
            num_scalar_prefetch=0,
            grid=(b // m,),
            in_specs=[
                pl.BlockSpec((m * c, n), lambda bb: (bb, 0)),   # x
                _const_spec(coords),
                _const_spec(ln1),
                _const_spec(w1a), _const_spec(b1a),
                _const_spec(w2a), _const_spec(b2a),
                _const_spec(ln2),
                _const_spec(w1b), _const_spec(b1b),
                _const_spec(w2b), _const_spec(b2b),
                _const_spec(pm1), _const_spec(pm2),
                _const_spec(dww), _const_spec(dwb),
            ],
            out_specs=pl.BlockSpec((m * c, n), lambda bb: (bb, 0)),
        ),
        compiler_params=pltpu.CompilerParams(
            dimension_semantics=("parallel",),
            vmem_limit_bytes=int(vmem_cap)),
    )(x2d, coords, ln1, w1a, b1a, w2a, b2a, ln2, w1b, b1b, w2b, b2b,
      pm1, pm2, dww, dwb)

    return out2d.reshape(b, c, h, w)


# -----------------------------------------------------------------------------
# Pure-JAX reference mirroring the PyTorch module (for correctness check).
# -----------------------------------------------------------------------------
def sm_layer_reference(x, p, *, kernel_size):
    b, c, h, w = x.shape

    def ln(x, weight):
        xt = jnp.transpose(x, (0, 2, 3, 1))
        mu = xt.mean(-1, keepdims=True)
        var = ((xt - mu) ** 2).mean(-1, keepdims=True)
        y = (xt - mu) / jnp.sqrt(var + 1e-5) * weight
        return jnp.transpose(y, (0, 3, 1, 2))

    def split_mlp(x, w1, b1, w2, b2):
        x1, x2 = x[:, : c // 2], x[:, c // 2:]
        hdd = jnp.einsum("bchw,co->bohw", x1, w1,
                         precision=_MM_PREC) + b1[None, :, None, None]
        hdd = hdd * jax.nn.sigmoid(hdd)
        y1 = jnp.einsum("bchw,co->bohw", hdd, w2,
                        precision=_MM_PREC) + b2[None, :, None, None]
        y = jnp.concatenate([y1, x2], axis=1)
        d = c // 8
        y = y.reshape(b, 8, d, h, w).transpose(0, 2, 1, 3, 4).reshape(b, c, h, w)
        return y

    def dw(x, wk, bk):
        # wk stored as (k, k, C) -> PyTorch OIHW depthwise (C, 1, k, k)
        wk_oihw = jnp.transpose(wk, (2, 0, 1))[:, None, :, :]
        pad = kernel_size // 2
        out = lax.conv_general_dilated(
            x, wk_oihw, (1, 1), [(pad, pad), (pad, pad)],
            dimension_numbers=("NCHW", "OIHW", "NCHW"),
            feature_group_count=c, precision=_MM_PREC)
        return out + bk[None, :, None, None]

    x = split_mlp(ln(x, p["ln1_w"]), p["mlp1_w1"], p["mlp1_b1"],
                  p["mlp1_w2"], p["mlp1_b2"]) + x
    x = dw(x, p["dw_w"], p["dw_b"])
    x = split_mlp(ln(x, p["ln2_w"]), p["mlp2_w1"], p["mlp2_b1"],
                  p["mlp2_w2"], p["mlp2_b2"]) + x
    return x


# -----------------------------------------------------------------------------
# Deterministic parameter init (shapes from SMLayer.__init__).
# -----------------------------------------------------------------------------
def init_params(key, dim, kernel_size, mlp_ratio):
    c_half = dim // 2
    hidden = c_half * mlp_ratio
    ks = jax.random.split(key, 8)
    scale = 0.1
    return {
        "ln1_w": jnp.ones((dim,), jnp.float32),
        "ln2_w": jnp.ones((dim,), jnp.float32),
        "mlp1_w1": scale * jax.random.normal(ks[0], (c_half, hidden), jnp.float32),
        "mlp1_b1": scale * jax.random.normal(ks[1], (hidden,), jnp.float32),
        "mlp1_w2": scale * jax.random.normal(ks[2], (hidden, c_half), jnp.float32),
        "mlp1_b2": scale * jax.random.normal(ks[3], (c_half,), jnp.float32),
        "dw_w": scale * jax.random.normal(ks[4], (kernel_size, kernel_size, dim),
                                          jnp.float32),
        "dw_b": scale * jax.random.normal(ks[5], (dim,), jnp.float32),
        "mlp2_w1": scale * jax.random.normal(ks[6], (c_half, hidden), jnp.float32),
        "mlp2_b1": jnp.zeros((hidden,), jnp.float32),
        "mlp2_w2": scale * jax.random.normal(ks[7], (hidden, c_half), jnp.float32),
        "mlp2_b2": jnp.zeros((c_half,), jnp.float32),
    }


if __name__ == "__main__":
    B, C, H, W = 2, 32, 16, 16      # C must be divisible by 8 (channel shuffle)
    KERNEL_SIZE = 3
    MLP_RATIO = 2

    key = jax.random.PRNGKey(0)
    kx, kp = jax.random.split(key)
    x = jax.random.normal(kx, (B, C, H, W), jnp.float32)
    params = init_params(kp, C, KERNEL_SIZE, MLP_RATIO)

    out = sm_layer_forward(x, params, kernel_size=KERNEL_SIZE)
    out = jax.block_until_ready(out)

    ref = jax.block_until_ready(
        sm_layer_reference(x, params, kernel_size=KERNEL_SIZE))

    assert out.shape == (B, C, H, W)
    np.testing.assert_allclose(np.asarray(out), np.asarray(ref),
                               rtol=1e-4, atol=1e-4)
    print("KERNEL_OK")
</pallas_src>

<mosaic_0001>
module attributes {stable_mosaic.version = 11 : i64} {
  func.func @_sm_layer_kernel(%arg0: i32, %arg1: memref<32x256xf32, #tpu.memory_space<vmem>>, %arg2: memref<2x256xf32, #tpu.memory_space<vmem>>, %arg3: memref<32x1xf32, #tpu.memory_space<vmem>>, %arg4: memref<32x16xf32, #tpu.memory_space<vmem>>, %arg5: memref<32x1xf32, #tpu.memory_space<vmem>>, %arg6: memref<16x32xf32, #tpu.memory_space<vmem>>, %arg7: memref<16x1xf32, #tpu.memory_space<vmem>>, %arg8: memref<32x1xf32, #tpu.memory_space<vmem>>, %arg9: memref<32x16xf32, #tpu.memory_space<vmem>>, %arg10: memref<32x1xf32, #tpu.memory_space<vmem>>, %arg11: memref<16x32xf32, #tpu.memory_space<vmem>>, %arg12: memref<16x1xf32, #tpu.memory_space<vmem>>, %arg13: memref<32x16xf32, #tpu.memory_space<vmem>>, %arg14: memref<32x16xf32, #tpu.memory_space<vmem>>, %arg15: memref<32x9xf32, #tpu.memory_space<vmem>>, %arg16: memref<32x1xf32, #tpu.memory_space<vmem>>, %arg17: memref<32x256xf32, #tpu.memory_space<vmem>>) attributes {dimension_semantics = [#tpu.dimension_semantics<parallel>], iteration_bounds = array<i64: 2>, scalar_prefetch = 0 : i64, scratch_operands = 0 : i64, tpu.core_type = #tpu.core_type<tc>, window_params = [{transform_indices = @transform_0, window_bounds = array<i64: 32, 256>}, {pipeline_mode = #tpu.pipeline_mode<synchronous>, transform_indices = @transform_1, window_bounds = array<i64: 2, 256>}, {pipeline_mode = #tpu.pipeline_mode<synchronous>, transform_indices = @transform_2, window_bounds = array<i64: 32, 1>}, {pipeline_mode = #tpu.pipeline_mode<synchronous>, transform_indices = @transform_3, window_bounds = array<i64: 32, 16>}, {pipeline_mode = #tpu.pipeline_mode<synchronous>, transform_indices = @transform_4, window_bounds = array<i64: 32, 1>}, {pipeline_mode = #tpu.pipeline_mode<synchronous>, transform_indices = @transform_5, window_bounds = array<i64: 16, 32>}, {pipeline_mode = #tpu.pipeline_mode<synchronous>, transform_indices = @transform_6, window_bounds = array<i64: 16, 1>}, {pipeline_mode = #tpu.pipeline_mode<synchronous>, transform_indices = @transform_7, window_bounds = array<i64: 32, 1>}, {pipeline_mode = #tpu.pipeline_mode<synchronous>, transform_indices = @transform_8, window_bounds = array<i64: 32, 16>}, {pipeline_mode = #tpu.pipeline_mode<synchronous>, transform_indices = @transform_9, window_bounds = array<i64: 32, 1>}, {pipeline_mode = #tpu.pipeline_mode<synchronous>, transform_indices = @transform_10, window_bounds = array<i64: 16, 32>}, {pipeline_mode = #tpu.pipeline_mode<synchronous>, transform_indices = @transform_11, window_bounds = array<i64: 16, 1>}, {pipeline_mode = #tpu.pipeline_mode<synchronous>, transform_indices = @transform_12, window_bounds = array<i64: 32, 16>}, {pipeline_mode = #tpu.pipeline_mode<synchronous>, transform_indices = @transform_13, window_bounds = array<i64: 32, 16>}, {pipeline_mode = #tpu.pipeline_mode<synchronous>, transform_indices = @transform_14, window_bounds = array<i64: 32, 9>}, {pipeline_mode = #tpu.pipeline_mode<synchronous>, transform_indices = @transform_15, window_bounds = array<i64: 32, 1>}, {transform_indices = @transform_16, window_bounds = array<i64: 32, 256>}]} {
    %c0 = arith.constant 0 : index
    %c0_0 = arith.constant 0 : index
    %0 = vector.load %arg2[%c0, %c0_0] : memref<2x256xf32, #tpu.memory_space<vmem>>, vector<1x256xf32>
    %c1 = arith.constant 1 : index
    %c0_1 = arith.constant 0 : index
    %1 = vector.load %arg2[%c1, %c0_1] : memref<2x256xf32, #tpu.memory_space<vmem>>, vector<1x256xf32>
    %c0_2 = arith.constant 0 : index
    %c0_3 = arith.constant 0 : index
    %2 = vector.load %arg3[%c0_2, %c0_3] : memref<32x1xf32, #tpu.memory_space<vmem>>, vector<32x1xf32>
    %c0_4 = arith.constant 0 : index
    %c0_5 = arith.constant 0 : index
    %3 = vector.load %arg8[%c0_4, %c0_5] : memref<32x1xf32, #tpu.memory_space<vmem>>, vector<32x1xf32>
    %c0_6 = arith.constant 0 : index
    %c0_7 = arith.constant 0 : index
    %4 = vector.load %arg4[%c0_6, %c0_7] : memref<32x16xf32, #tpu.memory_space<vmem>>, vector<32x16xf32>
    %c0_8 = arith.constant 0 : index
    %c0_9 = arith.constant 0 : index
    %5 = vector.load %arg5[%c0_8, %c0_9] : memref<32x1xf32, #tpu.memory_space<vmem>>, vector<32x1xf32>
    %c0_10 = arith.constant 0 : index
    %c0_11 = arith.constant 0 : index
    %6 = vector.load %arg6[%c0_10, %c0_11] : memref<16x32xf32, #tpu.memory_space<vmem>>, vector<16x32xf32>
    %c0_12 = arith.constant 0 : index
    %c0_13 = arith.constant 0 : index
    %7 = vector.load %arg7[%c0_12, %c0_13] : memref<16x1xf32, #tpu.memory_space<vmem>>, vector<16x1xf32>
    %c0_14 = arith.constant 0 : index
    %c0_15 = arith.constant 0 : index
    %8 = vector.load %arg9[%c0_14, %c0_15] : memref<32x16xf32, #tpu.memory_space<vmem>>, vector<32x16xf32>
    %c0_16 = arith.constant 0 : index
    %c0_17 = arith.constant 0 : index
    %9 = vector.load %arg10[%c0_16, %c0_17] : memref<32x1xf32, #tpu.memory_space<vmem>>, vector<32x1xf32>
    %c0_18 = arith.constant 0 : index
    %c0_19 = arith.constant 0 : index
    %10 = vector.load %arg11[%c0_18, %c0_19] : memref<16x32xf32, #tpu.memory_space<vmem>>, vector<16x32xf32>
    %c0_20 = arith.constant 0 : index
    %c0_21 = arith.constant 0 : index
    %11 = vector.load %arg12[%c0_20, %c0_21] : memref<16x1xf32, #tpu.memory_space<vmem>>, vector<16x1xf32>
    %c0_22 = arith.constant 0 : index
    %c0_23 = arith.constant 0 : index
    %12 = vector.load %arg13[%c0_22, %c0_23] : memref<32x16xf32, #tpu.memory_space<vmem>>, vector<32x16xf32>
    %c0_24 = arith.constant 0 : index
    %c0_25 = arith.constant 0 : index
    %13 = vector.load %arg14[%c0_24, %c0_25] : memref<32x16xf32, #tpu.memory_space<vmem>>, vector<32x16xf32>
    %c0_26 = arith.constant 0 : index
    %c0_27 = arith.constant 0 : index
    %14 = vector.load %arg15[%c0_26, %c0_27] : memref<32x9xf32, #tpu.memory_space<vmem>>, vector<32x9xf32>
    %c0_28 = arith.constant 0 : index
    %c0_29 = arith.constant 0 : index
    %15 = vector.load %arg16[%c0_28, %c0_29] : memref<32x1xf32, #tpu.memory_space<vmem>>, vector<32x1xf32>
    %c0_30 = arith.constant 0 : index
    %c0_31 = arith.constant 0 : index
    %16 = vector.load %arg1[%c0_30, %c0_31] : memref<32x256xf32, #tpu.memory_space<vmem>>, vector<32x256xf32>
    %cst = arith.constant dense<0.000000e+00> : vector<256xf32>
    %17 = vector.multi_reduction <add>, %16, %cst [0] : vector<32x256xf32> to vector<256xf32>
    %18 = vector.shape_cast %17 : vector<256xf32> to vector<1x256xf32>
    %cst_32 = arith.constant 3.200000e+01 : f32
    %19 = vector.broadcast %cst_32 : f32 to vector<1x256xf32>
    %20 = arith.divf %18, %19 : vector<1x256xf32>
    %21 = arith.mulf %16, %16 : vector<32x256xf32>
    %cst_33 = arith.constant dense<0.000000e+00> : vector<256xf32>
    %22 = vector.multi_reduction <add>, %21, %cst_33 [0] : vector<32x256xf32> to vector<256xf32>
    %23 = vector.shape_cast %22 : vector<256xf32> to vector<1x256xf32>
    %cst_34 = arith.constant 3.200000e+01 : f32
    %24 = vector.broadcast %cst_34 : f32 to vector<1x256xf32>
    %25 = arith.divf %23, %24 : vector<1x256xf32>
    %26 = arith.mulf %20, %20 : vector<1x256xf32>
    %27 = arith.subf %25, %26 : vector<1x256xf32>
    %28 = vector.broadcast %20 : vector<1x256xf32> to vector<32x256xf32>
    %29 = arith.subf %16, %28 : vector<32x256xf32>
    %cst_35 = arith.constant 9.99999974E-6 : f32
    %30 = vector.broadcast %cst_35 : f32 to vector<1x256xf32>
    %31 = arith.addf %27, %30 : vector<1x256xf32>
    %32 = math.rsqrt %31 : vector<1x256xf32>
    %33 = vector.broadcast %32 : vector<1x256xf32> to vector<32x256xf32>
    %34 = arith.mulf %29, %33 : vector<32x256xf32>
    %35 = vector.broadcast %2 : vector<32x1xf32> to vector<32x256xf32>
    %36 = arith.mulf %34, %35 : vector<32x256xf32>
    %37 = vector.extract_strided_slice %36 {offsets = [0, 0], sizes = [16, 256], strides = [1, 1]} : vector<32x256xf32> to vector<16x256xf32>
    %38 = vector.extract_strided_slice %36 {offsets = [16, 0], sizes = [16, 256], strides = [1, 1]} : vector<32x256xf32> to vector<16x256xf32>
    %cst_36 = arith.constant dense<0.000000e+00> : vector<32x256xf32>
    %39 = tpu.matmul %4, %37, %cst_36 {dimension_numbers = #tpu.dot_dimension_numbers<[1], [0], [0], [1], [0, 0, 1, 1], [], []>, precision = #tpu.contract_precision<fp32>} : vector<32x16xf32>, vector<16x256xf32>, vector<32x256xf32> -> vector<32x256xf32>
    %40 = vector.broadcast %5 : vector<32x1xf32> to vector<32x256xf32>
    %41 = arith.addf %39, %40 : vector<32x256xf32>
    %42 = arith.negf %41 : vector<32x256xf32>
    %43 = math.exp %42 : vector<32x256xf32>
    %cst_37 = arith.constant 1.000000e+00 : f32
    %44 = vector.broadcast %cst_37 : f32 to vector<32x256xf32>
    %45 = arith.addf %44, %43 : vector<32x256xf32>
    %46 = arith.divf %44, %45 : vector<32x256xf32>
    %47 = arith.mulf %41, %46 : vector<32x256xf32>
    %cst_38 = arith.constant dense<0.000000e+00> : vector<16x256xf32>
    %48 = tpu.matmul %6, %47, %cst_38 {dimension_numbers = #tpu.dot_dimension_numbers<[1], [0], [0], [1], [0, 0, 1, 1], [], []>, precision = #tpu.contract_precision<fp32>} : vector<16x32xf32>, vector<32x256xf32>, vector<16x256xf32> -> vector<16x256xf32>
    %49 = vector.broadcast %7 : vector<16x1xf32> to vector<16x256xf32>
    %50 = arith.addf %48, %49 : vector<16x256xf32>
    %cst_39 = arith.constant dense<0.000000e+00> : vector<32x256xf32>
    %51 = tpu.matmul %12, %50, %cst_39 {dimension_numbers = #tpu.dot_dimension_numbers<[1], [0], [0], [1], [0, 0, 1, 1], [], []>, precision = #tpu.contract_precision<fp32>} : vector<32x16xf32>, vector<16x256xf32>, vector<32x256xf32> -> vector<32x256xf32>
    %cst_40 = arith.constant dense<0.000000e+00> : vector<32x256xf32>
    %52 = tpu.matmul %13, %38, %cst_40 {dimension_numbers = #tpu.dot_dimension_numbers<[1], [0], [0], [1], [0, 0, 1, 1], [], []>, precision = #tpu.contract_precision<fp32>} : vector<32x16xf32>, vector<16x256xf32>, vector<32x256xf32> -> vector<32x256xf32>
    %53 = arith.addf %51, %52 : vector<32x256xf32>
    %54 = arith.addf %53, %16 : vector<32x256xf32>
    %55 = vector.extract_strided_slice %14 {offsets = [0, 4], sizes = [32, 1], strides = [1, 1]} : vector<32x9xf32> to vector<32x1xf32>
    %56 = vector.broadcast %55 : vector<32x1xf32> to vector<32x256xf32>
    %57 = arith.mulf %54, %56 : vector<32x256xf32>
    %58 = vector.broadcast %15 : vector<32x1xf32> to vector<32x256xf32>
    %59 = arith.addf %57, %58 : vector<32x256xf32>
    %c17_i32 = arith.constant 17 : i32
    %60 = tpu.dynamic_rotate %54 by %c17_i32 dim 1 : vector<32x256xf32>, i32 -> vector<32x256xf32>
    %cst_41 = arith.constant 1.000000e+00 : f32
    %61 = vector.broadcast %cst_41 : f32 to vector<1x256xf32>
    %62 = arith.cmpf oge, %0, %61 : vector<1x256xf32>
    %cst_42 = arith.constant 1.000000e+00 : f32
    %63 = vector.broadcast %cst_42 : f32 to vector<1x256xf32>
    %64 = arith.cmpf oge, %1, %63 : vector<1x256xf32>
    %65 = arith.andi %62, %64 : vector<1x256xi1>
    %cst_43 = arith.constant 0.000000e+00 : f32
    %66 = vector.shape_cast %65 : vector<1x256xi1> to vector<1x256xi1>
    %67 = vector.broadcast %66 : vector<1x256xi1> to vector<32x256xi1>
    %68 = vector.broadcast %cst_43 : f32 to vector<32x256xf32>
    %69 = arith.select %67, %60, %68 : vector<32x256xi1>, vector<32x256xf32>
    %70 = vector.extract_strided_slice %14 {offsets = [0, 0], sizes = [32, 1], strides = [1, 1]} : vector<32x9xf32> to vector<32x1xf32>
    %71 = vector.broadcast %70 : vector<32x1xf32> to vector<32x256xf32>
    %72 = arith.mulf %69, %71 : vector<32x256xf32>
    %73 = arith.addf %59, %72 : vector<32x256xf32>
    %c16_i32 = arith.constant 16 : i32
    %74 = tpu.dynamic_rotate %54 by %c16_i32 dim 1 : vector<32x256xf32>, i32 -> vector<32x256xf32>
    %cst_44 = arith.constant 1.000000e+00 : f32
    %75 = vector.broadcast %cst_44 : f32 to vector<1x256xf32>
    %76 = arith.cmpf oge, %0, %75 : vector<1x256xf32>
    %cst_45 = arith.constant 0.000000e+00 : f32
    %77 = vector.shape_cast %76 : vector<1x256xi1> to vector<1x256xi1>
    %78 = vector.broadcast %77 : vector<1x256xi1> to vector<32x256xi1>
    %79 = vector.broadcast %cst_45 : f32 to vector<32x256xf32>
    %80 = arith.select %78, %74, %79 : vector<32x256xi1>, vector<32x256xf32>
    %81 = vector.extract_strided_slice %14 {offsets = [0, 1], sizes = [32, 1], strides = [1, 1]} : vector<32x9xf32> to vector<32x1xf32>
    %82 = vector.broadcast %81 : vector<32x1xf32> to vector<32x256xf32>
    %83 = arith.mulf %80, %82 : vector<32x256xf32>
    %84 = arith.addf %73, %83 : vector<32x256xf32>
    %c15_i32 = arith.constant 15 : i32
    %85 = tpu.dynamic_rotate %54 by %c15_i32 dim 1 : vector<32x256xf32>, i32 -> vector<32x256xf32>
    %cst_46 = arith.constant 1.000000e+00 : f32
    %86 = vector.broadcast %cst_46 : f32 to vector<1x256xf32>
    %87 = arith.cmpf oge, %0, %86 : vector<1x256xf32>
    %cst_47 = arith.constant 1.500000e+01 : f32
    %88 = vector.broadcast %cst_47 : f32 to vector<1x256xf32>
    %89 = arith.cmpf olt, %1, %88 : vector<1x256xf32>
    %90 = arith.andi %87, %89 : vector<1x256xi1>
    %cst_48 = arith.constant 0.000000e+00 : f32
    %91 = vector.shape_cast %90 : vector<1x256xi1> to vector<1x256xi1>
    %92 = vector.broadcast %91 : vector<1x256xi1> to vector<32x256xi1>
    %93 = vector.broadcast %cst_48 : f32 to vector<32x256xf32>
    %94 = arith.select %92, %85, %93 : vector<32x256xi1>, vector<32x256xf32>
    %95 = vector.extract_strided_slice %14 {offsets = [0, 2], sizes = [32, 1], strides = [1, 1]} : vector<32x9xf32> to vector<32x1xf32>
    %96 = vector.broadcast %95 : vector<32x1xf32> to vector<32x256xf32>
    %97 = arith.mulf %94, %96 : vector<32x256xf32>
    %98 = arith.addf %84, %97 : vector<32x256xf32>
    %c1_i32 = arith.constant 1 : i32
    %99 = tpu.dynamic_rotate %54 by %c1_i32 dim 1 : vector<32x256xf32>, i32 -> vector<32x256xf32>
    %cst_49 = arith.constant 1.000000e+00 : f32
    %100 = vector.broadcast %cst_49 : f32 to vector<1x256xf32>
    %101 = arith.cmpf oge, %1, %100 : vector<1x256xf32>
    %cst_50 = arith.constant 0.000000e+00 : f32
    %102 = vector.shape_cast %101 : vector<1x256xi1> to vector<1x256xi1>
    %103 = vector.broadcast %102 : vector<1x256xi1> to vector<32x256xi1>
    %104 = vector.broadcast %cst_50 : f32 to vector<32x256xf32>
    %105 = arith.select %103, %99, %104 : vector<32x256xi1>, vector<32x256xf32>
    %106 = vector.extract_strided_slice %14 {offsets = [0, 3], sizes = [32, 1], strides = [1, 1]} : vector<32x9xf32> to vector<32x1xf32>
    %107 = vector.broadcast %106 : vector<32x1xf32> to vector<32x256xf32>
    %108 = arith.mulf %105, %107 : vector<32x256xf32>
    %109 = arith.addf %98, %108 : vector<32x256xf32>
    %c255_i32 = arith.constant 255 : i32
    %110 = tpu.dynamic_rotate %54 by %c255_i32 dim 1 : vector<32x256xf32>, i32 -> vector<32x256xf32>
    %cst_51 = arith.constant 1.500000e+01 : f32
    %111 = vector.broadcast %cst_51 : f32 to vector<1x256xf32>
    %112 = arith.cmpf olt, %1, %111 : vector<1x256xf32>
    %cst_52 = arith.constant 0.000000e+00 : f32
    %113 = vector.shape_cast %112 : vector<1x256xi1> to vector<1x256xi1>
    %114 = vector.broadcast %113 : vector<1x256xi1> to vector<32x256xi1>
    %115 = vector.broadcast %cst_52 : f32 to vector<32x256xf32>
    %116 = arith.select %114, %110, %115 : vector<32x256xi1>, vector<32x256xf32>
    %117 = vector.extract_strided_slice %14 {offsets = [0, 5], sizes = [32, 1], strides = [1, 1]} : vector<32x9xf32> to vector<32x1xf32>
    %118 = vector.broadcast %117 : vector<32x1xf32> to vector<32x256xf32>
    %119 = arith.mulf %116, %118 : vector<32x256xf32>
    %120 = arith.addf %109, %119 : vector<32x256xf32>
    %c241_i32 = arith.constant 241 : i32
    %121 = tpu.dynamic_rotate %54 by %c241_i32 dim 1 : vector<32x256xf32>, i32 -> vector<32x256xf32>
    %cst_53 = arith.constant 1.500000e+01 : f32
    %122 = vector.broadcast %cst_53 : f32 to vector<1x256xf32>
    %123 = arith.cmpf olt, %0, %122 : vector<1x256xf32>
    %cst_54 = arith.constant 1.000000e+00 : f32
    %124 = vector.broadcast %cst_54 : f32 to vector<1x256xf32>
    %125 = arith.cmpf oge, %1, %124 : vector<1x256xf32>
    %126 = arith.andi %123, %125 : vector<1x256xi1>
    %cst_55 = arith.constant 0.000000e+00 : f32
    %127 = vector.shape_cast %126 : vector<1x256xi1> to vector<1x256xi1>
    %128 = vector.broadcast %127 : vector<1x256xi1> to vector<32x256xi1>
    %129 = vector.broadcast %cst_55 : f32 to vector<32x256xf32>
    %130 = arith.select %128, %121, %129 : vector<32x256xi1>, vector<32x256xf32>
    %131 = vector.extract_strided_slice %14 {offsets = [0, 6], sizes = [32, 1], strides = [1, 1]} : vector<32x9xf32> to vector<32x1xf32>
    %132 = vector.broadcast %131 : vector<32x1xf32> to vector<32x256xf32>
    %133 = arith.mulf %130, %132 : vector<32x256xf32>
    %134 = arith.addf %120, %133 : vector<32x256xf32>
    %c240_i32 = arith.constant 240 : i32
    %135 = tpu.dynamic_rotate %54 by %c240_i32 dim 1 : vector<32x256xf32>, i32 -> vector<32x256xf32>
    %cst_56 = arith.constant 1.500000e+01 : f32
    %136 = vector.broadcast %cst_56 : f32 to vector<1x256xf32>
    %137 = arith.cmpf olt, %0, %136 : vector<1x256xf32>
    %cst_57 = arith.constant 0.000000e+00 : f32
    %138 = vector.shape_cast %137 : vector<1x256xi1> to vector<1x256xi1>
    %139 = vector.broadcast %138 : vector<1x256xi1> to vector<32x256xi1>
    %140 = vector.broadcast %cst_57 : f32 to vector<32x256xf32>
    %141 = arith.select %139, %135, %140 : vector<32x256xi1>, vector<32x256xf32>
    %142 = vector.extract_strided_slice %14 {offsets = [0, 7], sizes = [32, 1], strides = [1, 1]} : vector<32x9xf32> to vector<32x1xf32>
    %143 = vector.broadcast %142 : vector<32x1xf32> to vector<32x256xf32>
    %144 = arith.mulf %141, %143 : vector<32x256xf32>
    %145 = arith.addf %134, %144 : vector<32x256xf32>
    %c239_i32 = arith.constant 239 : i32
    %146 = tpu.dynamic_rotate %54 by %c239_i32 dim 1 : vector<32x256xf32>, i32 -> vector<32x256xf32>
    %cst_58 = arith.constant 1.500000e+01 : f32
    %147 = vector.broadcast %cst_58 : f32 to vector<1x256xf32>
    %148 = arith.cmpf olt, %0, %147 : vector<1x256xf32>
    %cst_59 = arith.constant 1.500000e+01 : f32
    %149 = vector.broadcast %cst_59 : f32 to vector<1x256xf32>
    %150 = arith.cmpf olt, %1, %149 : vector<1x256xf32>
    %151 = arith.andi %148, %150 : vector<1x256xi1>
    %cst_60 = arith.constant 0.000000e+00 : f32
    %152 = vector.shape_cast %151 : vector<1x256xi1> to vector<1x256xi1>
    %153 = vector.broadcast %152 : vector<1x256xi1> to vector<32x256xi1>
    %154 = vector.broadcast %cst_60 : f32 to vector<32x256xf32>
    %155 = arith.select %153, %146, %154 : vector<32x256xi1>, vector<32x256xf32>
    %156 = vector.extract_strided_slice %14 {offsets = [0, 8], sizes = [32, 1], strides = [1, 1]} : vector<32x9xf32> to vector<32x1xf32>
    %157 = vector.broadcast %156 : vector<32x1xf32> to vector<32x256xf32>
    %158 = arith.mulf %155, %157 : vector<32x256xf32>
    %159 = arith.addf %145, %158 : vector<32x256xf32>
    %cst_61 = arith.constant dense<0.000000e+00> : vector<256xf32>
    %160 = vector.multi_reduction <add>, %159, %cst_61 [0] : vector<32x256xf32> to vector<256xf32>
    %161 = vector.shape_cast %160 : vector<256xf32> to vector<1x256xf32>
    %cst_62 = arith.constant 3.200000e+01 : f32
    %162 = vector.broadcast %cst_62 : f32 to vector<1x256xf32>
    %163 = arith.divf %161, %162 : vector<1x256xf32>
    %164 = arith.mulf %159, %159 : vector<32x256xf32>
    %cst_63 = arith.constant dense<0.000000e+00> : vector<256xf32>
    %165 = vector.multi_reduction <add>, %164, %cst_63 [0] : vector<32x256xf32> to vector<256xf32>
    %166 = vector.shape_cast %165 : vector<256xf32> to vector<1x256xf32>
    %cst_64 = arith.constant 3.200000e+01 : f32
    %167 = vector.broadcast %cst_64 : f32 to vector<1x256xf32>
    %168 = arith.divf %166, %167 : vector<1x256xf32>
    %169 = arith.mulf %163, %163 : vector<1x256xf32>
    %170 = arith.subf %168, %169 : vector<1x256xf32>
    %171 = vector.broadcast %163 : vector<1x256xf32> to vector<32x256xf32>
    %172 = arith.subf %159, %171 : vector<32x256xf32>
    %cst_65 = arith.constant 9.99999974E-6 : f32
    %173 = vector.broadcast %cst_65 : f32 to vector<1x256xf32>
    %174 = arith.addf %170, %173 : vector<1x256xf32>
    %175 = math.rsqrt %174 : vector<1x256xf32>
    %176 = vector.broadcast %175 : vector<1x256xf32> to vector<32x256xf32>
    %177 = arith.mulf %172, %176 : vector<32x256xf32>
    %178 = vector.broadcast %3 : vector<32x1xf32> to vector<32x256xf32>
    %179 = arith.mulf %177, %178 : vector<32x256xf32>
    %180 = vector.extract_strided_slice %179 {offsets = [0, 0], sizes = [16, 256], strides = [1, 1]} : vector<32x256xf32> to vector<16x256xf32>
    %181 = vector.extract_strided_slice %179 {offsets = [16, 0], sizes = [16, 256], strides = [1, 1]} : vector<32x256xf32> to vector<16x256xf32>
    %cst_66 = arith.constant dense<0.000000e+00> : vector<32x256xf32>
    %182 = tpu.matmul %8, %180, %cst_66 {dimension_numbers = #tpu.dot_dimension_numbers<[1], [0], [0], [1], [0, 0, 1, 1], [], []>, precision = #tpu.contract_precision<fp32>} : vector<32x16xf32>, vector<16x256xf32>, vector<32x256xf32> -> vector<32x256xf32>
    %183 = vector.broadcast %9 : vector<32x1xf32> to vector<32x256xf32>
    %184 = arith.addf %182, %183 : vector<32x256xf32>
    %185 = arith.negf %184 : vector<32x256xf32>
    %186 = math.exp %185 : vector<32x256xf32>
    %cst_67 = arith.constant 1.000000e+00 : f32
    %187 = vector.broadcast %cst_67 : f32 to vector<32x256xf32>
    %188 = arith.addf %187, %186 : vector<32x256xf32>
    %189 = arith.divf %187, %188 : vector<32x256xf32>
    %190 = arith.mulf %184, %189 : vector<32x256xf32>
    %cst_68 = arith.constant dense<0.000000e+00> : vector<16x256xf32>
    %191 = tpu.matmul %10, %190, %cst_68 {dimension_numbers = #tpu.dot_dimension_numbers<[1], [0], [0], [1], [0, 0, 1, 1], [], []>, precision = #tpu.contract_precision<fp32>} : vector<16x32xf32>, vector<32x256xf32>, vector<16x256xf32> -> vector<16x256xf32>
    %192 = vector.broadcast %11 : vector<16x1xf32> to vector<16x256xf32>
    %193 = arith.addf %191, %192 : vector<16x256xf32>
    %cst_69 = arith.constant dense<0.000000e+00> : vector<32x256xf32>
    %194 = tpu.matmul %12, %193, %cst_69 {dimension_numbers = #tpu.dot_dimension_numbers<[1], [0], [0], [1], [0, 0, 1, 1], [], []>, precision = #tpu.contract_precision<fp32>} : vector<32x16xf32>, vector<16x256xf32>, vector<32x256xf32> -> vector<32x256xf32>
    %cst_70 = arith.constant dense<0.000000e+00> : vector<32x256xf32>
    %195 = tpu.matmul %13, %181, %cst_70 {dimension_numbers = #tpu.dot_dimension_numbers<[1], [0], [0], [1], [0, 0, 1, 1], [], []>, precision = #tpu.contract_precision<fp32>} : vector<32x16xf32>, vector<16x256xf32>, vector<32x256xf32> -> vector<32x256xf32>
    %196 = arith.addf %194, %195 : vector<32x256xf32>
    %197 = arith.addf %196, %159 : vector<32x256xf32>
    %c0_71 = arith.constant 0 : index
    %c0_72 = arith.constant 0 : index
    %198 = vector.load %arg17[%c0_71, %c0_72] : memref<32x256xf32, #tpu.memory_space<vmem>>, vector<32x256xf32>
    tpu.vector_store %arg17[%c0_71, %c0_72], %197 {strides = array<i32>} : memref<32x256xf32, #tpu.memory_space<vmem>>, vector<32x256xf32>,
    return
  }
  func.func @transform_0(%arg0: i32) -> (i32, i32) {
    %c0_i32 = arith.constant 0 : i32
    %c0_i32_0 = arith.constant 0 : i32
    return %arg0, %c0_i32 : i32, i32
  }
  func.func @transform_1(%arg0: i32) -> (i32, i32) {
    %c0_i32 = arith.constant 0 : i32
    %c0_i32_0 = arith.constant 0 : i32
    %c0_i32_1 = arith.constant 0 : i32
    return %c0_i32, %c0_i32_0 : i32, i32
  }
  func.func @transform_2(%arg0: i32) -> (i32, i32) {
    %c0_i32 = arith.constant 0 : i32
    %c0_i32_0 = arith.constant 0 : i32
    %c0_i32_1 = arith.constant 0 : i32
    return %c0_i32, %c0_i32_0 : i32, i32
  }
  func.func @transform_3(%arg0: i32) -> (i32, i32) {
    %c0_i32 = arith.constant 0 : i32
    %c0_i32_0 = arith.constant 0 : i32
    %c0_i32_1 = arith.constant 0 : i32
    return %c0_i32, %c0_i32_0 : i32, i32
  }
  func.func @transform_4(%arg0: i32) -> (i32, i32) {
    %c0_i32 = arith.constant 0 : i32
    %c0_i32_0 = arith.constant 0 : i32
    %c0_i32_1 = arith.constant 0 : i32
    return %c0_i32, %c0_i32_0 : i32, i32
  }
  func.func @transform_5(%arg0: i32) -> (i32, i32) {
    %c0_i32 = arith.constant 0 : i32
    %c0_i32_0 = arith.constant 0 : i32
    %c0_i32_1 = arith.constant 0 : i32
    return %c0_i32, %c0_i32_0 : i32, i32
  }
  func.func @transform_6(%arg0: i32) -> (i32, i32) {
    %c0_i32 = arith.constant 0 : i32
    %c0_i32_0 = arith.constant 0 : i32
    %c0_i32_1 = arith.constant 0 : i32
    return %c0_i32, %c0_i32_0 : i32, i32
  }
  func.func @transform_7(%arg0: i32) -> (i32, i32) {
    %c0_i32 = arith.constant 0 : i32
    %c0_i32_0 = arith.constant 0 : i32
    %c0_i32_1 = arith.constant 0 : i32
    return %c0_i32, %c0_i32_0 : i32, i32
  }
  func.func @transform_8(%arg0: i32) -> (i32, i32) {
    %c0_i32 = arith.constant 0 : i32
    %c0_i32_0 = arith.constant 0 : i32
    %c0_i32_1 = arith.constant 0 : i32
    return %c0_i32, %c0_i32_0 : i32, i32
  }
  func.func @transform_9(%arg0: i32) -> (i32, i32) {
    %c0_i32 = arith.constant 0 : i32
    %c0_i32_0 = arith.constant 0 : i32
    %c0_i32_1 = arith.constant 0 : i32
    return %c0_i32, %c0_i32_0 : i32, i32
  }
  func.func @transform_10(%arg0: i32) -> (i32, i32) {
    %c0_i32 = arith.constant 0 : i32
    %c0_i32_0 = arith.constant 0 : i32
    %c0_i32_1 = arith.constant 0 : i32
    return %c0_i32, %c0_i32_0 : i32, i32
  }
  func.func @transform_11(%arg0: i32) -> (i32, i32) {
    %c0_i32 = arith.constant 0 : i32
    %c0_i32_0 = arith.constant 0 : i32
    %c0_i32_1 = arith.constant 0 : i32
    return %c0_i32, %c0_i32_0 : i32, i32
  }
  func.func @transform_12(%arg0: i32) -> (i32, i32) {
    %c0_i32 = arith.constant 0 : i32
    %c0_i32_0 = arith.constant 0 : i32
    %c0_i32_1 = arith.constant 0 : i32
    return %c0_i32, %c0_i32_0 : i32, i32
  }
  func.func @transform_13(%arg0: i32) -> (i32, i32) {
    %c0_i32 = arith.constant 0 : i32
    %c0_i32_0 = arith.constant 0 : i32
    %c0_i32_1 = arith.constant 0 : i32
    return %c0_i32, %c0_i32_0 : i32, i32
  }
  func.func @transform_14(%arg0: i32) -> (i32, i32) {
    %c0_i32 = arith.constant 0 : i32
    %c0_i32_0 = arith.constant 0 : i32
    %c0_i32_1 = arith.constant 0 : i32
    return %c0_i32, %c0_i32_0 : i32, i32
  }
  func.func @transform_15(%arg0: i32) -> (i32, i32) {
    %c0_i32 = arith.constant 0 : i32
    %c0_i32_0 = arith.constant 0 : i32
    %c0_i32_1 = arith.constant 0 : i32
    return %c0_i32, %c0_i32_0 : i32, i32
  }
  func.func @transform_16(%arg0: i32) -> (i32, i32) {
    %c0_i32 = arith.constant 0 : i32
    %c0_i32_0 = arith.constant 0 : i32
    return %arg0, %c0_i32 : i32, i32
  }
}

</mosaic_0001>

<llo_original>
// kernel: tpu_custom_call.1
$region0: #{tpu_custom_call.1}
  #allocation0 [shape = 'u32[]', space=smem, size = 0x4, offset = 0x4, fixed_abs, tag = 'smem constant byte address 0x4 - core index']
  #allocation1 [shape = 'u32[72,128]{1,0:T(1,128)}', space=vmem, size = 0x9000, scoped, tag = 'internal scratch']
  %s0 = inlined_call_operand.hbm [shape: f32[64,256], index: 0, kind: input, shape index: {}]
  %s1 = inlined_call_operand.vmem [shape: f32[2,256], index: 1, kind: input, shape index: {}]
  %s2 = inlined_call_operand.vmem [shape: f32[32,1], index: 2, kind: input, shape index: {}]
  %s3 = inlined_call_operand.vmem [shape: f32[32,16], index: 3, kind: input, shape index: {}]
  %s4 = inlined_call_operand.vmem [shape: f32[32,1], index: 4, kind: input, shape index: {}]
  %s5 = inlined_call_operand.vmem [shape: f32[16,32], index: 5, kind: input, shape index: {}]
  %s6 = inlined_call_operand.vmem [shape: f32[16,1], index: 6, kind: input, shape index: {}]
  %s7 = inlined_call_operand.vmem [shape: f32[32,1], index: 7, kind: input, shape index: {}]
  %s8 = inlined_call_operand.vmem [shape: f32[32,16], index: 8, kind: input, shape index: {}]
  %s9 = inlined_call_operand.vmem [shape: f32[32,1], index: 9, kind: input, shape index: {}]
  %s10 = inlined_call_operand.vmem [shape: f32[16,32], index: 10, kind: input, shape index: {}]
  %s11 = inlined_call_operand.vmem [shape: f32[16,1], index: 11, kind: input, shape index: {}]
  %s12 = inlined_call_operand.vmem [shape: f32[32,16], index: 12, kind: input, shape index: {}]
  %s13 = inlined_call_operand.vmem [shape: f32[32,16], index: 13, kind: input, shape index: {}]
  %s14 = inlined_call_operand.vmem [shape: f32[32,9], index: 14, kind: input, shape index: {}]
  %s15 = inlined_call_operand.vmem [shape: f32[32,1], index: 15, kind: input, shape index: {}]
  %s16 = inlined_call_operand.hbm [shape: f32[64,256], index: 16, kind: output, shape index: {}]
  %s17 = sld [smem:[#allocation0]]
  $region101: #{tpu_custom_call.1} parent=0
    _
  %s19 = ssub.s32 1, %s17
  %s20 = scalar_select 0, %s19, %s17
  $region1: #{tpu_custom_call.1} parent=0
    #allocation2 [shape = 'u8[65536]{0}', space=vmem, size = 0x10000, scoped, tag = 'input window, operand 0']
    #allocation3 [shape = 's32[2]{0}', space=sflag, size = 0x8, scoped, tag = 'scoped memory for tpu_custom_call.1']
    #allocation4 [shape = 's32[2]{0}', space=sflag, size = 0x8, scoped, tag = 'scoped memory for tpu_custom_call.1']
    #allocation5 [shape = 'u8[65536]{0}', space=vmem, size = 0x10000, scoped, tag = 'output window, operand 0']
    %21 = vsyncpa [#allocation3], 0
    %s22 = scalar_lea.sflag [#allocation3], 1
    %23 = vsyncpa %s22, 0
    %24 = vsyncpa [#allocation4], 0
    %s25 = scalar_lea.sflag [#allocation4], 1
    %26 = vsyncpa %s25, 0
    loop: start=0, step=1, limit=4
    $region2: #{tpu_custom_call.1} parent=1 // loop_pre_header
      _
    $region3: #{tpu_custom_call.1} parent=1 // loop_header
      %s28 = sphi 0, %s32
      %p29 = scmp.ge.s32.totalorder %s28, 4
      %s38 = sphi 0, %s40
      %s41 = sphi 0, %s38
      %s42 = sphi 0, %s41
      %s58 = sphi 0, %s42
      %s62 = sphi 0, %s62
      %s64 = sphi 0, %s62
      %s65 = sphi 0, %s64
      %s79 = sphi 0, %s65
      %s83 = sphi 0, %s83
      %s85 = sphi 0, %s83
      %s86 = sphi 0, %s85
      %s100 = sphi 0, %s86
      %s104 = sphi 0, %s104
      %s106 = sphi 0, %s104
      %s107 = sphi 0, %s106
      %s121 = sphi 0, %s107
      %s125 = sphi 0, %s125
      %s127 = sphi 0, %s125
      %s128 = sphi 0, %s127
      %s142 = sphi 0, %s128
      %s146 = sphi 0, %s146
      %s148 = sphi 0, %s146
      %s149 = sphi 0, %s148
      %s163 = sphi 0, %s149
      %s167 = sphi 0, %s167
      %s169 = sphi 0, %s167
      %s170 = sphi 0, %s169
      %s184 = sphi 0, %s170
      %s188 = sphi 0, %s188
      %s190 = sphi 0, %s188
      %s191 = sphi 0, %s190
      %s205 = sphi 0, %s191
      %s209 = sphi 0, %s209
      %s211 = sphi 0, %s209
      %s212 = sphi 0, %s211
      %s226 = sphi 0, %s212
      %s230 = sphi 0, %s230
      %s232 = sphi 0, %s230
      %s233 = sphi 0, %s232
      %s247 = sphi 0, %s233
      %s251 = sphi 0, %s251
      %s253 = sphi 0, %s251
      %s254 = sphi 0, %s253
      %s268 = sphi 0, %s254
      %s272 = sphi 0, %s272
      %s274 = sphi 0, %s272
      %s275 = sphi 0, %s274
      %s289 = sphi 0, %s275
      %s293 = sphi 0, %s293
      %s295 = sphi 0, %s293
      %s296 = sphi 0, %s295
      %s310 = sphi 0, %s296
      %s314 = sphi 0, %s314
      %s316 = sphi 0, %s314
      %s317 = sphi 0, %s316
      %s331 = sphi 0, %s317
      %s335 = sphi 0, %s335
      %s337 = sphi 0, %s335
      %s338 = sphi 0, %s337
      %s352 = sphi 0, %s338
      %s356 = sphi 0, %s356
      %s358 = sphi 0, %s356
      %s359 = sphi 0, %s358
      %s373 = sphi 0, %s359
      %s379 = sphi 0, %s381
      %s382 = sphi 0, %s379
      %s383 = sphi 0, %s382
      %s399 = sphi 0, %s383
    $region4: #{tpu_custom_call.1} parent=1 // loop_header_branch
      %31 = sbr.rel (%p29) target = $region8
    $region5: #{tpu_custom_call.1} parent=1 // loop_body
      %s33 = ssub.s32 %s28, 1
      %s34 = ssub.s32 %s28, 2
      %s35 = sadd.s32 %s28, 1
      %s36 = ssub.s32 %s28, %s35
      %p37 = scmp.eq.s32.totalorder %s36, 0
      %s39 = sadd.s32 %s38, 1
      %s40 = scalar_select %p37, %s38, %s39
      %p43 = pneg %p37
      %p44 = scmp.eq.s32.totalorder %s28, 1
      %p45 = por %p43, %p44
      %p46 = scmp.ne.s32.totalorder %s38, %s41
      %p47 = scmp.eq.s32.totalorder %s28, 0
      %p48 = por %p46, %p47
      %p49 = scmp.ne.s32.totalorder %s38, %s41
      %p50 = scmp.eq.s32.totalorder %s33, 1
      %p51 = por %p49, %p50
      %p52 = scmp.ne.s32.totalorder %s41, %s42
      %p53 = scmp.eq.s32.totalorder %s33, 0
      %p54 = por %p52, %p53
      %p55 = scmp.ne.s32.totalorder %s41, %s42
      %p56 = scmp.eq.s32.totalorder %s34, 1
      %p57 = por %p55, %p56
      %p59 = scmp.ne.s32.totalorder %s42, %s58
      %p60 = scmp.eq.s32.totalorder %s34, 0
      %p61 = por %p59, %p60
      %s63 = sadd.s32 %s62, 1
      %p66 = scmp.eq.s32.totalorder %s28, 1
      %p67 = scmp.ne.s32.totalorder %s62, %s64
      %p68 = scmp.eq.s32.totalorder %s28, 0
      %p69 = por %p67, %p68
      %p70 = scmp.ne.s32.totalorder %s62, %s64
      %p71 = scmp.eq.s32.totalorder %s33, 1
      %p72 = por %p70, %p71
      %p73 = scmp.ne.s32.totalorder %s64, %s65
      %p74 = scmp.eq.s32.totalorder %s33, 0
      %p75 = por %p73, %p74
      %p76 = scmp.ne.s32.totalorder %s64, %s65
      %p77 = scmp.eq.s32.totalorder %s34, 1
      %p78 = por %p76, %p77
      %p80 = scmp.ne.s32.totalorder %s65, %s79
      %p81 = scmp.eq.s32.totalorder %s34, 0
      %p82 = por %p80, %p81
      %s84 = sadd.s32 %s83, 1
      %p87 = scmp.eq.s32.totalorder %s28, 1
      %p88 = scmp.ne.s32.totalorder %s83, %s85
      %p89 = scmp.eq.s32.totalorder %s28, 0
      %p90 = por %p88, %p89
      %p91 = scmp.ne.s32.totalorder %s83, %s85
      %p92 = scmp.eq.s32.totalorder %s33, 1
      %p93 = por %p91, %p92
      %p94 = scmp.ne.s32.totalorder %s85, %s86
      %p95 = scmp.eq.s32.totalorder %s33, 0
      %p96 = por %p94, %p95
      %p97 = scmp.ne.s32.totalorder %s85, %s86
      %p98 = scmp.eq.s32.totalorder %s34, 1
      %p99 = por %p97, %p98
      %p101 = scmp.ne.s32.totalorder %s86, %s100
      %p102 = scmp.eq.s32.totalorder %s34, 0
      %p103 = por %p101, %p102
      %s105 = sadd.s32 %s104, 1
      %p108 = scmp.eq.s32.totalorder %s28, 1
      %p109 = scmp.ne.s32.totalorder %s104, %s106
      %p110 = scmp.eq.s32.totalorder %s28, 0
      %p111 = por %p109, %p110
      %p112 = scmp.ne.s32.totalorder %s104, %s106
      %p113 = scmp.eq.s32.totalorder %s33, 1
      %p114 = por %p112, %p113
      %p115 = scmp.ne.s32.totalorder %s106, %s107
      %p116 = scmp.eq.s32.totalorder %s33, 0
      %p117 = por %p115, %p116
      %p118 = scmp.ne.s32.totalorder %s106, %s107
      %p119 = scmp.eq.s32.totalorder %s34, 1
      %p120 = por %p118, %p119
      %p122 = scmp.ne.s32.totalorder %s107, %s121
      %p123 = scmp.eq.s32.totalorder %s34, 0
      %p124 = por %p122, %p123
      %s126 = sadd.s32 %s125, 1
      %p129 = scmp.eq.s32.totalorder %s28, 1
      %p130 = scmp.ne.s32.totalorder %s125, %s127
      %p131 = scmp.eq.s32.totalorder %s28, 0
      %p132 = por %p130, %p131
      %p133 = scmp.ne.s32.totalorder %s125, %s127
      %p134 = scmp.eq.s32.totalorder %s33, 1
      %p135 = por %p133, %p134
      %p136 = scmp.ne.s32.totalorder %s127, %s128
      %p137 = scmp.eq.s32.totalorder %s33, 0
      %p138 = por %p136, %p137
      %p139 = scmp.ne.s32.totalorder %s127, %s128
      %p140 = scmp.eq.s32.totalorder %s34, 1
      %p141 = por %p139, %p140
      %p143 = scmp.ne.s32.totalorder %s128, %s142
      %p144 = scmp.eq.s32.totalorder %s34, 0
      %p145 = por %p143, %p144
      %s147 = sadd.s32 %s146, 1
      %p150 = scmp.eq.s32.totalorder %s28, 1
      %p151 = scmp.ne.s32.totalorder %s146, %s148
      %p152 = scmp.eq.s32.totalorder %s28, 0
      %p153 = por %p151, %p152
      %p154 = scmp.ne.s32.totalorder %s146, %s148
      %p155 = scmp.eq.s32.totalorder %s33, 1
      %p156 = por %p154, %p155
      %p157 = scmp.ne.s32.totalorder %s148, %s149
      %p158 = scmp.eq.s32.totalorder %s33, 0
      %p159 = por %p157, %p158
      %p160 = scmp.ne.s32.totalorder %s148, %s149
      %p161 = scmp.eq.s32.totalorder %s34, 1
      %p162 = por %p160, %p161
      %p164 = scmp.ne.s32.totalorder %s149, %s163
      %p165 = scmp.eq.s32.totalorder %s34, 0
      %p166 = por %p164, %p165
      %s168 = sadd.s32 %s167, 1
      %p171 = scmp.eq.s32.totalorder %s28, 1
      %p172 = scmp.ne.s32.totalorder %s167, %s169
      %p173 = scmp.eq.s32.totalorder %s28, 0
      %p174 = por %p172, %p173
      %p175 = scmp.ne.s32.totalorder %s167, %s169
      %p176 = scmp.eq.s32.totalorder %s33, 1
      %p177 = por %p175, %p176
      %p178 = scmp.ne.s32.totalorder %s169, %s170
      %p179 = scmp.eq.s32.totalorder %s33, 0
      %p180 = por %p178, %p179
      %p181 = scmp.ne.s32.totalorder %s169, %s170
      %p182 = scmp.eq.s32.totalorder %s34, 1
      %p183 = por %p181, %p182
      %p185 = scmp.ne.s32.totalorder %s170, %s184
      %p186 = scmp.eq.s32.totalorder %s34, 0
      %p187 = por %p185, %p186
      %s189 = sadd.s32 %s188, 1
      %p192 = scmp.eq.s32.totalorder %s28, 1
      %p193 = scmp.ne.s32.totalorder %s188, %s190
      %p194 = scmp.eq.s32.totalorder %s28, 0
      %p195 = por %p193, %p194
      %p196 = scmp.ne.s32.totalorder %s188, %s190
      %p197 = scmp.eq.s32.totalorder %s33, 1
      %p198 = por %p196, %p197
      %p199 = scmp.ne.s32.totalorder %s190, %s191
      %p200 = scmp.eq.s32.totalorder %s33, 0
      %p201 = por %p199, %p200
      %p202 = scmp.ne.s32.totalorder %s190, %s191
      %p203 = scmp.eq.s32.totalorder %s34, 1
      %p204 = por %p202, %p203
      %p206 = scmp.ne.s32.totalorder %s191, %s205
      %p207 = scmp.eq.s32.totalorder %s34, 0
      %p208 = por %p206, %p207
      %s210 = sadd.s32 %s209, 1
      %p213 = scmp.eq.s32.totalorder %s28, 1
      %p214 = scmp.ne.s32.totalorder %s209, %s211
      %p215 = scmp.eq.s32.totalorder %s28, 0
      %p216 = por %p214, %p215
      %p217 = scmp.ne.s32.totalorder %s209, %s211
      %p218 = scmp.eq.s32.totalorder %s33, 1
      %p219 = por %p217, %p218
      %p220 = scmp.ne.s32.totalorder %s211, %s212
      %p221 = scmp.eq.s32.totalorder %s33, 0
      %p222 = por %p220, %p221
      %p223 = scmp.ne.s32.totalorder %s211, %s212
      %p224 = scmp.eq.s32.totalorder %s34, 1
      %p225 = por %p223, %p224
      %p227 = scmp.ne.s32.totalorder %s212, %s226
      %p228 = scmp.eq.s32.totalorder %s34, 0
      %p229 = por %p227, %p228
      %s231 = sadd.s32 %s230, 1
      %p234 = scmp.eq.s32.totalorder %s28, 1
      %p235 = scmp.ne.s32.totalorder %s230, %s232
      %p236 = scmp.eq.s32.totalorder %s28, 0
      %p237 = por %p235, %p236
      %p238 = scmp.ne.s32.totalorder %s230, %s232
      %p239 = scmp.eq.s32.totalorder %s33, 1
      %p240 = por %p238, %p239
      %p241 = scmp.ne.s32.totalorder %s232, %s233
      %p242 = scmp.eq.s32.totalorder %s33, 0
      %p243 = por %p241, %p242
      %p244 = scmp.ne.s32.totalorder %s232, %s233
      %p245 = scmp.eq.s32.totalorder %s34, 1
      %p246 = por %p244, %p245
      %p248 = scmp.ne.s32.totalorder %s233, %s247
      %p249 = scmp.eq.s32.totalorder %s34, 0
      %p250 = por %p248, %p249
      %s252 = sadd.s32 %s251, 1
      %p255 = scmp.eq.s32.totalorder %s28, 1
      %p256 = scmp.ne.s32.totalorder %s251, %s253
      %p257 = scmp.eq.s32.totalorder %s28, 0
      %p258 = por %p256, %p257
      %p259 = scmp.ne.s32.totalorder %s251, %s253
      %p260 = scmp.eq.s32.totalorder %s33, 1
      %p261 = por %p259, %p260
      %p262 = scmp.ne.s32.totalorder %s253, %s254
      %p263 = scmp.eq.s32.totalorder %s33, 0
      %p264 = por %p262, %p263
      %p265 = scmp.ne.s32.totalorder %s253, %s254
      %p266 = scmp.eq.s32.totalorder %s34, 1
      %p267 = por %p265, %p266
      %p269 = scmp.ne.s32.totalorder %s254, %s268
      %p270 = scmp.eq.s32.totalorder %s34, 0
      %p271 = por %p269, %p270
      %s273 = sadd.s32 %s272, 1
      %p276 = scmp.eq.s32.totalorder %s28, 1
      %p277 = scmp.ne.s32.totalorder %s272, %s274
      %p278 = scmp.eq.s32.totalorder %s28, 0
      %p279 = por %p277, %p278
      %p280 = scmp.ne.s32.totalorder %s272, %s274
      %p281 = scmp.eq.s32.totalorder %s33, 1
      %p282 = por %p280, %p281
      %p283 = scmp.ne.s32.totalorder %s274, %s275
      %p284 = scmp.eq.s32.totalorder %s33, 0
      %p285 = por %p283, %p284
      %p286 = scmp.ne.s32.totalorder %s274, %s275
      %p287 = scmp.eq.s32.totalorder %s34, 1
      %p288 = por %p286, %p287
      %p290 = scmp.ne.s32.totalorder %s275, %s289
      %p291 = scmp.eq.s32.totalorder %s34, 0
      %p292 = por %p290, %p291
      %s294 = sadd.s32 %s293, 1
      %p297 = scmp.eq.s32.totalorder %s28, 1
      %p298 = scmp.ne.s32.totalorder %s293, %s295
      %p299 = scmp.eq.s32.totalorder %s28, 0
      %p300 = por %p298, %p299
      %p301 = scmp.ne.s32.totalorder %s293, %s295
      %p302 = scmp.eq.s32.totalorder %s33, 1
      %p303 = por %p301, %p302
      %p304 = scmp.ne.s32.totalorder %s295, %s296
      %p305 = scmp.eq.s32.totalorder %s33, 0
      %p306 = por %p304, %p305
      %p307 = scmp.ne.s32.totalorder %s295, %s296
      %p308 = scmp.eq.s32.totalorder %s34, 1
      %p309 = por %p307, %p308
      %p311 = scmp.ne.s32.totalorder %s296, %s310
      %p312 = scmp.eq.s32.totalorder %s34, 0
      %p313 = por %p311, %p312
      %s315 = sadd.s32 %s314, 1
      %p318 = scmp.eq.s32.totalorder %s28, 1
      %p319 = scmp.ne.s32.totalorder %s314, %s316
      %p320 = scmp.eq.s32.totalorder %s28, 0
      %p321 = por %p319, %p320
      %p322 = scmp.ne.s32.totalorder %s314, %s316
      %p323 = scmp.eq.s32.totalorder %s33, 1
      %p324 = por %p322, %p323
      %p325 = scmp.ne.s32.totalorder %s316, %s317
      %p326 = scmp.eq.s32.totalorder %s33, 0
      %p327 = por %p325, %p326
      %p328 = scmp.ne.s32.totalorder %s316, %s317
      %p329 = scmp.eq.s32.totalorder %s34, 1
      %p330 = por %p328, %p329
      %p332 = scmp.ne.s32.totalorder %s317, %s331
      %p333 = scmp.eq.s32.totalorder %s34, 0
      %p334 = por %p332, %p333
      %s336 = sadd.s32 %s335, 1
      %p339 = scmp.eq.s32.totalorder %s28, 1
      %p340 = scmp.ne.s32.totalorder %s335, %s337
      %p341 = scmp.eq.s32.totalorder %s28, 0
      %p342 = por %p340, %p341
      %p343 = scmp.ne.s32.totalorder %s335, %s337
      %p344 = scmp.eq.s32.totalorder %s33, 1
      %p345 = por %p343, %p344
      %p346 = scmp.ne.s32.totalorder %s337, %s338
      %p347 = scmp.eq.s32.totalorder %s33, 0
      %p348 = por %p346, %p347
      %p349 = scmp.ne.s32.totalorder %s337, %s338
      %p350 = scmp.eq.s32.totalorder %s34, 1
      %p351 = por %p349, %p350
      %p353 = scmp.ne.s32.totalorder %s338, %s352
      %p354 = scmp.eq.s32.totalorder %s34, 0
      %p355 = por %p353, %p354
      %s357 = sadd.s32 %s356, 1
      %p360 = scmp.eq.s32.totalorder %s28, 1
      %p361 = scmp.ne.s32.totalorder %s356, %s358
      %p362 = scmp.eq.s32.totalorder %s28, 0
      %p363 = por %p361, %p362
      %p364 = scmp.ne.s32.totalorder %s356, %s358
      %p365 = scmp.eq.s32.totalorder %s33, 1
      %p366 = por %p364, %p365
      %p367 = scmp.ne.s32.totalorder %s358, %s359
      %p368 = scmp.eq.s32.totalorder %s33, 0
      %p369 = por %p367, %p368
      %p370 = scmp.ne.s32.totalorder %s358, %s359
      %p371 = scmp.eq.s32.totalorder %s34, 1
      %p372 = por %p370, %p371
      %p374 = scmp.ne.s32.totalorder %s359, %s373
      %p375 = scmp.eq.s32.totalorder %s34, 0
      %p376 = por %p374, %p375
      %s377 = ssub.s32 %s28, %s35
      %p378 = scmp.eq.s32.totalorder %s377, 0
      %s380 = sadd.s32 %s379, 1
      %s381 = scalar_select %p378, %s379, %s380
      %p384 = pneg %p378
      %p385 = scmp.eq.s32.totalorder %s28, 1
      %p386 = por %p384, %p385
      %p387 = scmp.ne.s32.totalorder %s379, %s382
      %p388 = scmp.eq.s32.totalorder %s28, 0
      %p389 = por %p387, %p388
      %p390 = scmp.ne.s32.totalorder %s379, %s382
      %p391 = scmp.eq.s32.totalorder %s33, 1
      %p392 = por %p390, %p391
      %p393 = scmp.ne.s32.totalorder %s382, %s383
      %p394 = scmp.eq.s32.totalorder %s33, 0
      %p395 = por %p393, %p394
      %p396 = scmp.ne.s32.totalorder %s382, %s383
      %p397 = scmp.eq.s32.totalorder %s34, 1
      %p398 = por %p396, %p397
      %p400 = scmp.ne.s32.totalorder %s383, %s399
      %p401 = scmp.eq.s32.totalorder %s34, 0
      %p402 = por %p400, %p401
      %p403 = scmp.le.s32.totalorder 1, %s28
      %p404 = scmp.lt.s32.totalorder %s28, 3
      %p405 = pnand %p403, %p404
      %p406 = pneg %p405
      // Predicated region
      $region9: #{tpu_custom_call.1} parent=5 // pred_check
        _
      $region10: #{tpu_custom_call.1} parent=5 // pred_check_branch
        %408 = sbr.rel (%p405) target = $region12
      $region11: #{tpu_custom_call.1} parent=5 // pred_region
        %s409 = ssub.s32 %s28, 1
        // Predicated region
        $region13: #{tpu_custom_call.1} parent=11 // pred_check
          %p410 = pneg %p75
        $region14: #{tpu_custom_call.1} parent=11 // pred_check_branch
          %412 = sbr.rel (%p410) target = $region16
        $region15: #{tpu_custom_call.1} parent=11 // pred_region
          _
        $region16: #{tpu_custom_call.1} parent=11 // pred_fallthru
          _
        // Predicated region
        $region17: #{tpu_custom_call.1} parent=11 // pred_check
          %p413 = pneg %p96
        $region18: #{tpu_custom_call.1} parent=11 // pred_check_branch
          %415 = sbr.rel (%p413) target = $region20
        $region19: #{tpu_custom_call.1} parent=11 // pred_region
          _
        $region20: #{tpu_custom_call.1} parent=11 // pred_fallthru
          _
        // Predicated region
        $region21: #{tpu_custom_call.1} parent=11 // pred_check
          %p416 = pneg %p117
        $region22: #{tpu_custom_call.1} parent=11 // pred_check_branch
          %418 = sbr.rel (%p416) target = $region24
        $region23: #{tpu_custom_call.1} parent=11 // pred_region
          _
        $region24: #{tpu_custom_call.1} parent=11 // pred_fallthru
          _
        // Predicated region
        $region25: #{tpu_custom_call.1} parent=11 // pred_check
          %p419 = pneg %p138
        $region26: #{tpu_custom_call.1} parent=11 // pred_check_branch
          %421 = sbr.rel (%p419) target = $region28
        $region27: #{tpu_custom_call.1} parent=11 // pred_region
          _
        $region28: #{tpu_custom_call.1} parent=11 // pred_fallthru
          _
        // Predicated region
        $region29: #{tpu_custom_call.1} parent=11 // pred_check
          %p422 = pneg %p159
        $region30: #{tpu_custom_call.1} parent=11 // pred_check_branch
          %424 = sbr.rel (%p422) target = $region32
        $region31: #{tpu_custom_call.1} parent=11 // pred_region
          _
        $region32: #{tpu_custom_call.1} parent=11 // pred_fallthru
          _
        // Predicated region
        $region33: #{tpu_custom_call.1} parent=11 // pred_check
          %p425 = pneg %p180
        $region34: #{tpu_custom_call.1} parent=11 // pred_check_branch
          %427 = sbr.rel (%p425) target = $region36
        $region35: #{tpu_custom_call.1} parent=11 // pred_region
          _
        $region36: #{tpu_custom_call.1} parent=11 // pred_fallthru
          _
        // Predicated region
        $region37: #{tpu_custom_call.1} parent=11 // pred_check
          %p428 = pneg %p201
        $region38: #{tpu_custom_call.1} parent=11 // pred_check_branch
          %430 = sbr.rel (%p428) target = $region40
        $region39: #{tpu_custom_call.1} parent=11 // pred_region
          _
        $region40: #{tpu_custom_call.1} parent=11 // pred_fallthru
          _
        // Predicated region
        $region41: #{tpu_custom_call.1} parent=11 // pred_check
          %p431 = pneg %p222
        $region42: #{tpu_custom_call.1} parent=11 // pred_check_branch
          %433 = sbr.rel (%p431) target = $region44
        $region43: #{tpu_custom_call.1} parent=11 // pred_region
          _
        $region44: #{tpu_custom_call.1} parent=11 // pred_fallthru
          _
        // Predicated region
        $region45: #{tpu_custom_call.1} parent=11 // pred_check
          %p434 = pneg %p243
        $region46: #{tpu_custom_call.1} parent=11 // pred_check_branch
          %436 = sbr.rel (%p434) target = $region48
        $region47: #{tpu_custom_call.1} parent=11 // pred_region
          _
        $region48: #{tpu_custom_call.1} parent=11 // pred_fallthru
          _
        // Predicated region
        $region49: #{tpu_custom_call.1} parent=11 // pred_check
          %p437 = pneg %p264
        $region50: #{tpu_custom_call.1} parent=11 // pred_check_branch
          %439 = sbr.rel (%p437) target = $region52
        $region51: #{tpu_custom_call.1} parent=11 // pred_region
          _
        $region52: #{tpu_custom_call.1} parent=11 // pred_fallthru
          _
        // Predicated region
        $region53: #{tpu_custom_call.1} parent=11 // pred_check
          %p440 = pneg %p285
        $region54: #{tpu_custom_call.1} parent=11 // pred_check_branch
          %442 = sbr.rel (%p440) target = $region56
        $region55: #{tpu_custom_call.1} parent=11 // pred_region
          _
        $region56: #{tpu_custom_call.1} parent=11 // pred_fallthru
          _
        // Predicated region
        $region57: #{tpu_custom_call.1} parent=11 // pred_check
          %p443 = pneg %p306
        $region58: #{tpu_custom_call.1} parent=11 // pred_check_branch
          %445 = sbr.rel (%p443) target = $region60
        $region59: #{tpu_custom_call.1} parent=11 // pred_region
          _
        $region60: #{tpu_custom_call.1} parent=11 // pred_fallthru
          _
        // Predicated region
        $region61: #{tpu_custom_call.1} parent=11 // pred_check
          %p446 = pneg %p327
        $region62: #{tpu_custom_call.1} parent=11 // pred_check_branch
          %448 = sbr.rel (%p446) target = $region64
        $region63: #{tpu_custom_call.1} parent=11 // pred_region
          _
        $region64: #{tpu_custom_call.1} parent=11 // pred_fallthru
          _
        // Predicated region
        $region65: #{tpu_custom_call.1} parent=11 // pred_check
          %p449 = pneg %p348
        $region66: #{tpu_custom_call.1} parent=11 // pred_check_branch
          %451 = sbr.rel (%p449) target = $region68
        $region67: #{tpu_custom_call.1} parent=11 // pred_region
          _
        $region68: #{tpu_custom_call.1} parent=11 // pred_fallthru
          _
        // Predicated region
        $region69: #{tpu_custom_call.1} parent=11 // pred_check
          %p452 = pneg %p369
        $region70: #{tpu_custom_call.1} parent=11 // pred_check_branch
          %454 = sbr.rel (%p452) target = $region72
        $region71: #{tpu_custom_call.1} parent=11 // pred_region
          _
        $region72: #{tpu_custom_call.1} parent=11 // pred_fallthru
          _
      $region12: #{tpu_custom_call.1} parent=5 // pred_fallthru
        _
      %p455 = scmp.lt.s32.totalorder %s28, 2
      // Predicated region
      $region73: #{tpu_custom_call.1} parent=5 // pred_check
        %p456 = pneg %p455
      $region74: #{tpu_custom_call.1} parent=5 // pred_check_branch
        %458 = sbr.rel (%p456) target = $region76
      $region75: #{tpu_custom_call.1} parent=5 // pred_region
        // Predicated region
        $region77: #{tpu_custom_call.1} parent=75 // pred_check
          %p459 = pneg %p48
        $region78: #{tpu_custom_call.1} parent=75 // pred_check_branch
          %461 = sbr.rel (%p459) target = $region80
        $region79: #{tpu_custom_call.1} parent=75 // pred_region
          %s462 = sand.u32 %s38, 1
          %s463 = scalar_lea.sflag [#allocation3], %s462
          %s464 = sand.u32 %s38, 1
          %s465 = smul.addr %s464, 64
          %s466 = scalar_lea.vmem [#allocation2], %s465
          %s467 = smul.u32 4, %s28
          %469 = vsyncadd %s463, 0
          %s470 = smul.addr %s467, 2
          %s471 = smul.addr %s470, 8
          %s472 = scalar_lea.hbm %s0, %s471
          %s473 = sshll.u32 %s472, 4
          %s474 = int_to_ptr.hbm [resolvable:$true] %s473
          %s475 = sshll.u32 %s466, 4
          %s476 = int_to_ptr.vmem [resolvable:$true] %s475
          %481 = dma.hbm_to_vmem [thread:$0]  %s474, 1024, %s476, %s463, 256, 256, 16
        $region80: #{tpu_custom_call.1} parent=75 // pred_fallthru
          _
      $region76: #{tpu_custom_call.1} parent=5 // pred_fallthru
        _
      %p482 = scmp.le.s32.totalorder 1, %s28
      %p483 = scmp.lt.s32.totalorder %s28, 3
      %p484 = pnand %p482, %p483
      %p485 = pneg %p484
      // Predicated region
      $region81: #{tpu_custom_call.1} parent=5 // pred_check
        _
      $region82: #{tpu_custom_call.1} parent=5 // pred_check_branch
        %487 = sbr.rel (%p484) target = $region84
      $region83: #{tpu_custom_call.1} parent=5 // pred_region
        %s488 = ssub.s32 %s28, 1
        %s489 = sand.u32 %s41, 1
        %s490 = scalar_lea.sflag [#allocation3], %s489
        %s491 = sand.u32 %s41, 1
        %s492 = smul.addr %s491, 64
        %s493 = scalar_lea.vmem [#allocation2], %s492
        // Predicated region
        $region85: #{tpu_custom_call.1} parent=83 // pred_check
          %p494 = pneg %p54
        $region86: #{tpu_custom_call.1} parent=83 // pred_check_branch
          %496 = sbr.rel (%p494) target = $region88
        $region87: #{tpu_custom_call.1} parent=83 // pred_region
          %498 = dma.done %s490, 1024
        $region88: #{tpu_custom_call.1} parent=83 // pred_fallthru
          _
        %s499 = sand.u32 %s41, 1
        %s500 = scalar_lea.sflag [#allocation3], %s499
        %s501 = sand.u32 %s41, 1
        %s502 = smul.addr %s501, 64
        %s503 = scalar_lea.vmem [#allocation2], %s502
        %p504 = pneg %p54
        %p505 = pneg %p51
        %p506 = pneg %p75
        %p507 = pneg %p72
        %p508 = pneg %p96
        %p509 = pneg %p93
        %p510 = pneg %p117
        %p511 = pneg %p114
        %p512 = pneg %p138
        %p513 = pneg %p135
        %p514 = pneg %p159
        %p515 = pneg %p156
        %p516 = pneg %p180
        %p517 = pneg %p177
        %p518 = pneg %p201
        %p519 = pneg %p198
        %p520 = pneg %p222
        %p521 = pneg %p219
        %p522 = pneg %p243
        %p523 = pneg %p240
        %p524 = pneg %p264
        %p525 = pneg %p261
        %p526 = pneg %p285
        %p527 = pneg %p282
        %p528 = pneg %p306
        %p529 = pneg %p303
        %p530 = pneg %p327
        %p531 = pneg %p324
        %p532 = pneg %p348
        %p533 = pneg %p345
        %p534 = pneg %p369
        %p535 = pneg %p366
        %p536 = pneg %p395
        %p537 = pneg %p392
        %s538 = sand.u32 %s382, 1
        %s539 = scalar_lea.sflag [#allocation4], %s538
        %s540 = sand.u32 %s382, 1
        %s541 = smul.addr %s540, 64
        %s542 = scalar_lea.vmem [#allocation5], %s541
        %s543 = smul.u32 4, %s33
        %s544 = smul.u32 4, %s33
        %v545 = vld [vmem:[%s1] ss:$2 sm:$0x3]
        %s546 = scalar_lea.vmem %s1, 1
        %v547 = vld [vmem:[%s546] ss:$2 sm:$0x3]
        %v548 = vld [vmem:[%s2] sm:$0xff]
        %v549 = vld [vmem:[%s2 + $0x8] sm:$0xff]
        %v550 = vld [vmem:[%s2 + $0x10] sm:$0xff]
        %v551 = vld [vmem:[%s2 + $0x18] sm:$0xff]
        %v552 = vld [vmem:[%s7] sm:$0xff]
        %v553 = vld [vmem:[%s7 + $0x8] sm:$0xff]
        %v554 = vld [vmem:[%s7 + $0x10] sm:$0xff]
        %v555 = vld [vmem:[%s7 + $0x18] sm:$0xff]
        %v556 = vld [vmem:[%s3] sm:$0xff]
        %v557 = vld [vmem:[%s3 + $0x8] sm:$0xff]
        %v558 = vld [vmem:[%s3 + $0x10] sm:$0xff]
        %v559 = vld [vmem:[%s3 + $0x18] sm:$0xff]
        %v560 = vld [vmem:[%s4] sm:$0xff]
        %v561 = vld [vmem:[%s4 + $0x8] sm:$0xff]
        %v562 = vld [vmem:[%s4 + $0x10] sm:$0xff]
        %v563 = vld [vmem:[%s4 + $0x18] sm:$0xff]
        %v564 = vld [vmem:[%s5] sm:$0xff]
        %v565 = vld [vmem:[%s5 + $0x8] sm:$0xff]
        %v566 = vld [vmem:[%s6] sm:$0xff]
        %v567 = vld [vmem:[%s6 + $0x8] sm:$0xff]
        %v568 = vld [vmem:[%s8] sm:$0xff]
        %v569 = vld [vmem:[%s8 + $0x8] sm:$0xff]
        %v570 = vld [vmem:[%s8 + $0x10] sm:$0xff]
        %v571 = vld [vmem:[%s8 + $0x18] sm:$0xff]
        %v572 = vld [vmem:[%s9] sm:$0xff]
        %v573 = vld [vmem:[%s9 + $0x8] sm:$0xff]
        %v574 = vld [vmem:[%s9 + $0x10] sm:$0xff]
        %v575 = vld [vmem:[%s9 + $0x18] sm:$0xff]
        %v576 = vld [vmem:[%s10] sm:$0xff]
        %v577 = vld [vmem:[%s10 + $0x8] sm:$0xff]
        %v578 = vld [vmem:[%s11] sm:$0xff]
        %v579 = vld [vmem:[%s11 + $0x8] sm:$0xff]
        %v580 = vld [vmem:[%s12] sm:$0xff]
        %v581 = vld [vmem:[%s12 + $0x8] sm:$0xff]
        %v582 = vld [vmem:[%s12 + $0x10] sm:$0xff]
        %v583 = vld [vmem:[%s12 + $0x18] sm:$0xff]
        %v584 = vld [vmem:[%s13] sm:$0xff]
        %v585 = vld [vmem:[%s13 + $0x8] sm:$0xff]
        %v586 = vld [vmem:[%s13 + $0x10] sm:$0xff]
        %v587 = vld [vmem:[%s13 + $0x18] sm:$0xff]
        %v588 = vld [vmem:[%s14] sm:$0xff]
        %v589 = vld [vmem:[%s14 + $0x8] sm:$0xff]
        %v590 = vld [vmem:[%s14 + $0x10] sm:$0xff]
        %v591 = vld [vmem:[%s14 + $0x18] sm:$0xff]
        %v592 = vld [vmem:[%s15] sm:$0xff]
        %v593 = vld [vmem:[%s15 + $0x8] sm:$0xff]
        %v594 = vld [vmem:[%s15 + $0x10] sm:$0xff]
        %v595 = vld [vmem:[%s15 + $0x18] sm:$0xff]
        %v596 = vld [vmem:[%s493] sm:$0xff]
        %v597 = vld [vmem:[%s493 + $0x8] sm:$0xff]
        %v598 = vld [vmem:[%s493 + $0x10] sm:$0xff]
        %v599 = vld [vmem:[%s493 + $0x18] sm:$0xff]
        %v600 = vld [vmem:[%s493 + $0x20] sm:$0xff]
        %v601 = vld [vmem:[%s493 + $0x28] sm:$0xff]
        %v602 = vld [vmem:[%s493 + $0x30] sm:$0xff]
        %v603 = vld [vmem:[%s493 + $0x38] sm:$0xff]
        %v604 = vadd.f32 %v596, %v598
        %v605 = vadd.f32 %v604, %v600
        %v606 = vadd.f32 %v605, %v602
        %v607 = vrot.slane %v606, 4
        %v608 = vadd.f32 %v606, %v607
        %v609 = vrot.slane %v608, 2
        %v610 = vadd.f32 %v608, %v609
        %v611 = vrot.slane %v610, 1
        %v612 = vadd.f32 %v610, %v611
        %v613 = vadd.f32 %v597, %v599
        %v614 = vadd.f32 %v613, %v601
        %v615 = vadd.f32 %v614, %v603
        %v616 = vrot.slane %v615, 4
        %v617 = vadd.f32 %v615, %v616
        %v618 = vrot.slane %v617, 2
        %v619 = vadd.f32 %v617, %v618
        %v620 = vrot.slane %v619, 1
        %v621 = vadd.f32 %v619, %v620
        %v622 = vrcp.pop 32.0
        %v623 = vmul.f32 32.0, %v622
        %v624 = vsub.f32 1.0, %v623
        %v625 = vmul.f32 %v622, %v624
        %v626 = vadd.f32 %v622, %v625
        %vm627 = vweird.f32 %v622
        %v628 = vsel %vm627, %v622, %v626
        %v629 = vmul.f32 %v612, %v628
        %v630 = vmul.f32 %v621, %v628
        %v631 = vmul.f32 %v596, %v596
        %v632 = vmul.f32 %v597, %v597
        %v633 = vmul.f32 %v598, %v598
        %v634 = vmul.f32 %v599, %v599
        %v635 = vmul.f32 %v600, %v600
        %v636 = vmul.f32 %v601, %v601
        %v637 = vmul.f32 %v602, %v602
        %v638 = vmul.f32 %v603, %v603
        %v639 = vadd.f32 %v631, %v633
        %v640 = vadd.f32 %v639, %v635
        %v641 = vadd.f32 %v640, %v637
        %v642 = vrot.slane %v641, 4
        %v643 = vadd.f32 %v641, %v642
        %v644 = vrot.slane %v643, 2
        %v645 = vadd.f32 %v643, %v644
        %v646 = vrot.slane %v645, 1
        %v647 = vadd.f32 %v645, %v646
        %v648 = vadd.f32 %v632, %v634
        %v649 = vadd.f32 %v648, %v636
        %v650 = vadd.f32 %v649, %v638
        %v651 = vrot.slane %v650, 4
        %v652 = vadd.f32 %v650, %v651
        %v653 = vrot.slane %v652, 2
        %v654 = vadd.f32 %v652, %v653
        %v655 = vrot.slane %v654, 1
        %v656 = vadd.f32 %v654, %v655
        %v657 = vmul.f32 %v647, %v628
        %v658 = vmul.f32 %v656, %v628
        %v659 = vmul.f32 %v629, %v629
        %v660 = vmul.f32 %v630, %v630
        %v661 = vsub.f32 %v657, %v659
        %v662 = vsub.f32 %v658, %v660
        %v663 = vsub.f32 %v596, %v629
        %v664 = vsub.f32 %v597, %v630
        %v665 = vsub.f32 %v598, %v629
        %v666 = vsub.f32 %v599, %v630
        %v667 = vsub.f32 %v600, %v629
        %v668 = vsub.f32 %v601, %v630
        %v669 = vsub.f32 %v602, %v629
        %v670 = vsub.f32 %v603, %v630
        %v671 = vadd.f32 %v661, 1e-05
        %v672 = vadd.f32 %v662, 1e-05
        %v673 = vrsqrt.pop %v671
        %v674 = vmul.f32 %v673, %v671
        %v675 = vmul.f32 %v674, %v673
        %v676 = vmul.f32 0.5, %v675
        %v677 = vsub.f32 1.5, %v676
        %v678 = vmul.f32 %v673, %v677
        %vm679 = vweird.f32 %v671
        %vm680 = vweird.f32 %v673
        %vm681 = vmor %vm679, %vm680
        %v682 = vsel %vm681, %v673, %v678
        %v683 = vrsqrt.pop %v672
        %v684 = vmul.f32 %v683, %v672
        %v685 = vmul.f32 %v684, %v683
        %v686 = vmul.f32 0.5, %v685
        %v687 = vsub.f32 1.5, %v686
        %v688 = vmul.f32 %v683, %v687
        %vm689 = vweird.f32 %v672
        %vm690 = vweird.f32 %v683
        %vm691 = vmor %vm689, %vm690
        %v692 = vsel %vm691, %v683, %v688
        %v693 = vmul.f32 %v663, %v682
        %v694 = vmul.f32 %v664, %v692
        %v695 = vmul.f32 %v665, %v682
        %v696 = vmul.f32 %v666, %v692
        %v697 = vmul.f32 %v667, %v682
        %v698 = vmul.f32 %v668, %v692
        %v699 = vmul.f32 %v669, %v682
        %v700 = vmul.f32 %v670, %v692
        %702 = vset.pattern.permute.xlu0 0
        %703 = vperm.xlu0 %702, %v548
        %v704 = vpop.permute.xlu0 %703
        %707 = vset.pattern.permute.xlu0 0
        %708 = vperm.xlu0 %707, %v549
        %v709 = vpop.permute.xlu0 %708
        %712 = vset.pattern.permute.xlu0 0
        %713 = vperm.xlu0 %712, %v550
        %v714 = vpop.permute.xlu0 %713
        %717 = vset.pattern.permute.xlu0 0
        %718 = vperm.xlu0 %717, %v551
        %v719 = vpop.permute.xlu0 %718
        %v721 = vmul.f32 %v693, %v704
        %v722 = vmul.f32 %v694, %v704
        %v723 = vmul.f32 %v695, %v709
        %v724 = vmul.f32 %v696, %v709
        %v725 = vmul.f32 %v697, %v714
        %v726 = vmul.f32 %v698, %v714
        %v727 = vmul.f32 %v699, %v719
        %v728 = vmul.f32 %v700, %v719
        %730 = vset.pattern.permute.xlu0 0
        %731 = vperm.xlu0 %730, %v560
        %v732 = vpop.permute.xlu0 %731
        %735 = vset.pattern.permute.xlu0 0
        %736 = vperm.xlu0 %735, %v561
        %v737 = vpop.permute.xlu0 %736
        %740 = vset.pattern.permute.xlu0 0
        %741 = vperm.xlu0 %740, %v562
        %v742 = vpop.permute.xlu0 %741
        %745 = vset.pattern.permute.xlu0 0
        %746 = vperm.xlu0 %745, %v563
        %v747 = vpop.permute.xlu0 %746
        %vm749 = vcmask 130048
        %v751 = vsel %vm749, %v556, 0
        %v754 = vsel %vm749, %v557, 0
        %v757 = vsel %vm749, %v558, 0
        %v760 = vsel %vm749, %v559, 0
        %762 = vmatpush.msra.mxu0 0.0
        %763 = vmatpush.msra.mxu0 0.0
        %764 = vmatpush.msra.mxu0 0.0
        %765 = vmatpush.msra.mxu0 0.0
        %766 = vmatpush.msra.mxu0 0.0
        %767 = vmatpush.msra.mxu0 0.0
        %768 = vmatpush.msra.mxu0 0.0
        %769 = vmatpush.msra.mxu0 0.0
        %770 = vmatpush.msra.mxu0 0.0
        %771 = vmatpush.msra.mxu0 0.0
        %772 = vmatpush.msra.mxu0 0.0
        %773 = vmatpush.msra.mxu0 0.0
        %774 = vmatpush.msra.mxu0 0.0
        %775 = vmatpush.msra.mxu0 0.0
        %v776 = vand.u32 %v723, 4294901760
        %777 = vmatpush.msra.mxu0 %v776
        %v778 = vand.u32 %v721, 4294901760
        %779 = vmatpush.msra.mxu0 %v778
        %v780 = vand.u32 %v751, 4294901760
        %v781 = vsub.f32 %v751, %v780
        %v782 = vand.u32 %v781, 4294901760
        %v783 = vsub.f32 %v781, %v782
        %v784 = vand.u32 %v783, 4294901760
        %785 = vmatmul.f32.gmra.mxu0 %v784
        %v786 = vpop.f32.mrf.mxu0
        %v787 = vadd.f32 %v732, %v786
        %v788 = vand.u32 %v754, 4294901760
        %v789 = vsub.f32 %v754, %v788
        %v790 = vand.u32 %v789, 4294901760
        %v791 = vsub.f32 %v789, %v790
        %v792 = vand.u32 %v791, 4294901760
        %793 = vmatmul.f32.gmra.mxu0 %v792
        %v794 = vpop.f32.mrf.mxu0
        %v795 = vadd.f32 %v737, %v794
        %v796 = vand.u32 %v757, 4294901760
        %v797 = vsub.f32 %v757, %v796
        %v798 = vand.u32 %v797, 4294901760
        %v799 = vsub.f32 %v797, %v798
        %v800 = vand.u32 %v799, 4294901760
        %801 = vmatmul.f32.gmra.mxu0 %v800
        %v802 = vpop.f32.mrf.mxu0
        %v803 = vadd.f32 %v742, %v802
        %v804 = vand.u32 %v760, 4294901760
        %v805 = vsub.f32 %v760, %v804
        %v806 = vand.u32 %v805, 4294901760
        %v807 = vsub.f32 %v805, %v806
        %v808 = vand.u32 %v807, 4294901760
        %809 = vmatmul.f32.gmra.mxu0 %v808
        %v810 = vpop.f32.mrf.mxu0
        %v811 = vadd.f32 %v747, %v810
        %812 = vdwg.mxu0
        %813 = vmatpush.msra.mxu0 0.0
        %814 = vmatpush.msra.mxu0 0.0
        %815 = vmatpush.msra.mxu0 0.0
        %816 = vmatpush.msra.mxu0 0.0
        %817 = vmatpush.msra.mxu0 0.0
        %818 = vmatpush.msra.mxu0 0.0
        %819 = vmatpush.msra.mxu0 0.0
        %820 = vmatpush.msra.mxu0 0.0
        %821 = vmatpush.msra.mxu0 0.0
        %822 = vmatpush.msra.mxu0 0.0
        %823 = vmatpush.msra.mxu0 0.0
        %824 = vmatpush.msra.mxu0 0.0
        %825 = vmatpush.msra.mxu0 0.0
        %826 = vmatpush.msra.mxu0 0.0
        %v827 = vand.u32 %v723, 4294901760
        %v828 = vsub.f32 %v723, %v827
        %v829 = vand.u32 %v828, 4294901760
        %v830 = vsub.f32 %v828, %v829
        %v831 = vand.u32 %v830, 4294901760
        %832 = vmatpush.msra.mxu0 %v831
        %v833 = vand.u32 %v721, 4294901760
        %v834 = vsub.f32 %v721, %v833
        %v835 = vand.u32 %v834, 4294901760
        %v836 = vsub.f32 %v834, %v835
        %v837 = vand.u32 %v836, 4294901760
        %838 = vmatpush.msra.mxu0 %v837
        %v839 = vand.u32 %v751, 4294901760
        %840 = vmatmul.f32.gmra.mxu0 %v839
        %v841 = vpop.f32.mrf.mxu0
        %v842 = vadd.f32 %v787, %v841
        %v843 = vand.u32 %v754, 4294901760
        %844 = vmatmul.f32.gmra.mxu0 %v843
        %v845 = vpop.f32.mrf.mxu0
        %v846 = vadd.f32 %v795, %v845
        %v847 = vand.u32 %v757, 4294901760
        %848 = vmatmul.f32.gmra.mxu0 %v847
        %v849 = vpop.f32.mrf.mxu0
        %v850 = vadd.f32 %v803, %v849
        %v851 = vand.u32 %v760, 4294901760
        %852 = vmatmul.f32.gmra.mxu0 %v851
        %v853 = vpop.f32.mrf.mxu0
        %v854 = vadd.f32 %v811, %v853
        %855 = vdwg.mxu0
        %856 = vmatpush.msra.mxu0 0.0
        %857 = vmatpush.msra.mxu0 0.0
        %858 = vmatpush.msra.mxu0 0.0
        %859 = vmatpush.msra.mxu0 0.0
        %860 = vmatpush.msra.mxu0 0.0
        %861 = vmatpush.msra.mxu0 0.0
        %862 = vmatpush.msra.mxu0 0.0
        %863 = vmatpush.msra.mxu0 0.0
        %864 = vmatpush.msra.mxu0 0.0
        %865 = vmatpush.msra.mxu0 0.0
        %866 = vmatpush.msra.mxu0 0.0
        %867 = vmatpush.msra.mxu0 0.0
        %868 = vmatpush.msra.mxu0 0.0
        %869 = vmatpush.msra.mxu0 0.0
        %v870 = vand.u32 %v723, 4294901760
        %v871 = vsub.f32 %v723, %v870
        %872 = vmatpush.msra.mxu0 %v871
        %v873 = vand.u32 %v721, 4294901760
        %v874 = vsub.f32 %v721, %v873
        %875 = vmatpush.msra.mxu0 %v874
        %v876 = vand.u32 %v751, 4294901760
        %v877 = vsub.f32 %v751, %v876
        %878 = vmatmul.f32.gmra.mxu0 %v877
        %v879 = vpop.f32.mrf.mxu0
        %v880 = vadd.f32 %v842, %v879
        %v881 = vand.u32 %v754, 4294901760
        %v882 = vsub.f32 %v754, %v881
        %883 = vmatmul.f32.gmra.mxu0 %v882
        %v884 = vpop.f32.mrf.mxu0
        %v885 = vadd.f32 %v846, %v884
        %v886 = vand.u32 %v757, 4294901760
        %v887 = vsub.f32 %v757, %v886
        %888 = vmatmul.f32.gmra.mxu0 %v887
        %v889 = vpop.f32.mrf.mxu0
        %v890 = vadd.f32 %v850, %v889
        %v891 = vand.u32 %v760, 4294901760
        %v892 = vsub.f32 %v760, %v891
        %893 = vmatmul.f32.gmra.mxu0 %v892
        %v894 = vpop.f32.mrf.mxu0
        %v895 = vadd.f32 %v854, %v894
        %896 = vdwg.mxu0
        %897 = vmatpush.msra.mxu0 0.0
        %898 = vmatpush.msra.mxu0 0.0
        %899 = vmatpush.msra.mxu0 0.0
        %900 = vmatpush.msra.mxu0 0.0
        %901 = vmatpush.msra.mxu0 0.0
        %902 = vmatpush.msra.mxu0 0.0
        %903 = vmatpush.msra.mxu0 0.0
        %904 = vmatpush.msra.mxu0 0.0
        %905 = vmatpush.msra.mxu0 0.0
        %906 = vmatpush.msra.mxu0 0.0
        %907 = vmatpush.msra.mxu0 0.0
        %908 = vmatpush.msra.mxu0 0.0
        %909 = vmatpush.msra.mxu0 0.0
        %910 = vmatpush.msra.mxu0 0.0
        %v911 = vand.u32 %v723, 4294901760
        %912 = vmatpush.msra.mxu0 %v911
        %v913 = vand.u32 %v721, 4294901760
        %914 = vmatpush.msra.mxu0 %v913
        %v915 = vand.u32 %v751, 4294901760
        %v916 = vsub.f32 %v751, %v915
        %v917 = vand.u32 %v916, 4294901760
        %918 = vmatmul.f32.gmra.mxu0 %v917
        %v919 = vpop.f32.mrf.mxu0
        %v920 = vadd.f32 %v880, %v919
        %v921 = vand.u32 %v754, 4294901760
        %v922 = vsub.f32 %v754, %v921
        %v923 = vand.u32 %v922, 4294901760
        %924 = vmatmul.f32.gmra.mxu0 %v923
        %v925 = vpop.f32.mrf.mxu0
        %v926 = vadd.f32 %v885, %v925
        %v927 = vand.u32 %v757, 4294901760
        %v928 = vsub.f32 %v757, %v927
        %v929 = vand.u32 %v928, 4294901760
        %930 = vmatmul.f32.gmra.mxu0 %v929
        %v931 = vpop.f32.mrf.mxu0
        %v932 = vadd.f32 %v890, %v931
        %v933 = vand.u32 %v760, 4294901760
        %v934 = vsub.f32 %v760, %v933
        %v935 = vand.u32 %v934, 4294901760
        %936 = vmatmul.f32.gmra.mxu0 %v935
        %v937 = vpop.f32.mrf.mxu0
        %v938 = vadd.f32 %v895, %v937
        %939 = vdwg.mxu0
        %940 = vmatpush.msra.mxu0 0.0
        %941 = vmatpush.msra.mxu0 0.0
        %942 = vmatpush.msra.mxu0 0.0
        %943 = vmatpush.msra.mxu0 0.0
        %944 = vmatpush.msra.mxu0 0.0
        %945 = vmatpush.msra.mxu0 0.0
        %946 = vmatpush.msra.mxu0 0.0
        %947 = vmatpush.msra.mxu0 0.0
        %948 = vmatpush.msra.mxu0 0.0
        %949 = vmatpush.msra.mxu0 0.0
        %950 = vmatpush.msra.mxu0 0.0
        %951 = vmatpush.msra.mxu0 0.0
        %952 = vmatpush.msra.mxu0 0.0
        %953 = vmatpush.msra.mxu0 0.0
        %v954 = vand.u32 %v723, 4294901760
        %v955 = vsub.f32 %v723, %v954
        %v956 = vand.u32 %v955, 4294901760
        %957 = vmatpush.msra.mxu0 %v956
        %v958 = vand.u32 %v721, 4294901760
        %v959 = vsub.f32 %v721, %v958
        %v960 = vand.u32 %v959, 4294901760
        %961 = vmatpush.msra.mxu0 %v960
        %v962 = vand.u32 %v751, 4294901760
        %963 = vmatmul.f32.gmra.mxu0 %v962
        %v964 = vpop.f32.mrf.mxu0
        %v965 = vadd.f32 %v920, %v964
        %v966 = vand.u32 %v754, 4294901760
        %967 = vmatmul.f32.gmra.mxu0 %v966
        %v968 = vpop.f32.mrf.mxu0
        %v969 = vadd.f32 %v926, %v968
        %v970 = vand.u32 %v757, 4294901760
        %971 = vmatmul.f32.gmra.mxu0 %v970
        %v972 = vpop.f32.mrf.mxu0
        %v973 = vadd.f32 %v932, %v972
        %v974 = vand.u32 %v760, 4294901760
        %975 = vmatmul.f32.gmra.mxu0 %v974
        %v976 = vpop.f32.mrf.mxu0
        %v977 = vadd.f32 %v938, %v976
        %978 = vdwg.mxu0
        %979 = vmatpush.msra.mxu0 0.0
        %980 = vmatpush.msra.mxu0 0.0
        %981 = vmatpush.msra.mxu0 0.0
        %982 = vmatpush.msra.mxu0 0.0
        %983 = vmatpush.msra.mxu0 0.0
        %984 = vmatpush.msra.mxu0 0.0
        %985 = vmatpush.msra.mxu0 0.0
        %986 = vmatpush.msra.mxu0 0.0
        %987 = vmatpush.msra.mxu0 0.0
        %988 = vmatpush.msra.mxu0 0.0
        %989 = vmatpush.msra.mxu0 0.0
        %990 = vmatpush.msra.mxu0 0.0
        %991 = vmatpush.msra.mxu0 0.0
        %992 = vmatpush.msra.mxu0 0.0
        %v993 = vand.u32 %v723, 4294901760
        %994 = vmatpush.msra.mxu0 %v993
        %v995 = vand.u32 %v721, 4294901760
        %996 = vmatpush.msra.mxu0 %v995
        %v997 = vand.u32 %v751, 4294901760
        %998 = vmatmul.f32.gmra.mxu0 %v997
        %v999 = vpop.f32.mrf.mxu0
        %v1000 = vadd.f32 %v965, %v999
        %v1001 = vand.u32 %v754, 4294901760
        %1002 = vmatmul.f32.gmra.mxu0 %v1001
        %v1003 = vpop.f32.mrf.mxu0
        %v1004 = vadd.f32 %v969, %v1003
        %v1005 = vand.u32 %v757, 4294901760
        %1006 = vmatmul.f32.gmra.mxu0 %v1005
        %v1007 = vpop.f32.mrf.mxu0
        %v1008 = vadd.f32 %v973, %v1007
        %v1009 = vand.u32 %v760, 4294901760
        %1010 = vmatmul.f32.gmra.mxu0 %v1009
        %v1011 = vpop.f32.mrf.mxu0
        %v1012 = vadd.f32 %v977, %v1011
        %1013 = vdwg.mxu0
        %1014 = vmatpush.msra.mxu0 0.0
        %1015 = vmatpush.msra.mxu0 0.0
        %1016 = vmatpush.msra.mxu0 0.0
        %1017 = vmatpush.msra.mxu0 0.0
        %1018 = vmatpush.msra.mxu0 0.0
        %1019 = vmatpush.msra.mxu0 0.0
        %1020 = vmatpush.msra.mxu0 0.0
        %1021 = vmatpush.msra.mxu0 0.0
        %1022 = vmatpush.msra.mxu0 0.0
        %1023 = vmatpush.msra.mxu0 0.0
        %1024 = vmatpush.msra.mxu0 0.0
        %1025 = vmatpush.msra.mxu0 0.0
        %1026 = vmatpush.msra.mxu0 0.0
        %1027 = vmatpush.msra.mxu0 0.0
        %v1028 = vand.u32 %v724, 4294901760
        %1029 = vmatpush.msra.mxu0 %v1028
        %v1030 = vand.u32 %v722, 4294901760
        %1031 = vmatpush.msra.mxu0 %v1030
        %v1032 = vand.u32 %v751, 4294901760
        %v1033 = vsub.f32 %v751, %v1032
        %v1034 = vand.u32 %v1033, 4294901760
        %v1035 = vsub.f32 %v1033, %v1034
        %v1036 = vand.u32 %v1035, 4294901760
        %1037 = vmatmul.f32.gmra.mxu0 %v1036
        %v1038 = vpop.f32.mrf.mxu0
        %v1039 = vadd.f32 %v732, %v1038
        %v1040 = vand.u32 %v754, 4294901760
        %v1041 = vsub.f32 %v754, %v1040
        %v1042 = vand.u32 %v1041, 4294901760
        %v1043 = vsub.f32 %v1041, %v1042
        %v1044 = vand.u32 %v1043, 4294901760
        %1045 = vmatmul.f32.gmra.mxu0 %v1044
        %v1046 = vpop.f32.mrf.mxu0
        %v1047 = vadd.f32 %v737, %v1046
        %v1048 = vand.u32 %v757, 4294901760
        %v1049 = vsub.f32 %v757, %v1048
        %v1050 = vand.u32 %v1049, 4294901760
        %v1051 = vsub.f32 %v1049, %v1050
        %v1052 = vand.u32 %v1051, 4294901760
        %1053 = vmatmul.f32.gmra.mxu0 %v1052
        %v1054 = vpop.f32.mrf.mxu0
        %v1055 = vadd.f32 %v742, %v1054
        %v1056 = vand.u32 %v760, 4294901760
        %v1057 = vsub.f32 %v760, %v1056
        %v1058 = vand.u32 %v1057, 4294901760
        %v1059 = vsub.f32 %v1057, %v1058
        %v1060 = vand.u32 %v1059, 4294901760
        %1061 = vmatmul.f32.gmra.mxu0 %v1060
        %v1062 = vpop.f32.mrf.mxu0
        %v1063 = vadd.f32 %v747, %v1062
        %1064 = vdwg.mxu0
        %1065 = vmatpush.msra.mxu0 0.0
        %1066 = vmatpush.msra.mxu0 0.0
        %1067 = vmatpush.msra.mxu0 0.0
        %1068 = vmatpush.msra.mxu0 0.0
        %1069 = vmatpush.msra.mxu0 0.0
        %1070 = vmatpush.msra.mxu0 0.0
        %1071 = vmatpush.msra.mxu0 0.0
        %1072 = vmatpush.msra.mxu0 0.0
        %1073 = vmatpush.msra.mxu0 0.0
        %1074 = vmatpush.msra.mxu0 0.0
        %1075 = vmatpush.msra.mxu0 0.0
        %1076 = vmatpush.msra.mxu0 0.0
        %1077 = vmatpush.msra.mxu0 0.0
        %1078 = vmatpush.msra.mxu0 0.0
        %v1079 = vand.u32 %v724, 4294901760
        %v1080 = vsub.f32 %v724, %v1079
        %v1081 = vand.u32 %v1080, 4294901760
        %v1082 = vsub.f32 %v1080, %v1081
        %v1083 = vand.u32 %v1082, 4294901760
        %1084 = vmatpush.msra.mxu0 %v1083
        %v1085 = vand.u32 %v722, 4294901760
        %v1086 = vsub.f32 %v722, %v1085
        %v1087 = vand.u32 %v1086, 4294901760
        %v1088 = vsub.f32 %v1086, %v1087
        %v1089 = vand.u32 %v1088, 4294901760
        %1090 = vmatpush.msra.mxu0 %v1089
        %v1091 = vand.u32 %v751, 4294901760
        %1092 = vmatmul.f32.gmra.mxu0 %v1091
        %v1093 = vpop.f32.mrf.mxu0
        %v1094 = vadd.f32 %v1039, %v1093
        %v1095 = vand.u32 %v754, 4294901760
        %1096 = vmatmul.f32.gmra.mxu0 %v1095
        %v1097 = vpop.f32.mrf.mxu0
        %v1098 = vadd.f32 %v1047, %v1097
        %v1099 = vand.u32 %v757, 4294901760
        %1100 = vmatmul.f32.gmra.mxu0 %v1099
        %v1101 = vpop.f32.mrf.mxu0
        %v1102 = vadd.f32 %v1055, %v1101
        %v1103 = vand.u32 %v760, 4294901760
        %1104 = vmatmul.f32.gmra.mxu0 %v1103
        %v1105 = vpop.f32.mrf.mxu0
        %v1106 = vadd.f32 %v1063, %v1105
        %1107 = vdwg.mxu0
        %1108 = vmatpush.msra.mxu0 0.0
        %1109 = vmatpush.msra.mxu0 0.0
        %1110 = vmatpush.msra.mxu0 0.0
        %1111 = vmatpush.msra.mxu0 0.0
        %1112 = vmatpush.msra.mxu0 0.0
        %1113 = vmatpush.msra.mxu0 0.0
        %1114 = vmatpush.msra.mxu0 0.0
        %1115 = vmatpush.msra.mxu0 0.0
        %1116 = vmatpush.msra.mxu0 0.0
        %1117 = vmatpush.msra.mxu0 0.0
        %1118 = vmatpush.msra.mxu0 0.0
        %1119 = vmatpush.msra.mxu0 0.0
        %1120 = vmatpush.msra.mxu0 0.0
        %1121 = vmatpush.msra.mxu0 0.0
        %v1122 = vand.u32 %v724, 4294901760
        %v1123 = vsub.f32 %v724, %v1122
        %1124 = vmatpush.msra.mxu0 %v1123
        %v1125 = vand.u32 %v722, 4294901760
        %v1126 = vsub.f32 %v722, %v1125
        %1127 = vmatpush.msra.mxu0 %v1126
        %v1128 = vand.u32 %v751, 4294901760
        %v1129 = vsub.f32 %v751, %v1128
        %1130 = vmatmul.f32.gmra.mxu0 %v1129
        %v1131 = vpop.f32.mrf.mxu0
        %v1132 = vadd.f32 %v1094, %v1131
        %v1133 = vand.u32 %v754, 4294901760
        %v1134 = vsub.f32 %v754, %v1133
        %1135 = vmatmul.f32.gmra.mxu0 %v1134
        %v1136 = vpop.f32.mrf.mxu0
        %v1137 = vadd.f32 %v1098, %v1136
        %v1138 = vand.u32 %v757, 4294901760
        %v1139 = vsub.f32 %v757, %v1138
        %1140 = vmatmul.f32.gmra.mxu0 %v1139
        %v1141 = vpop.f32.mrf.mxu0
        %v1142 = vadd.f32 %v1102, %v1141
        %v1143 = vand.u32 %v760, 4294901760
        %v1144 = vsub.f32 %v760, %v1143
        %1145 = vmatmul.f32.gmra.mxu0 %v1144
        %v1146 = vpop.f32.mrf.mxu0
        %v1147 = vadd.f32 %v1106, %v1146
        %1148 = vdwg.mxu0
        %1149 = vmatpush.msra.mxu0 0.0
        %1150 = vmatpush.msra.mxu0 0.0
        %1151 = vmatpush.msra.mxu0 0.0
        %1152 = vmatpush.msra.mxu0 0.0
        %1153 = vmatpush.msra.mxu0 0.0
        %1154 = vmatpush.msra.mxu0 0.0
        %1155 = vmatpush.msra.mxu0 0.0
        %1156 = vmatpush.msra.mxu0 0.0
        %1157 = vmatpush.msra.mxu0 0.0
        %1158 = vmatpush.msra.mxu0 0.0
        %1159 = vmatpush.msra.mxu0 0.0
        %1160 = vmatpush.msra.mxu0 0.0
        %1161 = vmatpush.msra.mxu0 0.0
        %1162 = vmatpush.msra.mxu0 0.0
        %v1163 = vand.u32 %v724, 4294901760
        %1164 = vmatpush.msra.mxu0 %v1163
        %v1165 = vand.u32 %v722, 4294901760
        %1166 = vmatpush.msra.mxu0 %v1165
        %v1167 = vand.u32 %v751, 4294901760
        %v1168 = vsub.f32 %v751, %v1167
        %v1169 = vand.u32 %v1168, 4294901760
        %1170 = vmatmul.f32.gmra.mxu0 %v1169
        %v1171 = vpop.f32.mrf.mxu0
        %v1172 = vadd.f32 %v1132, %v1171
        %v1173 = vand.u32 %v754, 4294901760
        %v1174 = vsub.f32 %v754, %v1173
        %v1175 = vand.u32 %v1174, 4294901760
        %1176 = vmatmul.f32.gmra.mxu0 %v1175
        %v1177 = vpop.f32.mrf.mxu0
        %v1178 = vadd.f32 %v1137, %v1177
        %v1179 = vand.u32 %v757, 4294901760
        %v1180 = vsub.f32 %v757, %v1179
        %v1181 = vand.u32 %v1180, 4294901760
        %1182 = vmatmul.f32.gmra.mxu0 %v1181
        %v1183 = vpop.f32.mrf.mxu0
        %v1184 = vadd.f32 %v1142, %v1183
        %v1185 = vand.u32 %v760, 4294901760
        %v1186 = vsub.f32 %v760, %v1185
        %v1187 = vand.u32 %v1186, 4294901760
        %1188 = vmatmul.f32.gmra.mxu0 %v1187
        %v1189 = vpop.f32.mrf.mxu0
        %v1190 = vadd.f32 %v1147, %v1189
        %1191 = vdwg.mxu0
        %1192 = vmatpush.msra.mxu0 0.0
        %1193 = vmatpush.msra.mxu0 0.0
        %1194 = vmatpush.msra.mxu0 0.0
        %1195 = vmatpush.msra.mxu0 0.0
        %1196 = vmatpush.msra.mxu0 0.0
        %1197 = vmatpush.msra.mxu0 0.0
        %1198 = vmatpush.msra.mxu0 0.0
        %1199 = vmatpush.msra.mxu0 0.0
        %1200 = vmatpush.msra.mxu0 0.0
        %1201 = vmatpush.msra.mxu0 0.0
        %1202 = vmatpush.msra.mxu0 0.0
        %1203 = vmatpush.msra.mxu0 0.0
        %1204 = vmatpush.msra.mxu0 0.0
        %1205 = vmatpush.msra.mxu0 0.0
        %v1206 = vand.u32 %v724, 4294901760
        %v1207 = vsub.f32 %v724, %v1206
        %v1208 = vand.u32 %v1207, 4294901760
        %1209 = vmatpush.msra.mxu0 %v1208
        %v1210 = vand.u32 %v722, 4294901760
        %v1211 = vsub.f32 %v722, %v1210
        %v1212 = vand.u32 %v1211, 4294901760
        %1213 = vmatpush.msra.mxu0 %v1212
        %v1214 = vand.u32 %v751, 4294901760
        %1215 = vmatmul.f32.gmra.mxu0 %v1214
        %v1216 = vpop.f32.mrf.mxu0
        %v1217 = vadd.f32 %v1172, %v1216
        %v1218 = vand.u32 %v754, 4294901760
        %1219 = vmatmul.f32.gmra.mxu0 %v1218
        %v1220 = vpop.f32.mrf.mxu0
        %v1221 = vadd.f32 %v1178, %v1220
        %v1222 = vand.u32 %v757, 4294901760
        %1223 = vmatmul.f32.gmra.mxu0 %v1222
        %v1224 = vpop.f32.mrf.mxu0
        %v1225 = vadd.f32 %v1184, %v1224
        %v1226 = vand.u32 %v760, 4294901760
        %1227 = vmatmul.f32.gmra.mxu0 %v1226
        %v1228 = vpop.f32.mrf.mxu0
        %v1229 = vadd.f32 %v1190, %v1228
        %1230 = vdwg.mxu0
        %1231 = vmatpush.msra.mxu0 0.0
        %1232 = vmatpush.msra.mxu0 0.0
        %1233 = vmatpush.msra.mxu0 0.0
        %1234 = vmatpush.msra.mxu0 0.0
        %1235 = vmatpush.msra.mxu0 0.0
        %1236 = vmatpush.msra.mxu0 0.0
        %1237 = vmatpush.msra.mxu0 0.0
        %1238 = vmatpush.msra.mxu0 0.0
        %1239 = vmatpush.msra.mxu0 0.0
        %1240 = vmatpush.msra.mxu0 0.0
        %1241 = vmatpush.msra.mxu0 0.0
        %1242 = vmatpush.msra.mxu0 0.0
        %1243 = vmatpush.msra.mxu0 0.0
        %1244 = vmatpush.msra.mxu0 0.0
        %v1245 = vand.u32 %v724, 4294901760
        %1246 = vmatpush.msra.mxu0 %v1245
        %v1247 = vand.u32 %v722, 4294901760
        %1248 = vmatpush.msra.mxu0 %v1247
        %v1249 = vand.u32 %v751, 4294901760
        %1250 = vmatmul.f32.gmra.mxu0 %v1249
        %v1251 = vpop.f32.mrf.mxu0
        %v1252 = vadd.f32 %v1217, %v1251
        %v1253 = vand.u32 %v754, 4294901760
        %1254 = vmatmul.f32.gmra.mxu0 %v1253
        %v1255 = vpop.f32.mrf.mxu0
        %v1256 = vadd.f32 %v1221, %v1255
        %v1257 = vand.u32 %v757, 4294901760
        %1258 = vmatmul.f32.gmra.mxu0 %v1257
        %v1259 = vpop.f32.mrf.mxu0
        %v1260 = vadd.f32 %v1225, %v1259
        %v1261 = vand.u32 %v760, 4294901760
        %1262 = vmatmul.f32.gmra.mxu0 %v1261
        %v1263 = vpop.f32.mrf.mxu0
        %v1264 = vadd.f32 %v1229, %v1263
        %1265 = vdwg.mxu0
        %v1266 = vxor.u32 %v1000, 2147483648
        %v1267 = vxor.u32 %v1252, 2147483648
        %v1268 = vxor.u32 %v1004, 2147483648
        %v1269 = vxor.u32 %v1256, 2147483648
        %v1270 = vxor.u32 %v1008, 2147483648
        %v1271 = vxor.u32 %v1260, 2147483648
        %v1272 = vxor.u32 %v1012, 2147483648
        %v1273 = vxor.u32 %v1264, 2147483648
        %v1274 = vmul.f32 %v1266, 1.442695
        %v1275 = vpow.pop %v1274
        %v1276 = vmul.f32 %v1267, 1.442695
        %v1277 = vpow.pop %v1276
        %v1278 = vmul.f32 %v1268, 1.442695
        %v1279 = vpow.pop %v1278
        %v1280 = vmul.f32 %v1269, 1.442695
        %v1281 = vpow.pop %v1280
        %v1282 = vmul.f32 %v1270, 1.442695
        %v1283 = vpow.pop %v1282
        %v1284 = vmul.f32 %v1271, 1.442695
        %v1285 = vpow.pop %v1284
        %v1286 = vmul.f32 %v1272, 1.442695
        %v1287 = vpow.pop %v1286
        %v1288 = vmul.f32 %v1273, 1.442695
        %v1289 = vpow.pop %v1288
        %v1290 = vadd.f32 %v1275, 1.0
        %v1291 = vadd.f32 %v1277, 1.0
        %v1292 = vadd.f32 %v1279, 1.0
        %v1293 = vadd.f32 %v1281, 1.0
        %v1294 = vadd.f32 %v1283, 1.0
        %v1295 = vadd.f32 %v1285, 1.0
        %v1296 = vadd.f32 %v1287, 1.0
        %v1297 = vadd.f32 %v1289, 1.0
        %v1298 = vrcp.pop %v1290
        %v1299 = vmul.f32 %v1290, %v1298
        %v1300 = vsub.f32 1.0, %v1299
        %v1301 = vmul.f32 %v1298, %v1300
        %v1302 = vadd.f32 %v1298, %v1301
        %vm1303 = vweird.f32 %v1290
        %vm1304 = vweird.f32 %v1298
        %vm1305 = vmor %vm1303, %vm1304
        %v1306 = vsel %vm1305, %v1298, %v1302
        %v1307 = vand.u32 2147483647, %v1290
        %vm1308 = vcmp.eq.f32.partialorder %v1307, 8.507059e+37
        %v1309 = vand.u32 %v1290, 2147483648
        %v1310 = vor.u32 1.1754944e-38, %v1309
        %v1311 = vsel %vm1308, %v1310, %v1306
        %v1312 = vmul.f32 1.0, %v1311
        %v1313 = vrcp.pop %v1291
        %v1314 = vmul.f32 %v1291, %v1313
        %v1315 = vsub.f32 1.0, %v1314
        %v1316 = vmul.f32 %v1313, %v1315
        %v1317 = vadd.f32 %v1313, %v1316
        %vm1318 = vweird.f32 %v1291
        %vm1319 = vweird.f32 %v1313
        %vm1320 = vmor %vm1318, %vm1319
        %v1321 = vsel %vm1320, %v1313, %v1317
        %v1322 = vand.u32 2147483647, %v1291
        %vm1323 = vcmp.eq.f32.partialorder %v1322, 8.507059e+37
        %v1324 = vand.u32 %v1291, 2147483648
        %v1325 = vor.u32 1.1754944e-38, %v1324
        %v1326 = vsel %vm1323, %v1325, %v1321
        %v1327 = vmul.f32 1.0, %v1326
        %v1328 = vrcp.pop %v1292
        %v1329 = vmul.f32 %v1292, %v1328
        %v1330 = vsub.f32 1.0, %v1329
        %v1331 = vmul.f32 %v1328, %v1330
        %v1332 = vadd.f32 %v1328, %v1331
        %vm1333 = vweird.f32 %v1292
        %vm1334 = vweird.f32 %v1328
        %vm1335 = vmor %vm1333, %vm1334
        %v1336 = vsel %vm1335, %v1328, %v1332
        %v1337 = vand.u32 2147483647, %v1292
        %vm1338 = vcmp.eq.f32.partialorder %v1337, 8.507059e+37
        %v1339 = vand.u32 %v1292, 2147483648
        %v1340 = vor.u32 1.1754944e-38, %v1339
        %v1341 = vsel %vm1338, %v1340, %v1336
        %v1342 = vmul.f32 1.0, %v1341
        %v1343 = vrcp.pop %v1293
        %v1344 = vmul.f32 %v1293, %v1343
        %v1345 = vsub.f32 1.0, %v1344
        %v1346 = vmul.f32 %v1343, %v1345
        %v1347 = vadd.f32 %v1343, %v1346
        %vm1348 = vweird.f32 %v1293
        %vm1349 = vweird.f32 %v1343
        %vm1350 = vmor %vm1348, %vm1349
        %v1351 = vsel %vm1350, %v1343, %v1347
        %v1352 = vand.u32 2147483647, %v1293
        %vm1353 = vcmp.eq.f32.partialorder %v1352, 8.507059e+37
        %v1354 = vand.u32 %v1293, 2147483648
        %v1355 = vor.u32 1.1754944e-38, %v1354
        %v1356 = vsel %vm1353, %v1355, %v1351
        %v1357 = vmul.f32 1.0, %v1356
        %v1358 = vrcp.pop %v1294
        %v1359 = vmul.f32 %v1294, %v1358
        %v1360 = vsub.f32 1.0, %v1359
        %v1361 = vmul.f32 %v1358, %v1360
        %v1362 = vadd.f32 %v1358, %v1361
        %vm1363 = vweird.f32 %v1294
        %vm1364 = vweird.f32 %v1358
        %vm1365 = vmor %vm1363, %vm1364
        %v1366 = vsel %vm1365, %v1358, %v1362
        %v1367 = vand.u32 2147483647, %v1294
        %vm1368 = vcmp.eq.f32.partialorder %v1367, 8.507059e+37
        %v1369 = vand.u32 %v1294, 2147483648
        %v1370 = vor.u32 1.1754944e-38, %v1369
        %v1371 = vsel %vm1368, %v1370, %v1366
        %v1372 = vmul.f32 1.0, %v1371
        %v1373 = vrcp.pop %v1295
        %v1374 = vmul.f32 %v1295, %v1373
        %v1375 = vsub.f32 1.0, %v1374
        %v1376 = vmul.f32 %v1373, %v1375
        %v1377 = vadd.f32 %v1373, %v1376
        %vm1378 = vweird.f32 %v1295
        %vm1379 = vweird.f32 %v1373
        %vm1380 = vmor %vm1378, %vm1379
        %v1381 = vsel %vm1380, %v1373, %v1377
        %v1382 = vand.u32 2147483647, %v1295
        %vm1383 = vcmp.eq.f32.partialorder %v1382, 8.507059e+37
        %v1384 = vand.u32 %v1295, 2147483648
        %v1385 = vor.u32 1.1754944e-38, %v1384
        %v1386 = vsel %vm1383, %v1385, %v1381
        %v1387 = vmul.f32 1.0, %v1386
        %v1388 = vrcp.pop %v1296
        %v1389 = vmul.f32 %v1296, %v1388
        %v1390 = vsub.f32 1.0, %v1389
        %v1391 = vmul.f32 %v1388, %v1390
        %v1392 = vadd.f32 %v1388, %v1391
        %vm1393 = vweird.f32 %v1296
        %vm1394 = vweird.f32 %v1388
        %vm1395 = vmor %vm1393, %vm1394
        %v1396 = vsel %vm1395, %v1388, %v1392
        %v1397 = vand.u32 2147483647, %v1296
        %vm1398 = vcmp.eq.f32.partialorder %v1397, 8.507059e+37
        %v1399 = vand.u32 %v1296, 2147483648
        %v1400 = vor.u32 1.1754944e-38, %v1399
        %v1401 = vsel %vm1398, %v1400, %v1396
        %v1402 = vmul.f32 1.0, %v1401
        %v1403 = vrcp.pop %v1297
        %v1404 = vmul.f32 %v1297, %v1403
        %v1405 = vsub.f32 1.0, %v1404
        %v1406 = vmul.f32 %v1403, %v1405
        %v1407 = vadd.f32 %v1403, %v1406
        %vm1408 = vweird.f32 %v1297
        %vm1409 = vweird.f32 %v1403
        %vm1410 = vmor %vm1408, %vm1409
        %v1411 = vsel %vm1410, %v1403, %v1407
        %v1412 = vand.u32 2147483647, %v1297
        %vm1413 = vcmp.eq.f32.partialorder %v1412, 8.507059e+37
        %v1414 = vand.u32 %v1297, 2147483648
        %v1415 = vor.u32 1.1754944e-38, %v1414
        %v1416 = vsel %vm1413, %v1415, %v1411
        %v1417 = vmul.f32 1.0, %v1416
        %v1418 = vmul.f32 %v1000, %v1312
        %v1419 = vmul.f32 %v1252, %v1327
        %v1420 = vmul.f32 %v1004, %v1342
        %v1421 = vmul.f32 %v1256, %v1357
        %v1422 = vmul.f32 %v1008, %v1372
        %v1423 = vmul.f32 %v1260, %v1387
        %v1424 = vmul.f32 %v1012, %v1402
        %v1425 = vmul.f32 %v1264, %v1417
        %1427 = vset.pattern.permute.xlu0 0
        %1428 = vperm.xlu0 %1427, %v566
        %v1429 = vpop.permute.xlu0 %1428
        %1432 = vset.pattern.permute.xlu0 0
        %1433 = vperm.xlu0 %1432, %v567
        %v1434 = vpop.permute.xlu0 %1433
        %vm1436 = vcmask 261120
        %v1438 = vsel %vm1436, %v564, 0
        %v1441 = vsel %vm1436, %v565, 0
        %1443 = vmatpush.msra.mxu0 0.0
        %1444 = vmatpush.msra.mxu0 0.0
        %1445 = vmatpush.msra.mxu0 0.0
        %1446 = vmatpush.msra.mxu0 0.0
        %1447 = vmatpush.msra.mxu0 0.0
        %1448 = vmatpush.msra.mxu0 0.0
        %1449 = vmatpush.msra.mxu0 0.0
        %1450 = vmatpush.msra.mxu0 0.0
        %1451 = vmatpush.msra.mxu0 0.0
        %1452 = vmatpush.msra.mxu0 0.0
        %1453 = vmatpush.msra.mxu0 0.0
        %1454 = vmatpush.msra.mxu0 0.0
        %v1455 = vand.u32 %v1424, 4294901760
        %1456 = vmatpush.msra.mxu0 %v1455
        %v1457 = vand.u32 %v1422, 4294901760
        %1458 = vmatpush.msra.mxu0 %v1457
        %v1459 = vand.u32 %v1420, 4294901760
        %1460 = vmatpush.msra.mxu0 %v1459
        %v1461 = vand.u32 %v1418, 4294901760
        %1462 = vmatpush.msra.mxu0 %v1461
        %v1463 = vand.u32 %v1438, 4294901760
        %v1464 = vsub.f32 %v1438, %v1463
        %v1465 = vand.u32 %v1464, 4294901760
        %v1466 = vsub.f32 %v1464, %v1465
        %v1467 = vand.u32 %v1466, 4294901760
        %1468 = vmatmul.f32.gmra.mxu0 %v1467
        %v1469 = vpop.f32.mrf.mxu0
        %v1470 = vadd.f32 %v1429, %v1469
        %v1471 = vand.u32 %v1441, 4294901760
        %v1472 = vsub.f32 %v1441, %v1471
        %v1473 = vand.u32 %v1472, 4294901760
        %v1474 = vsub.f32 %v1472, %v1473
        %v1475 = vand.u32 %v1474, 4294901760
        %1476 = vmatmul.f32.gmra.mxu0 %v1475
        %v1477 = vpop.f32.mrf.mxu0
        %v1478 = vadd.f32 %v1434, %v1477
        %1479 = vdwg.mxu0
        %1480 = vmatpush.msra.mxu0 0.0
        %1481 = vmatpush.msra.mxu0 0.0
        %1482 = vmatpush.msra.mxu0 0.0
        %1483 = vmatpush.msra.mxu0 0.0
        %1484 = vmatpush.msra.mxu0 0.0
        %1485 = vmatpush.msra.mxu0 0.0
        %1486 = vmatpush.msra.mxu0 0.0
        %1487 = vmatpush.msra.mxu0 0.0
        %1488 = vmatpush.msra.mxu0 0.0
        %1489 = vmatpush.msra.mxu0 0.0
        %1490 = vmatpush.msra.mxu0 0.0
        %1491 = vmatpush.msra.mxu0 0.0
        %v1492 = vand.u32 %v1424, 4294901760
        %v1493 = vsub.f32 %v1424, %v1492
        %v1494 = vand.u32 %v1493, 4294901760
        %v1495 = vsub.f32 %v1493, %v1494
        %v1496 = vand.u32 %v1495, 4294901760
        %1497 = vmatpush.msra.mxu0 %v1496
        %v1498 = vand.u32 %v1422, 4294901760
        %v1499 = vsub.f32 %v1422, %v1498
        %v1500 = vand.u32 %v1499, 4294901760
        %v1501 = vsub.f32 %v1499, %v1500
        %v1502 = vand.u32 %v1501, 4294901760
        %1503 = vmatpush.msra.mxu0 %v1502
        %v1504 = vand.u32 %v1420, 4294901760
        %v1505 = vsub.f32 %v1420, %v1504
        %v1506 = vand.u32 %v1505, 4294901760
        %v1507 = vsub.f32 %v1505, %v1506
        %v1508 = vand.u32 %v1507, 4294901760
        %1509 = vmatpush.msra.mxu0 %v1508
        %v1510 = vand.u32 %v1418, 4294901760
        %v1511 = vsub.f32 %v1418, %v1510
        %v1512 = vand.u32 %v1511, 4294901760
        %v1513 = vsub.f32 %v1511, %v1512
        %v1514 = vand.u32 %v1513, 4294901760
        %1515 = vmatpush.msra.mxu0 %v1514
        %v1516 = vand.u32 %v1438, 4294901760
        %1517 = vmatmul.f32.gmra.mxu0 %v1516
        %v1518 = vpop.f32.mrf.mxu0
        %v1519 = vadd.f32 %v1470, %v1518
        %v1520 = vand.u32 %v1441, 4294901760
        %1521 = vmatmul.f32.gmra.mxu0 %v1520
        %v1522 = vpop.f32.mrf.mxu0
        %v1523 = vadd.f32 %v1478, %v1522
        %1524 = vdwg.mxu0
        %1525 = vmatpush.msra.mxu0 0.0
        %1526 = vmatpush.msra.mxu0 0.0
        %1527 = vmatpush.msra.mxu0 0.0
        %1528 = vmatpush.msra.mxu0 0.0
        %1529 = vmatpush.msra.mxu0 0.0
        %1530 = vmatpush.msra.mxu0 0.0
        %1531 = vmatpush.msra.mxu0 0.0
        %1532 = vmatpush.msra.mxu0 0.0
        %1533 = vmatpush.msra.mxu0 0.0
        %1534 = vmatpush.msra.mxu0 0.0
        %1535 = vmatpush.msra.mxu0 0.0
        %1536 = vmatpush.msra.mxu0 0.0
        %v1537 = vand.u32 %v1424, 4294901760
        %v1538 = vsub.f32 %v1424, %v1537
        %1539 = vmatpush.msra.mxu0 %v1538
        %v1540 = vand.u32 %v1422, 4294901760
        %v1541 = vsub.f32 %v1422, %v1540
        %1542 = vmatpush.msra.mxu0 %v1541
        %v1543 = vand.u32 %v1420, 4294901760
        %v1544 = vsub.f32 %v1420, %v1543
        %1545 = vmatpush.msra.mxu0 %v1544
        %v1546 = vand.u32 %v1418, 4294901760
        %v1547 = vsub.f32 %v1418, %v1546
        %1548 = vmatpush.msra.mxu0 %v1547
        %v1549 = vand.u32 %v1438, 4294901760
        %v1550 = vsub.f32 %v1438, %v1549
        %1551 = vmatmul.f32.gmra.mxu0 %v1550
        %v1552 = vpop.f32.mrf.mxu0
        %v1553 = vadd.f32 %v1519, %v1552
        %v1554 = vand.u32 %v1441, 4294901760
        %v1555 = vsub.f32 %v1441, %v1554
        %1556 = vmatmul.f32.gmra.mxu0 %v1555
        %v1557 = vpop.f32.mrf.mxu0
        %v1558 = vadd.f32 %v1523, %v1557
        %1559 = vdwg.mxu0
        %1560 = vmatpush.msra.mxu0 0.0
        %1561 = vmatpush.msra.mxu0 0.0
        %1562 = vmatpush.msra.mxu0 0.0
        %1563 = vmatpush.msra.mxu0 0.0
        %1564 = vmatpush.msra.mxu0 0.0
        %1565 = vmatpush.msra.mxu0 0.0
        %1566 = vmatpush.msra.mxu0 0.0
        %1567 = vmatpush.msra.mxu0 0.0
        %1568 = vmatpush.msra.mxu0 0.0
        %1569 = vmatpush.msra.mxu0 0.0
        %1570 = vmatpush.msra.mxu0 0.0
        %1571 = vmatpush.msra.mxu0 0.0
        %v1572 = vand.u32 %v1424, 4294901760
        %1573 = vmatpush.msra.mxu0 %v1572
        %v1574 = vand.u32 %v1422, 4294901760
        %1575 = vmatpush.msra.mxu0 %v1574
        %v1576 = vand.u32 %v1420, 4294901760
        %1577 = vmatpush.msra.mxu0 %v1576
        %v1578 = vand.u32 %v1418, 4294901760
        %1579 = vmatpush.msra.mxu0 %v1578
        %v1580 = vand.u32 %v1438, 4294901760
        %v1581 = vsub.f32 %v1438, %v1580
        %v1582 = vand.u32 %v1581, 4294901760
        %1583 = vmatmul.f32.gmra.mxu0 %v1582
        %v1584 = vpop.f32.mrf.mxu0
        %v1585 = vadd.f32 %v1553, %v1584
        %v1586 = vand.u32 %v1441, 4294901760
        %v1587 = vsub.f32 %v1441, %v1586
        %v1588 = vand.u32 %v1587, 4294901760
        %1589 = vmatmul.f32.gmra.mxu0 %v1588
        %v1590 = vpop.f32.mrf.mxu0
        %v1591 = vadd.f32 %v1558, %v1590
        %1592 = vdwg.mxu0
        %1593 = vmatpush.msra.mxu0 0.0
        %1594 = vmatpush.msra.mxu0 0.0
        %1595 = vmatpush.msra.mxu0 0.0
        %1596 = vmatpush.msra.mxu0 0.0
        %1597 = vmatpush.msra.mxu0 0.0
        %1598 = vmatpush.msra.mxu0 0.0
        %1599 = vmatpush.msra.mxu0 0.0
        %1600 = vmatpush.msra.mxu0 0.0
        %1601 = vmatpush.msra.mxu0 0.0
        %1602 = vmatpush.msra.mxu0 0.0
        %1603 = vmatpush.msra.mxu0 0.0
        %1604 = vmatpush.msra.mxu0 0.0
        %v1605 = vand.u32 %v1424, 4294901760
        %v1606 = vsub.f32 %v1424, %v1605
        %v1607 = vand.u32 %v1606, 4294901760
        %1608 = vmatpush.msra.mxu0 %v1607
        %v1609 = vand.u32 %v1422, 4294901760
        %v1610 = vsub.f32 %v1422, %v1609
        %v1611 = vand.u32 %v1610, 4294901760
        %1612 = vmatpush.msra.mxu0 %v1611
        %v1613 = vand.u32 %v1420, 4294901760
        %v1614 = vsub.f32 %v1420, %v1613
        %v1615 = vand.u32 %v1614, 4294901760
        %1616 = vmatpush.msra.mxu0 %v1615
        %v1617 = vand.u32 %v1418, 4294901760
        %v1618 = vsub.f32 %v1418, %v1617
        %v1619 = vand.u32 %v1618, 4294901760
        %1620 = vmatpush.msra.mxu0 %v1619
        %v1621 = vand.u32 %v1438, 4294901760
        %1622 = vmatmul.f32.gmra.mxu0 %v1621
        %v1623 = vpop.f32.mrf.mxu0
        %v1624 = vadd.f32 %v1585, %v1623
        %v1625 = vand.u32 %v1441, 4294901760
        %1626 = vmatmul.f32.gmra.mxu0 %v1625
        %v1627 = vpop.f32.mrf.mxu0
        %v1628 = vadd.f32 %v1591, %v1627
        %1629 = vdwg.mxu0
        %1630 = vmatpush.msra.mxu0 0.0
        %1631 = vmatpush.msra.mxu0 0.0
        %1632 = vmatpush.msra.mxu0 0.0
        %1633 = vmatpush.msra.mxu0 0.0
        %1634 = vmatpush.msra.mxu0 0.0
        %1635 = vmatpush.msra.mxu0 0.0
        %1636 = vmatpush.msra.mxu0 0.0
        %1637 = vmatpush.msra.mxu0 0.0
        %1638 = vmatpush.msra.mxu0 0.0
        %1639 = vmatpush.msra.mxu0 0.0
        %1640 = vmatpush.msra.mxu0 0.0
        %1641 = vmatpush.msra.mxu0 0.0
        %v1642 = vand.u32 %v1424, 4294901760
        %1643 = vmatpush.msra.mxu0 %v1642
        %v1644 = vand.u32 %v1422, 4294901760
        %1645 = vmatpush.msra.mxu0 %v1644
        %v1646 = vand.u32 %v1420, 4294901760
        %1647 = vmatpush.msra.mxu0 %v1646
        %v1648 = vand.u32 %v1418, 4294901760
        %1649 = vmatpush.msra.mxu0 %v1648
        %v1650 = vand.u32 %v1438, 4294901760
        %1651 = vmatmul.f32.gmra.mxu0 %v1650
        %v1652 = vpop.f32.mrf.mxu0
        %v1653 = vadd.f32 %v1624, %v1652
        %v1654 = vand.u32 %v1441, 4294901760
        %1655 = vmatmul.f32.gmra.mxu0 %v1654
        %v1656 = vpop.f32.mrf.mxu0
        %v1657 = vadd.f32 %v1628, %v1656
        %1658 = vdwg.mxu0
        %1659 = vmatpush.msra.mxu0 0.0
        %1660 = vmatpush.msra.mxu0 0.0
        %1661 = vmatpush.msra.mxu0 0.0
        %1662 = vmatpush.msra.mxu0 0.0
        %1663 = vmatpush.msra.mxu0 0.0
        %1664 = vmatpush.msra.mxu0 0.0
        %1665 = vmatpush.msra.mxu0 0.0
        %1666 = vmatpush.msra.mxu0 0.0
        %1667 = vmatpush.msra.mxu0 0.0
        %1668 = vmatpush.msra.mxu0 0.0
        %1669 = vmatpush.msra.mxu0 0.0
        %1670 = vmatpush.msra.mxu0 0.0
        %v1671 = vand.u32 %v1425, 4294901760
        %1672 = vmatpush.msra.mxu0 %v1671
        %v1673 = vand.u32 %v1423, 4294901760
        %1674 = vmatpush.msra.mxu0 %v1673
        %v1675 = vand.u32 %v1421, 4294901760
        %1676 = vmatpush.msra.mxu0 %v1675
        %v1677 = vand.u32 %v1419, 4294901760
        %1678 = vmatpush.msra.mxu0 %v1677
        %v1679 = vand.u32 %v1438, 4294901760
        %v1680 = vsub.f32 %v1438, %v1679
        %v1681 = vand.u32 %v1680, 4294901760
        %v1682 = vsub.f32 %v1680, %v1681
        %v1683 = vand.u32 %v1682, 4294901760
        %1684 = vmatmul.f32.gmra.mxu0 %v1683
        %v1685 = vpop.f32.mrf.mxu0
        %v1686 = vadd.f32 %v1429, %v1685
        %v1687 = vand.u32 %v1441, 4294901760
        %v1688 = vsub.f32 %v1441, %v1687
        %v1689 = vand.u32 %v1688, 4294901760
        %v1690 = vsub.f32 %v1688, %v1689
        %v1691 = vand.u32 %v1690, 4294901760
        %1692 = vmatmul.f32.gmra.mxu0 %v1691
        %v1693 = vpop.f32.mrf.mxu0
        %v1694 = vadd.f32 %v1434, %v1693
        %1695 = vdwg.mxu0
        %1696 = vmatpush.msra.mxu0 0.0
        %1697 = vmatpush.msra.mxu0 0.0
        %1698 = vmatpush.msra.mxu0 0.0
        %1699 = vmatpush.msra.mxu0 0.0
        %1700 = vmatpush.msra.mxu0 0.0
        %1701 = vmatpush.msra.mxu0 0.0
        %1702 = vmatpush.msra.mxu0 0.0
        %1703 = vmatpush.msra.mxu0 0.0
        %1704 = vmatpush.msra.mxu0 0.0
        %1705 = vmatpush.msra.mxu0 0.0
        %1706 = vmatpush.msra.mxu0 0.0
        %1707 = vmatpush.msra.mxu0 0.0
        %v1708 = vand.u32 %v1425, 4294901760
        %v1709 = vsub.f32 %v1425, %v1708
        %v1710 = vand.u32 %v1709, 4294901760
        %v1711 = vsub.f32 %v1709, %v1710
        %v1712 = vand.u32 %v1711, 4294901760
        %1713 = vmatpush.msra.mxu0 %v1712
        %v1714 = vand.u32 %v1423, 4294901760
        %v1715 = vsub.f32 %v1423, %v1714
        %v1716 = vand.u32 %v1715, 4294901760
        %v1717 = vsub.f32 %v1715, %v1716
        %v1718 = vand.u32 %v1717, 4294901760
        %1719 = vmatpush.msra.mxu0 %v1718
        %v1720 = vand.u32 %v1421, 4294901760
        %v1721 = vsub.f32 %v1421, %v1720
        %v1722 = vand.u32 %v1721, 4294901760
        %v1723 = vsub.f32 %v1721, %v1722
        %v1724 = vand.u32 %v1723, 4294901760
        %1725 = vmatpush.msra.mxu0 %v1724
        %v1726 = vand.u32 %v1419, 4294901760
        %v1727 = vsub.f32 %v1419, %v1726
        %v1728 = vand.u32 %v1727, 4294901760
        %v1729 = vsub.f32 %v1727, %v1728
        %v1730 = vand.u32 %v1729, 4294901760
        %1731 = vmatpush.msra.mxu0 %v1730
        %v1732 = vand.u32 %v1438, 4294901760
        %1733 = vmatmul.f32.gmra.mxu0 %v1732
        %v1734 = vpop.f32.mrf.mxu0
        %v1735 = vadd.f32 %v1686, %v1734
        %v1736 = vand.u32 %v1441, 4294901760
        %1737 = vmatmul.f32.gmra.mxu0 %v1736
        %v1738 = vpop.f32.mrf.mxu0
        %v1739 = vadd.f32 %v1694, %v1738
        %1740 = vdwg.mxu0
        %1741 = vmatpush.msra.mxu0 0.0
        %1742 = vmatpush.msra.mxu0 0.0
        %1743 = vmatpush.msra.mxu0 0.0
        %1744 = vmatpush.msra.mxu0 0.0
        %1745 = vmatpush.msra.mxu0 0.0
        %1746 = vmatpush.msra.mxu0 0.0
        %1747 = vmatpush.msra.mxu0 0.0
        %1748 = vmatpush.msra.mxu0 0.0
        %1749 = vmatpush.msra.mxu0 0.0
        %1750 = vmatpush.msra.mxu0 0.0
        %1751 = vmatpush.msra.mxu0 0.0
        %1752 = vmatpush.msra.mxu0 0.0
        %v1753 = vand.u32 %v1425, 4294901760
        %v1754 = vsub.f32 %v1425, %v1753
        %1755 = vmatpush.msra.mxu0 %v1754
        %v1756 = vand.u32 %v1423, 4294901760
        %v1757 = vsub.f32 %v1423, %v1756
        %1758 = vmatpush.msra.mxu0 %v1757
        %v1759 = vand.u32 %v1421, 4294901760
        %v1760 = vsub.f32 %v1421, %v1759
        %1761 = vmatpush.msra.mxu0 %v1760
        %v1762 = vand.u32 %v1419, 4294901760
        %v1763 = vsub.f32 %v1419, %v1762
        %1764 = vmatpush.msra.mxu0 %v1763
        %v1765 = vand.u32 %v1438, 4294901760
        %v1766 = vsub.f32 %v1438, %v1765
        %1767 = vmatmul.f32.gmra.mxu0 %v1766
        %v1768 = vpop.f32.mrf.mxu0
        %v1769 = vadd.f32 %v1735, %v1768
        %v1770 = vand.u32 %v1441, 4294901760
        %v1771 = vsub.f32 %v1441, %v1770
        %1772 = vmatmul.f32.gmra.mxu0 %v1771
        %v1773 = vpop.f32.mrf.mxu0
        %v1774 = vadd.f32 %v1739, %v1773
        %1775 = vdwg.mxu0
        %1776 = vmatpush.msra.mxu0 0.0
        %1777 = vmatpush.msra.mxu0 0.0
        %1778 = vmatpush.msra.mxu0 0.0
        %1779 = vmatpush.msra.mxu0 0.0
        %1780 = vmatpush.msra.mxu0 0.0
        %1781 = vmatpush.msra.mxu0 0.0
        %1782 = vmatpush.msra.mxu0 0.0
        %1783 = vmatpush.msra.mxu0 0.0
        %1784 = vmatpush.msra.mxu0 0.0
        %1785 = vmatpush.msra.mxu0 0.0
        %1786 = vmatpush.msra.mxu0 0.0
        %1787 = vmatpush.msra.mxu0 0.0
        %v1788 = vand.u32 %v1425, 4294901760
        %1789 = vmatpush.msra.mxu0 %v1788
        %v1790 = vand.u32 %v1423, 4294901760
        %1791 = vmatpush.msra.mxu0 %v1790
        %v1792 = vand.u32 %v1421, 4294901760
        %1793 = vmatpush.msra.mxu0 %v1792
        %v1794 = vand.u32 %v1419, 4294901760
        %1795 = vmatpush.msra.mxu0 %v1794
        %v1796 = vand.u32 %v1438, 4294901760
        %v1797 = vsub.f32 %v1438, %v1796
        %v1798 = vand.u32 %v1797, 4294901760
        %1799 = vmatmul.f32.gmra.mxu0 %v1798
        %v1800 = vpop.f32.mrf.mxu0
        %v1801 = vadd.f32 %v1769, %v1800
        %v1802 = vand.u32 %v1441, 4294901760
        %v1803 = vsub.f32 %v1441, %v1802
        %v1804 = vand.u32 %v1803, 4294901760
        %1805 = vmatmul.f32.gmra.mxu0 %v1804
        %v1806 = vpop.f32.mrf.mxu0
        %v1807 = vadd.f32 %v1774, %v1806
        %1808 = vdwg.mxu0
        %1809 = vmatpush.msra.mxu0 0.0
        %1810 = vmatpush.msra.mxu0 0.0
        %1811 = vmatpush.msra.mxu0 0.0
        %1812 = vmatpush.msra.mxu0 0.0
        %1813 = vmatpush.msra.mxu0 0.0
        %1814 = vmatpush.msra.mxu0 0.0
        %1815 = vmatpush.msra.mxu0 0.0
        %1816 = vmatpush.msra.mxu0 0.0
        %1817 = vmatpush.msra.mxu0 0.0
        %1818 = vmatpush.msra.mxu0 0.0
        %1819 = vmatpush.msra.mxu0 0.0
        %1820 = vmatpush.msra.mxu0 0.0
        %v1821 = vand.u32 %v1425, 4294901760
        %v1822 = vsub.f32 %v1425, %v1821
        %v1823 = vand.u32 %v1822, 4294901760
        %1824 = vmatpush.msra.mxu0 %v1823
        %v1825 = vand.u32 %v1423, 4294901760
        %v1826 = vsub.f32 %v1423, %v1825
        %v1827 = vand.u32 %v1826, 4294901760
        %1828 = vmatpush.msra.mxu0 %v1827
        %v1829 = vand.u32 %v1421, 4294901760
        %v1830 = vsub.f32 %v1421, %v1829
        %v1831 = vand.u32 %v1830, 4294901760
        %1832 = vmatpush.msra.mxu0 %v1831
        %v1833 = vand.u32 %v1419, 4294901760
        %v1834 = vsub.f32 %v1419, %v1833
        %v1835 = vand.u32 %v1834, 4294901760
        %1836 = vmatpush.msra.mxu0 %v1835
        %v1837 = vand.u32 %v1438, 4294901760
        %1838 = vmatmul.f32.gmra.mxu0 %v1837
        %v1839 = vpop.f32.mrf.mxu0
        %v1840 = vadd.f32 %v1801, %v1839
        %v1841 = vand.u32 %v1441, 4294901760
        %1842 = vmatmul.f32.gmra.mxu0 %v1841
        %v1843 = vpop.f32.mrf.mxu0
        %v1844 = vadd.f32 %v1807, %v1843
        %1845 = vdwg.mxu0
        %1846 = vmatpush.msra.mxu0 0.0
        %1847 = vmatpush.msra.mxu0 0.0
        %1848 = vmatpush.msra.mxu0 0.0
        %1849 = vmatpush.msra.mxu0 0.0
        %1850 = vmatpush.msra.mxu0 0.0
        %1851 = vmatpush.msra.mxu0 0.0
        %1852 = vmatpush.msra.mxu0 0.0
        %1853 = vmatpush.msra.mxu0 0.0
        %1854 = vmatpush.msra.mxu0 0.0
        %1855 = vmatpush.msra.mxu0 0.0
        %1856 = vmatpush.msra.mxu0 0.0
        %1857 = vmatpush.msra.mxu0 0.0
        %v1858 = vand.u32 %v1425, 4294901760
        %1859 = vmatpush.msra.mxu0 %v1858
        %v1860 = vand.u32 %v1423, 4294901760
        %1861 = vmatpush.msra.mxu0 %v1860
        %v1862 = vand.u32 %v1421, 4294901760
        %1863 = vmatpush.msra.mxu0 %v1862
        %v1864 = vand.u32 %v1419, 4294901760
        %1865 = vmatpush.msra.mxu0 %v1864
        %v1866 = vand.u32 %v1438, 4294901760
        %1867 = vmatmul.f32.gmra.mxu0 %v1866
        %v1868 = vpop.f32.mrf.mxu0
        %v1869 = vadd.f32 %v1840, %v1868
        %v1870 = vand.u32 %v1441, 4294901760
        %1871 = vmatmul.f32.gmra.mxu0 %v1870
        %v1872 = vpop.f32.mrf.mxu0
        %v1873 = vadd.f32 %v1844, %v1872
        %1874 = vdwg.mxu0
        %v1876 = vsel %vm749, %v584, 0
        %v1879 = vsel %vm749, %v585, 0
        %v1882 = vsel %vm749, %v586, 0
        %v1885 = vsel %vm749, %v587, 0
        %1887 = vmatpush.msra.mxu0 0.0
        %1888 = vmatpush.msra.mxu0 0.0
        %1889 = vmatpush.msra.mxu0 0.0
        %1890 = vmatpush.msra.mxu0 0.0
        %1891 = vmatpush.msra.mxu0 0.0
        %1892 = vmatpush.msra.mxu0 0.0
        %1893 = vmatpush.msra.mxu0 0.0
        %1894 = vmatpush.msra.mxu0 0.0
        %1895 = vmatpush.msra.mxu0 0.0
        %1896 = vmatpush.msra.mxu0 0.0
        %1897 = vmatpush.msra.mxu0 0.0
        %1898 = vmatpush.msra.mxu0 0.0
        %1899 = vmatpush.msra.mxu0 0.0
        %1900 = vmatpush.msra.mxu0 0.0
        %v1901 = vand.u32 %v727, 4294901760
        %1902 = vmatpush.msra.mxu0 %v1901
        %v1903 = vand.u32 %v725, 4294901760
        %1904 = vmatpush.msra.mxu0 %v1903
        %v1905 = vand.u32 %v1876, 4294901760
        %v1906 = vsub.f32 %v1876, %v1905
        %v1907 = vand.u32 %v1906, 4294901760
        %v1908 = vsub.f32 %v1906, %v1907
        %v1909 = vand.u32 %v1908, 4294901760
        %1910 = vmatmul.f32.gmra.mxu0 %v1909
        %v1911 = vpop.f32.mrf.mxu0
        %v1912 = vadd.f32 0.0, %v1911
        %v1913 = vand.u32 %v1879, 4294901760
        %v1914 = vsub.f32 %v1879, %v1913
        %v1915 = vand.u32 %v1914, 4294901760
        %v1916 = vsub.f32 %v1914, %v1915
        %v1917 = vand.u32 %v1916, 4294901760
        %1918 = vmatmul.f32.gmra.mxu0 %v1917
        %v1919 = vpop.f32.mrf.mxu0
        %v1920 = vadd.f32 0.0, %v1919
        %v1921 = vand.u32 %v1882, 4294901760
        %v1922 = vsub.f32 %v1882, %v1921
        %v1923 = vand.u32 %v1922, 4294901760
        %v1924 = vsub.f32 %v1922, %v1923
        %v1925 = vand.u32 %v1924, 4294901760
        %1926 = vmatmul.f32.gmra.mxu0 %v1925
        %v1927 = vpop.f32.mrf.mxu0
        %v1928 = vadd.f32 0.0, %v1927
        %v1929 = vand.u32 %v1885, 4294901760
        %v1930 = vsub.f32 %v1885, %v1929
        %v1931 = vand.u32 %v1930, 4294901760
        %v1932 = vsub.f32 %v1930, %v1931
        %v1933 = vand.u32 %v1932, 4294901760
        %1934 = vmatmul.f32.gmra.mxu0 %v1933
        %v1935 = vpop.f32.mrf.mxu0
        %v1936 = vadd.f32 0.0, %v1935
        %1937 = vdwg.mxu0
        %1938 = vmatpush.msra.mxu0 0.0
        %1939 = vmatpush.msra.mxu0 0.0
        %1940 = vmatpush.msra.mxu0 0.0
        %1941 = vmatpush.msra.mxu0 0.0
        %1942 = vmatpush.msra.mxu0 0.0
        %1943 = vmatpush.msra.mxu0 0.0
        %1944 = vmatpush.msra.mxu0 0.0
        %1945 = vmatpush.msra.mxu0 0.0
        %1946 = vmatpush.msra.mxu0 0.0
        %1947 = vmatpush.msra.mxu0 0.0
        %1948 = vmatpush.msra.mxu0 0.0
        %1949 = vmatpush.msra.mxu0 0.0
        %1950 = vmatpush.msra.mxu0 0.0
        %1951 = vmatpush.msra.mxu0 0.0
        %v1952 = vand.u32 %v727, 4294901760
        %v1953 = vsub.f32 %v727, %v1952
        %v1954 = vand.u32 %v1953, 4294901760
        %v1955 = vsub.f32 %v1953, %v1954
        %v1956 = vand.u32 %v1955, 4294901760
        %1957 = vmatpush.msra.mxu0 %v1956
        %v1958 = vand.u32 %v725, 4294901760
        %v1959 = vsub.f32 %v725, %v1958
        %v1960 = vand.u32 %v1959, 4294901760
        %v1961 = vsub.f32 %v1959, %v1960
        %v1962 = vand.u32 %v1961, 4294901760
        %1963 = vmatpush.msra.mxu0 %v1962
        %v1964 = vand.u32 %v1876, 4294901760
        %1965 = vmatmul.f32.gmra.mxu0 %v1964
        %v1966 = vpop.f32.mrf.mxu0
        %v1967 = vadd.f32 %v1912, %v1966
        %v1968 = vand.u32 %v1879, 4294901760
        %1969 = vmatmul.f32.gmra.mxu0 %v1968
        %v1970 = vpop.f32.mrf.mxu0
        %v1971 = vadd.f32 %v1920, %v1970
        %v1972 = vand.u32 %v1882, 4294901760
        %1973 = vmatmul.f32.gmra.mxu0 %v1972
        %v1974 = vpop.f32.mrf.mxu0
        %v1975 = vadd.f32 %v1928, %v1974
        %v1976 = vand.u32 %v1885, 4294901760
        %1977 = vmatmul.f32.gmra.mxu0 %v1976
        %v1978 = vpop.f32.mrf.mxu0
        %v1979 = vadd.f32 %v1936, %v1978
        %1980 = vdwg.mxu0
        %1981 = vmatpush.msra.mxu0 0.0
        %1982 = vmatpush.msra.mxu0 0.0
        %1983 = vmatpush.msra.mxu0 0.0
        %1984 = vmatpush.msra.mxu0 0.0
        %1985 = vmatpush.msra.mxu0 0.0
        %1986 = vmatpush.msra.mxu0 0.0
        %1987 = vmatpush.msra.mxu0 0.0
        %1988 = vmatpush.msra.mxu0 0.0
        %1989 = vmatpush.msra.mxu0 0.0
        %1990 = vmatpush.msra.mxu0 0.0
        %1991 = vmatpush.msra.mxu0 0.0
        %1992 = vmatpush.msra.mxu0 0.0
        %1993 = vmatpush.msra.mxu0 0.0
        %1994 = vmatpush.msra.mxu0 0.0
        %v1995 = vand.u32 %v727, 4294901760
        %v1996 = vsub.f32 %v727, %v1995
        %1997 = vmatpush.msra.mxu0 %v1996
        %v1998 = vand.u32 %v725, 4294901760
        %v1999 = vsub.f32 %v725, %v1998
        %2000 = vmatpush.msra.mxu0 %v1999
        %v2001 = vand.u32 %v1876, 4294901760
        %v2002 = vsub.f32 %v1876, %v2001
        %2003 = vmatmul.f32.gmra.mxu0 %v2002
        %v2004 = vpop.f32.mrf.mxu0
        %v2005 = vadd.f32 %v1967, %v2004
        %v2006 = vand.u32 %v1879, 4294901760
        %v2007 = vsub.f32 %v1879, %v2006
        %2008 = vmatmul.f32.gmra.mxu0 %v2007
        %v2009 = vpop.f32.mrf.mxu0
        %v2010 = vadd.f32 %v1971, %v2009
        %v2011 = vand.u32 %v1882, 4294901760
        %v2012 = vsub.f32 %v1882, %v2011
        %2013 = vmatmul.f32.gmra.mxu0 %v2012
        %v2014 = vpop.f32.mrf.mxu0
        %v2015 = vadd.f32 %v1975, %v2014
        %v2016 = vand.u32 %v1885, 4294901760
        %v2017 = vsub.f32 %v1885, %v2016
        %2018 = vmatmul.f32.gmra.mxu0 %v2017
        %v2019 = vpop.f32.mrf.mxu0
        %v2020 = vadd.f32 %v1979, %v2019
        %2021 = vdwg.mxu0
        %2022 = vmatpush.msra.mxu0 0.0
        %2023 = vmatpush.msra.mxu0 0.0
        %2024 = vmatpush.msra.mxu0 0.0
        %2025 = vmatpush.msra.mxu0 0.0
        %2026 = vmatpush.msra.mxu0 0.0
        %2027 = vmatpush.msra.mxu0 0.0
        %2028 = vmatpush.msra.mxu0 0.0
        %2029 = vmatpush.msra.mxu0 0.0
        %2030 = vmatpush.msra.mxu0 0.0
        %2031 = vmatpush.msra.mxu0 0.0
        %2032 = vmatpush.msra.mxu0 0.0
        %2033 = vmatpush.msra.mxu0 0.0
        %2034 = vmatpush.msra.mxu0 0.0
        %2035 = vmatpush.msra.mxu0 0.0
        %v2036 = vand.u32 %v727, 4294901760
        %2037 = vmatpush.msra.mxu0 %v2036
        %v2038 = vand.u32 %v725, 4294901760
        %2039 = vmatpush.msra.mxu0 %v2038
        %v2040 = vand.u32 %v1876, 4294901760
        %v2041 = vsub.f32 %v1876, %v2040
        %v2042 = vand.u32 %v2041, 4294901760
        %2043 = vmatmul.f32.gmra.mxu0 %v2042
        %v2044 = vpop.f32.mrf.mxu0
        %v2045 = vadd.f32 %v2005, %v2044
        %v2046 = vand.u32 %v1879, 4294901760
        %v2047 = vsub.f32 %v1879, %v2046
        %v2048 = vand.u32 %v2047, 4294901760
        %2049 = vmatmul.f32.gmra.mxu0 %v2048
        %v2050 = vpop.f32.mrf.mxu0
        %v2051 = vadd.f32 %v2010, %v2050
        %v2052 = vand.u32 %v1882, 4294901760
        %v2053 = vsub.f32 %v1882, %v2052
        %v2054 = vand.u32 %v2053, 4294901760
        %2055 = vmatmul.f32.gmra.mxu0 %v2054
        %v2056 = vpop.f32.mrf.mxu0
        %v2057 = vadd.f32 %v2015, %v2056
        %v2058 = vand.u32 %v1885, 4294901760
        %v2059 = vsub.f32 %v1885, %v2058
        %v2060 = vand.u32 %v2059, 4294901760
        %2061 = vmatmul.f32.gmra.mxu0 %v2060
        %v2062 = vpop.f32.mrf.mxu0
        %v2063 = vadd.f32 %v2020, %v2062
        %2064 = vdwg.mxu0
        %2065 = vmatpush.msra.mxu0 0.0
        %2066 = vmatpush.msra.mxu0 0.0
        %2067 = vmatpush.msra.mxu0 0.0
        %2068 = vmatpush.msra.mxu0 0.0
        %2069 = vmatpush.msra.mxu0 0.0
        %2070 = vmatpush.msra.mxu0 0.0
        %2071 = vmatpush.msra.mxu0 0.0
        %2072 = vmatpush.msra.mxu0 0.0
        %2073 = vmatpush.msra.mxu0 0.0
        %2074 = vmatpush.msra.mxu0 0.0
        %2075 = vmatpush.msra.mxu0 0.0
        %2076 = vmatpush.msra.mxu0 0.0
        %2077 = vmatpush.msra.mxu0 0.0
        %2078 = vmatpush.msra.mxu0 0.0
        %v2079 = vand.u32 %v727, 4294901760
        %v2080 = vsub.f32 %v727, %v2079
        %v2081 = vand.u32 %v2080, 4294901760
        %2082 = vmatpush.msra.mxu0 %v2081
        %v2083 = vand.u32 %v725, 4294901760
        %v2084 = vsub.f32 %v725, %v2083
        %v2085 = vand.u32 %v2084, 4294901760
        %2086 = vmatpush.msra.mxu0 %v2085
        %v2087 = vand.u32 %v1876, 4294901760
        %2088 = vmatmul.f32.gmra.mxu0 %v2087
        %v2089 = vpop.f32.mrf.mxu0
        %v2090 = vadd.f32 %v2045, %v2089
        %v2091 = vand.u32 %v1879, 4294901760
        %2092 = vmatmul.f32.gmra.mxu0 %v2091
        %v2093 = vpop.f32.mrf.mxu0
        %v2094 = vadd.f32 %v2051, %v2093
        %v2095 = vand.u32 %v1882, 4294901760
        %2096 = vmatmul.f32.gmra.mxu0 %v2095
        %v2097 = vpop.f32.mrf.mxu0
        %v2098 = vadd.f32 %v2057, %v2097
        %v2099 = vand.u32 %v1885, 4294901760
        %2100 = vmatmul.f32.gmra.mxu0 %v2099
        %v2101 = vpop.f32.mrf.mxu0
        %v2102 = vadd.f32 %v2063, %v2101
        %2103 = vdwg.mxu0
        %2104 = vmatpush.msra.mxu0 0.0
        %2105 = vmatpush.msra.mxu0 0.0
        %2106 = vmatpush.msra.mxu0 0.0
        %2107 = vmatpush.msra.mxu0 0.0
        %2108 = vmatpush.msra.mxu0 0.0
        %2109 = vmatpush.msra.mxu0 0.0
        %2110 = vmatpush.msra.mxu0 0.0
        %2111 = vmatpush.msra.mxu0 0.0
        %2112 = vmatpush.msra.mxu0 0.0
        %2113 = vmatpush.msra.mxu0 0.0
        %2114 = vmatpush.msra.mxu0 0.0
        %2115 = vmatpush.msra.mxu0 0.0
        %2116 = vmatpush.msra.mxu0 0.0
        %2117 = vmatpush.msra.mxu0 0.0
        %v2118 = vand.u32 %v727, 4294901760
        %2119 = vmatpush.msra.mxu0 %v2118
        %v2120 = vand.u32 %v725, 4294901760
        %2121 = vmatpush.msra.mxu0 %v2120
        %v2122 = vand.u32 %v1876, 4294901760
        %2123 = vmatmul.f32.gmra.mxu0 %v2122
        %v2124 = vpop.f32.mrf.mxu0
        %v2125 = vadd.f32 %v2090, %v2124
        %v2126 = vand.u32 %v1879, 4294901760
        %2127 = vmatmul.f32.gmra.mxu0 %v2126
        %v2128 = vpop.f32.mrf.mxu0
        %v2129 = vadd.f32 %v2094, %v2128
        %v2130 = vand.u32 %v1882, 4294901760
        %2131 = vmatmul.f32.gmra.mxu0 %v2130
        %v2132 = vpop.f32.mrf.mxu0
        %v2133 = vadd.f32 %v2098, %v2132
        %v2134 = vand.u32 %v1885, 4294901760
        %2135 = vmatmul.f32.gmra.mxu0 %v2134
        %v2136 = vpop.f32.mrf.mxu0
        %v2137 = vadd.f32 %v2102, %v2136
        %2138 = vdwg.mxu0
        %2139 = vmatpush.msra.mxu0 0.0
        %2140 = vmatpush.msra.mxu0 0.0
        %2141 = vmatpush.msra.mxu0 0.0
        %2142 = vmatpush.msra.mxu0 0.0
        %2143 = vmatpush.msra.mxu0 0.0
        %2144 = vmatpush.msra.mxu0 0.0
        %2145 = vmatpush.msra.mxu0 0.0
        %2146 = vmatpush.msra.mxu0 0.0
        %2147 = vmatpush.msra.mxu0 0.0
        %2148 = vmatpush.msra.mxu0 0.0
        %2149 = vmatpush.msra.mxu0 0.0
        %2150 = vmatpush.msra.mxu0 0.0
        %2151 = vmatpush.msra.mxu0 0.0
        %2152 = vmatpush.msra.mxu0 0.0
        %v2153 = vand.u32 %v728, 4294901760
        %2154 = vmatpush.msra.mxu0 %v2153
        %v2155 = vand.u32 %v726, 4294901760
        %2156 = vmatpush.msra.mxu0 %v2155
        %v2157 = vand.u32 %v1876, 4294901760
        %v2158 = vsub.f32 %v1876, %v2157
        %v2159 = vand.u32 %v2158, 4294901760
        %v2160 = vsub.f32 %v2158, %v2159
        %v2161 = vand.u32 %v2160, 4294901760
        %2162 = vmatmul.f32.gmra.mxu0 %v2161
        %v2163 = vpop.f32.mrf.mxu0
        %v2164 = vadd.f32 0.0, %v2163
        %v2165 = vand.u32 %v1879, 4294901760
        %v2166 = vsub.f32 %v1879, %v2165
        %v2167 = vand.u32 %v2166, 4294901760
        %v2168 = vsub.f32 %v2166, %v2167
        %v2169 = vand.u32 %v2168, 4294901760
        %2170 = vmatmul.f32.gmra.mxu0 %v2169
        %v2171 = vpop.f32.mrf.mxu0
        %v2172 = vadd.f32 0.0, %v2171
        %v2173 = vand.u32 %v1882, 4294901760
        %v2174 = vsub.f32 %v1882, %v2173
        %v2175 = vand.u32 %v2174, 4294901760
        %v2176 = vsub.f32 %v2174, %v2175
        %v2177 = vand.u32 %v2176, 4294901760
        %2178 = vmatmul.f32.gmra.mxu0 %v2177
        %v2179 = vpop.f32.mrf.mxu0
        %v2180 = vadd.f32 0.0, %v2179
        %v2181 = vand.u32 %v1885, 4294901760
        %v2182 = vsub.f32 %v1885, %v2181
        %v2183 = vand.u32 %v2182, 4294901760
        %v2184 = vsub.f32 %v2182, %v2183
        %v2185 = vand.u32 %v2184, 4294901760
        %2186 = vmatmul.f32.gmra.mxu0 %v2185
        %v2187 = vpop.f32.mrf.mxu0
        %v2188 = vadd.f32 0.0, %v2187
        %2189 = vdwg.mxu0
        %2190 = vmatpush.msra.mxu0 0.0
        %2191 = vmatpush.msra.mxu0 0.0
        %2192 = vmatpush.msra.mxu0 0.0
        %2193 = vmatpush.msra.mxu0 0.0
        %2194 = vmatpush.msra.mxu0 0.0
        %2195 = vmatpush.msra.mxu0 0.0
        %2196 = vmatpush.msra.mxu0 0.0
        %2197 = vmatpush.msra.mxu0 0.0
        %2198 = vmatpush.msra.mxu0 0.0
        %2199 = vmatpush.msra.mxu0 0.0
        %2200 = vmatpush.msra.mxu0 0.0
        %2201 = vmatpush.msra.mxu0 0.0
        %2202 = vmatpush.msra.mxu0 0.0
        %2203 = vmatpush.msra.mxu0 0.0
        %v2204 = vand.u32 %v728, 4294901760
        %v2205 = vsub.f32 %v728, %v2204
        %v2206 = vand.u32 %v2205, 4294901760
        %v2207 = vsub.f32 %v2205, %v2206
        %v2208 = vand.u32 %v2207, 4294901760
        %2209 = vmatpush.msra.mxu0 %v2208
        %v2210 = vand.u32 %v726, 4294901760
        %v2211 = vsub.f32 %v726, %v2210
        %v2212 = vand.u32 %v2211, 4294901760
        %v2213 = vsub.f32 %v2211, %v2212
        %v2214 = vand.u32 %v2213, 4294901760
        %2215 = vmatpush.msra.mxu0 %v2214
        %v2216 = vand.u32 %v1876, 4294901760
        %2217 = vmatmul.f32.gmra.mxu0 %v2216
        %v2218 = vpop.f32.mrf.mxu0
        %v2219 = vadd.f32 %v2164, %v2218
        %v2220 = vand.u32 %v1879, 4294901760
        %2221 = vmatmul.f32.gmra.mxu0 %v2220
        %v2222 = vpop.f32.mrf.mxu0
        %v2223 = vadd.f32 %v2172, %v2222
        %v2224 = vand.u32 %v1882, 4294901760
        %2225 = vmatmul.f32.gmra.mxu0 %v2224
        %v2226 = vpop.f32.mrf.mxu0
        %v2227 = vadd.f32 %v2180, %v2226
        %v2228 = vand.u32 %v1885, 4294901760
        %2229 = vmatmul.f32.gmra.mxu0 %v2228
        %v2230 = vpop.f32.mrf.mxu0
        %v2231 = vadd.f32 %v2188, %v2230
        %2232 = vdwg.mxu0
        %2233 = vmatpush.msra.mxu0 0.0
        %2234 = vmatpush.msra.mxu0 0.0
        %2235 = vmatpush.msra.mxu0 0.0
        %2236 = vmatpush.msra.mxu0 0.0
        %2237 = vmatpush.msra.mxu0 0.0
        %2238 = vmatpush.msra.mxu0 0.0
        %2239 = vmatpush.msra.mxu0 0.0
        %2240 = vmatpush.msra.mxu0 0.0
        %2241 = vmatpush.msra.mxu0 0.0
        %2242 = vmatpush.msra.mxu0 0.0
        %2243 = vmatpush.msra.mxu0 0.0
        %2244 = vmatpush.msra.mxu0 0.0
        %2245 = vmatpush.msra.mxu0 0.0
        %2246 = vmatpush.msra.mxu0 0.0
        %v2247 = vand.u32 %v728, 4294901760
        %v2248 = vsub.f32 %v728, %v2247
        %2249 = vmatpush.msra.mxu0 %v2248
        %v2250 = vand.u32 %v726, 4294901760
        %v2251 = vsub.f32 %v726, %v2250
        %2252 = vmatpush.msra.mxu0 %v2251
        %v2253 = vand.u32 %v1876, 4294901760
        %v2254 = vsub.f32 %v1876, %v2253
        %2255 = vmatmul.f32.gmra.mxu0 %v2254
        %v2256 = vpop.f32.mrf.mxu0
        %v2257 = vadd.f32 %v2219, %v2256
        %v2258 = vand.u32 %v1879, 4294901760
        %v2259 = vsub.f32 %v1879, %v2258
        %2260 = vmatmul.f32.gmra.mxu0 %v2259
        %v2261 = vpop.f32.mrf.mxu0
        %v2262 = vadd.f32 %v2223, %v2261
        %v2263 = vand.u32 %v1882, 4294901760
        %v2264 = vsub.f32 %v1882, %v2263
        %2265 = vmatmul.f32.gmra.mxu0 %v2264
        %v2266 = vpop.f32.mrf.mxu0
        %v2267 = vadd.f32 %v2227, %v2266
        %v2268 = vand.u32 %v1885, 4294901760
        %v2269 = vsub.f32 %v1885, %v2268
        %2270 = vmatmul.f32.gmra.mxu0 %v2269
        %v2271 = vpop.f32.mrf.mxu0
        %v2272 = vadd.f32 %v2231, %v2271
        %2273 = vdwg.mxu0
        %2274 = vmatpush.msra.mxu0 0.0
        %2275 = vmatpush.msra.mxu0 0.0
        %2276 = vmatpush.msra.mxu0 0.0
        %2277 = vmatpush.msra.mxu0 0.0
        %2278 = vmatpush.msra.mxu0 0.0
        %2279 = vmatpush.msra.mxu0 0.0
        %2280 = vmatpush.msra.mxu0 0.0
        %2281 = vmatpush.msra.mxu0 0.0
        %2282 = vmatpush.msra.mxu0 0.0
        %2283 = vmatpush.msra.mxu0 0.0
        %2284 = vmatpush.msra.mxu0 0.0
        %2285 = vmatpush.msra.mxu0 0.0
        %2286 = vmatpush.msra.mxu0 0.0
        %2287 = vmatpush.msra.mxu0 0.0
        %v2288 = vand.u32 %v728, 4294901760
        %2289 = vmatpush.msra.mxu0 %v2288
        %v2290 = vand.u32 %v726, 4294901760
        %2291 = vmatpush.msra.mxu0 %v2290
        %v2292 = vand.u32 %v1876, 4294901760
        %v2293 = vsub.f32 %v1876, %v2292
        %v2294 = vand.u32 %v2293, 4294901760
        %2295 = vmatmul.f32.gmra.mxu0 %v2294
        %v2296 = vpop.f32.mrf.mxu0
        %v2297 = vadd.f32 %v2257, %v2296
        %v2298 = vand.u32 %v1879, 4294901760
        %v2299 = vsub.f32 %v1879, %v2298
        %v2300 = vand.u32 %v2299, 4294901760
        %2301 = vmatmul.f32.gmra.mxu0 %v2300
        %v2302 = vpop.f32.mrf.mxu0
        %v2303 = vadd.f32 %v2262, %v2302
        %v2304 = vand.u32 %v1882, 4294901760
        %v2305 = vsub.f32 %v1882, %v2304
        %v2306 = vand.u32 %v2305, 4294901760
        %2307 = vmatmul.f32.gmra.mxu0 %v2306
        %v2308 = vpop.f32.mrf.mxu0
        %v2309 = vadd.f32 %v2267, %v2308
        %v2310 = vand.u32 %v1885, 4294901760
        %v2311 = vsub.f32 %v1885, %v2310
        %v2312 = vand.u32 %v2311, 4294901760
        %2313 = vmatmul.f32.gmra.mxu0 %v2312
        %v2314 = vpop.f32.mrf.mxu0
        %v2315 = vadd.f32 %v2272, %v2314
        %2316 = vdwg.mxu0
        %2317 = vmatpush.msra.mxu0 0.0
        %2318 = vmatpush.msra.mxu0 0.0
        %2319 = vmatpush.msra.mxu0 0.0
        %2320 = vmatpush.msra.mxu0 0.0
        %2321 = vmatpush.msra.mxu0 0.0
        %2322 = vmatpush.msra.mxu0 0.0
        %2323 = vmatpush.msra.mxu0 0.0
        %2324 = vmatpush.msra.mxu0 0.0
        %2325 = vmatpush.msra.mxu0 0.0
        %2326 = vmatpush.msra.mxu0 0.0
        %2327 = vmatpush.msra.mxu0 0.0
        %2328 = vmatpush.msra.mxu0 0.0
        %2329 = vmatpush.msra.mxu0 0.0
        %2330 = vmatpush.msra.mxu0 0.0
        %v2331 = vand.u32 %v728, 4294901760
        %v2332 = vsub.f32 %v728, %v2331
        %v2333 = vand.u32 %v2332, 4294901760
        %2334 = vmatpush.msra.mxu0 %v2333
        %v2335 = vand.u32 %v726, 4294901760
        %v2336 = vsub.f32 %v726, %v2335
        %v2337 = vand.u32 %v2336, 4294901760
        %2338 = vmatpush.msra.mxu0 %v2337
        %v2339 = vand.u32 %v1876, 4294901760
        %2340 = vmatmul.f32.gmra.mxu0 %v2339
        %v2341 = vpop.f32.mrf.mxu0
        %v2342 = vadd.f32 %v2297, %v2341
        %v2343 = vand.u32 %v1879, 4294901760
        %2344 = vmatmul.f32.gmra.mxu0 %v2343
        %v2345 = vpop.f32.mrf.mxu0
        %v2346 = vadd.f32 %v2303, %v2345
        %v2347 = vand.u32 %v1882, 4294901760
        %2348 = vmatmul.f32.gmra.mxu0 %v2347
        %v2349 = vpop.f32.mrf.mxu0
        %v2350 = vadd.f32 %v2309, %v2349
        %v2351 = vand.u32 %v1885, 4294901760
        %2352 = vmatmul.f32.gmra.mxu0 %v2351
        %v2353 = vpop.f32.mrf.mxu0
        %v2354 = vadd.f32 %v2315, %v2353
        %2355 = vdwg.mxu0
        %2356 = vmatpush.msra.mxu0 0.0
        %2357 = vmatpush.msra.mxu0 0.0
        %2358 = vmatpush.msra.mxu0 0.0
        %2359 = vmatpush.msra.mxu0 0.0
        %2360 = vmatpush.msra.mxu0 0.0
        %2361 = vmatpush.msra.mxu0 0.0
        %2362 = vmatpush.msra.mxu0 0.0
        %2363 = vmatpush.msra.mxu0 0.0
        %2364 = vmatpush.msra.mxu0 0.0
        %2365 = vmatpush.msra.mxu0 0.0
        %2366 = vmatpush.msra.mxu0 0.0
        %2367 = vmatpush.msra.mxu0 0.0
        %2368 = vmatpush.msra.mxu0 0.0
        %2369 = vmatpush.msra.mxu0 0.0
        %v2370 = vand.u32 %v728, 4294901760
        %2371 = vmatpush.msra.mxu0 %v2370
        %v2372 = vand.u32 %v726, 4294901760
        %2373 = vmatpush.msra.mxu0 %v2372
        %v2374 = vand.u32 %v1876, 4294901760
        %2375 = vmatmul.f32.gmra.mxu0 %v2374
        %v2376 = vpop.f32.mrf.mxu0
        %v2377 = vadd.f32 %v2342, %v2376
        %v2378 = vand.u32 %v1879, 4294901760
        %2379 = vmatmul.f32.gmra.mxu0 %v2378
        %v2380 = vpop.f32.mrf.mxu0
        %v2381 = vadd.f32 %v2346, %v2380
        %v2382 = vand.u32 %v1882, 4294901760
        %2383 = vmatmul.f32.gmra.mxu0 %v2382
        %v2384 = vpop.f32.mrf.mxu0
        %v2385 = vadd.f32 %v2350, %v2384
        %v2386 = vand.u32 %v1885, 4294901760
        %2387 = vmatmul.f32.gmra.mxu0 %v2386
        %v2388 = vpop.f32.mrf.mxu0
        %v2389 = vadd.f32 %v2354, %v2388
        %2390 = vdwg.mxu0
        %v2392 = vsel %vm749, %v580, 0
        %v2395 = vsel %vm749, %v581, 0
        %v2398 = vsel %vm749, %v582, 0
        %v2401 = vsel %vm749, %v583, 0
        %2403 = vmatpush.msra.mxu0 0.0
        %2404 = vmatpush.msra.mxu0 0.0
        %2405 = vmatpush.msra.mxu0 0.0
        %2406 = vmatpush.msra.mxu0 0.0
        %2407 = vmatpush.msra.mxu0 0.0
        %2408 = vmatpush.msra.mxu0 0.0
        %2409 = vmatpush.msra.mxu0 0.0
        %2410 = vmatpush.msra.mxu0 0.0
        %2411 = vmatpush.msra.mxu0 0.0
        %2412 = vmatpush.msra.mxu0 0.0
        %2413 = vmatpush.msra.mxu0 0.0
        %2414 = vmatpush.msra.mxu0 0.0
        %2415 = vmatpush.msra.mxu0 0.0
        %2416 = vmatpush.msra.mxu0 0.0
        %v2417 = vand.u32 %v1657, 4294901760
        %2418 = vmatpush.msra.mxu0 %v2417
        %v2419 = vand.u32 %v1653, 4294901760
        %2420 = vmatpush.msra.mxu0 %v2419
        %v2421 = vand.u32 %v2392, 4294901760
        %v2422 = vsub.f32 %v2392, %v2421
        %v2423 = vand.u32 %v2422, 4294901760
        %v2424 = vsub.f32 %v2422, %v2423
        %v2425 = vand.u32 %v2424, 4294901760
        %2426 = vmatmul.f32.gmra.mxu0 %v2425
        %v2427 = vpop.f32.mrf.mxu0
        %v2428 = vadd.f32 %v2125, %v2427
        %v2429 = vand.u32 %v2395, 4294901760
        %v2430 = vsub.f32 %v2395, %v2429
        %v2431 = vand.u32 %v2430, 4294901760
        %v2432 = vsub.f32 %v2430, %v2431
        %v2433 = vand.u32 %v2432, 4294901760
        %2434 = vmatmul.f32.gmra.mxu0 %v2433
        %v2435 = vpop.f32.mrf.mxu0
        %v2436 = vadd.f32 %v2129, %v2435
        %v2437 = vand.u32 %v2398, 4294901760
        %v2438 = vsub.f32 %v2398, %v2437
        %v2439 = vand.u32 %v2438, 4294901760
        %v2440 = vsub.f32 %v2438, %v2439
        %v2441 = vand.u32 %v2440, 4294901760
        %2442 = vmatmul.f32.gmra.mxu0 %v2441
        %v2443 = vpop.f32.mrf.mxu0
        %v2444 = vadd.f32 %v2133, %v2443
        %v2445 = vand.u32 %v2401, 4294901760
        %v2446 = vsub.f32 %v2401, %v2445
        %v2447 = vand.u32 %v2446, 4294901760
        %v2448 = vsub.f32 %v2446, %v2447
        %v2449 = vand.u32 %v2448, 4294901760
        %2450 = vmatmul.f32.gmra.mxu0 %v2449
        %v2451 = vpop.f32.mrf.mxu0
        %v2452 = vadd.f32 %v2137, %v2451
        %2453 = vdwg.mxu0
        %2454 = vmatpush.msra.mxu0 0.0
        %2455 = vmatpush.msra.mxu0 0.0
        %2456 = vmatpush.msra.mxu0 0.0
        %2457 = vmatpush.msra.mxu0 0.0
        %2458 = vmatpush.msra.mxu0 0.0
        %2459 = vmatpush.msra.mxu0 0.0
        %2460 = vmatpush.msra.mxu0 0.0
        %2461 = vmatpush.msra.mxu0 0.0
        %2462 = vmatpush.msra.mxu0 0.0
        %2463 = vmatpush.msra.mxu0 0.0
        %2464 = vmatpush.msra.mxu0 0.0
        %2465 = vmatpush.msra.mxu0 0.0
        %2466 = vmatpush.msra.mxu0 0.0
        %2467 = vmatpush.msra.mxu0 0.0
        %v2468 = vand.u32 %v1657, 4294901760
        %v2469 = vsub.f32 %v1657, %v2468
        %v2470 = vand.u32 %v2469, 4294901760
        %v2471 = vsub.f32 %v2469, %v2470
        %v2472 = vand.u32 %v2471, 4294901760
        %2473 = vmatpush.msra.mxu0 %v2472
        %v2474 = vand.u32 %v1653, 4294901760
        %v2475 = vsub.f32 %v1653, %v2474
        %v2476 = vand.u32 %v2475, 4294901760
        %v2477 = vsub.f32 %v2475, %v2476
        %v2478 = vand.u32 %v2477, 4294901760
        %2479 = vmatpush.msra.mxu0 %v2478
        %v2480 = vand.u32 %v2392, 4294901760
        %2481 = vmatmul.f32.gmra.mxu0 %v2480
        %v2482 = vpop.f32.mrf.mxu0
        %v2483 = vadd.f32 %v2428, %v2482
        %v2484 = vand.u32 %v2395, 4294901760
        %2485 = vmatmul.f32.gmra.mxu0 %v2484
        %v2486 = vpop.f32.mrf.mxu0
        %v2487 = vadd.f32 %v2436, %v2486
        %v2488 = vand.u32 %v2398, 4294901760
        %2489 = vmatmul.f32.gmra.mxu0 %v2488
        %v2490 = vpop.f32.mrf.mxu0
        %v2491 = vadd.f32 %v2444, %v2490
        %v2492 = vand.u32 %v2401, 4294901760
        %2493 = vmatmul.f32.gmra.mxu0 %v2492
        %v2494 = vpop.f32.mrf.mxu0
        %v2495 = vadd.f32 %v2452, %v2494
        %2496 = vdwg.mxu0
        %2497 = vmatpush.msra.mxu0 0.0
        %2498 = vmatpush.msra.mxu0 0.0
        %2499 = vmatpush.msra.mxu0 0.0
        %2500 = vmatpush.msra.mxu0 0.0
        %2501 = vmatpush.msra.mxu0 0.0
        %2502 = vmatpush.msra.mxu0 0.0
        %2503 = vmatpush.msra.mxu0 0.0
        %2504 = vmatpush.msra.mxu0 0.0
        %2505 = vmatpush.msra.mxu0 0.0
        %2506 = vmatpush.msra.mxu0 0.0
        %2507 = vmatpush.msra.mxu0 0.0
        %2508 = vmatpush.msra.mxu0 0.0
        %2509 = vmatpush.msra.mxu0 0.0
        %2510 = vmatpush.msra.mxu0 0.0
        %v2511 = vand.u32 %v1657, 4294901760
        %v2512 = vsub.f32 %v1657, %v2511
        %2513 = vmatpush.msra.mxu0 %v2512
        %v2514 = vand.u32 %v1653, 4294901760
        %v2515 = vsub.f32 %v1653, %v2514
        %2516 = vmatpush.msra.mxu0 %v2515
        %v2517 = vand.u32 %v2392, 4294901760
        %v2518 = vsub.f32 %v2392, %v2517
        %2519 = vmatmul.f32.gmra.mxu0 %v2518
        %v2520 = vpop.f32.mrf.mxu0
        %v2521 = vadd.f32 %v2483, %v2520
        %v2522 = vand.u32 %v2395, 4294901760
        %v2523 = vsub.f32 %v2395, %v2522
        %2524 = vmatmul.f32.gmra.mxu0 %v2523
        %v2525 = vpop.f32.mrf.mxu0
        %v2526 = vadd.f32 %v2487, %v2525
        %v2527 = vand.u32 %v2398, 4294901760
        %v2528 = vsub.f32 %v2398, %v2527
        %2529 = vmatmul.f32.gmra.mxu0 %v2528
        %v2530 = vpop.f32.mrf.mxu0
        %v2531 = vadd.f32 %v2491, %v2530
        %v2532 = vand.u32 %v2401, 4294901760
        %v2533 = vsub.f32 %v2401, %v2532
        %2534 = vmatmul.f32.gmra.mxu0 %v2533
        %v2535 = vpop.f32.mrf.mxu0
        %v2536 = vadd.f32 %v2495, %v2535
        %2537 = vdwg.mxu0
        %2538 = vmatpush.msra.mxu0 0.0
        %2539 = vmatpush.msra.mxu0 0.0
        %2540 = vmatpush.msra.mxu0 0.0
        %2541 = vmatpush.msra.mxu0 0.0
        %2542 = vmatpush.msra.mxu0 0.0
        %2543 = vmatpush.msra.mxu0 0.0
        %2544 = vmatpush.msra.mxu0 0.0
        %2545 = vmatpush.msra.mxu0 0.0
        %2546 = vmatpush.msra.mxu0 0.0
        %2547 = vmatpush.msra.mxu0 0.0
        %2548 = vmatpush.msra.mxu0 0.0
        %2549 = vmatpush.msra.mxu0 0.0
        %2550 = vmatpush.msra.mxu0 0.0
        %2551 = vmatpush.msra.mxu0 0.0
        %v2552 = vand.u32 %v1657, 4294901760
        %2553 = vmatpush.msra.mxu0 %v2552
        %v2554 = vand.u32 %v1653, 4294901760
        %2555 = vmatpush.msra.mxu0 %v2554
        %v2556 = vand.u32 %v2392, 4294901760
        %v2557 = vsub.f32 %v2392, %v2556
        %v2558 = vand.u32 %v2557, 4294901760
        %2559 = vmatmul.f32.gmra.mxu0 %v2558
        %v2560 = vpop.f32.mrf.mxu0
        %v2561 = vadd.f32 %v2521, %v2560
        %v2562 = vand.u32 %v2395, 4294901760
        %v2563 = vsub.f32 %v2395, %v2562
        %v2564 = vand.u32 %v2563, 4294901760
        %2565 = vmatmul.f32.gmra.mxu0 %v2564
        %v2566 = vpop.f32.mrf.mxu0
        %v2567 = vadd.f32 %v2526, %v2566
        %v2568 = vand.u32 %v2398, 4294901760
        %v2569 = vsub.f32 %v2398, %v2568
        %v2570 = vand.u32 %v2569, 4294901760
        %2571 = vmatmul.f32.gmra.mxu0 %v2570
        %v2572 = vpop.f32.mrf.mxu0
        %v2573 = vadd.f32 %v2531, %v2572
        %v2574 = vand.u32 %v2401, 4294901760
        %v2575 = vsub.f32 %v2401, %v2574
        %v2576 = vand.u32 %v2575, 4294901760
        %2577 = vmatmul.f32.gmra.mxu0 %v2576
        %v2578 = vpop.f32.mrf.mxu0
        %v2579 = vadd.f32 %v2536, %v2578
        %2580 = vdwg.mxu0
        %2581 = vmatpush.msra.mxu0 0.0
        %2582 = vmatpush.msra.mxu0 0.0
        %2583 = vmatpush.msra.mxu0 0.0
        %2584 = vmatpush.msra.mxu0 0.0
        %2585 = vmatpush.msra.mxu0 0.0
        %2586 = vmatpush.msra.mxu0 0.0
        %2587 = vmatpush.msra.mxu0 0.0
        %2588 = vmatpush.msra.mxu0 0.0
        %2589 = vmatpush.msra.mxu0 0.0
        %2590 = vmatpush.msra.mxu0 0.0
        %2591 = vmatpush.msra.mxu0 0.0
        %2592 = vmatpush.msra.mxu0 0.0
        %2593 = vmatpush.msra.mxu0 0.0
        %2594 = vmatpush.msra.mxu0 0.0
        %v2595 = vand.u32 %v1657, 4294901760
        %v2596 = vsub.f32 %v1657, %v2595
        %v2597 = vand.u32 %v2596, 4294901760
        %2598 = vmatpush.msra.mxu0 %v2597
        %v2599 = vand.u32 %v1653, 4294901760
        %v2600 = vsub.f32 %v1653, %v2599
        %v2601 = vand.u32 %v2600, 4294901760
        %2602 = vmatpush.msra.mxu0 %v2601
        %v2603 = vand.u32 %v2392, 4294901760
        %2604 = vmatmul.f32.gmra.mxu0 %v2603
        %v2605 = vpop.f32.mrf.mxu0
        %v2606 = vadd.f32 %v2561, %v2605
        %v2607 = vand.u32 %v2395, 4294901760
        %2608 = vmatmul.f32.gmra.mxu0 %v2607
        %v2609 = vpop.f32.mrf.mxu0
        %v2610 = vadd.f32 %v2567, %v2609
        %v2611 = vand.u32 %v2398, 4294901760
        %2612 = vmatmul.f32.gmra.mxu0 %v2611
        %v2613 = vpop.f32.mrf.mxu0
        %v2614 = vadd.f32 %v2573, %v2613
        %v2615 = vand.u32 %v2401, 4294901760
        %2616 = vmatmul.f32.gmra.mxu0 %v2615
        %v2617 = vpop.f32.mrf.mxu0
        %v2618 = vadd.f32 %v2579, %v2617
        %2619 = vdwg.mxu0
        %2620 = vmatpush.msra.mxu0 0.0
        %2621 = vmatpush.msra.mxu0 0.0
        %2622 = vmatpush.msra.mxu0 0.0
        %2623 = vmatpush.msra.mxu0 0.0
        %2624 = vmatpush.msra.mxu0 0.0
        %2625 = vmatpush.msra.mxu0 0.0
        %2626 = vmatpush.msra.mxu0 0.0
        %2627 = vmatpush.msra.mxu0 0.0
        %2628 = vmatpush.msra.mxu0 0.0
        %2629 = vmatpush.msra.mxu0 0.0
        %2630 = vmatpush.msra.mxu0 0.0
        %2631 = vmatpush.msra.mxu0 0.0
        %2632 = vmatpush.msra.mxu0 0.0
        %2633 = vmatpush.msra.mxu0 0.0
        %v2634 = vand.u32 %v1657, 4294901760
        %2635 = vmatpush.msra.mxu0 %v2634
        %v2636 = vand.u32 %v1653, 4294901760
        %2637 = vmatpush.msra.mxu0 %v2636
        %v2638 = vand.u32 %v2392, 4294901760
        %2639 = vmatmul.f32.gmra.mxu0 %v2638
        %v2640 = vpop.f32.mrf.mxu0
        %v2641 = vadd.f32 %v2606, %v2640
        %v2642 = vand.u32 %v2395, 4294901760
        %2643 = vmatmul.f32.gmra.mxu0 %v2642
        %v2644 = vpop.f32.mrf.mxu0
        %v2645 = vadd.f32 %v2610, %v2644
        %v2646 = vand.u32 %v2398, 4294901760
        %2647 = vmatmul.f32.gmra.mxu0 %v2646
        %v2648 = vpop.f32.mrf.mxu0
        %v2649 = vadd.f32 %v2614, %v2648
        %v2650 = vand.u32 %v2401, 4294901760
        %2651 = vmatmul.f32.gmra.mxu0 %v2650
        %v2652 = vpop.f32.mrf.mxu0
        %v2653 = vadd.f32 %v2618, %v2652
        %2654 = vdwg.mxu0
        %2655 = vmatpush.msra.mxu0 0.0
        %2656 = vmatpush.msra.mxu0 0.0
        %2657 = vmatpush.msra.mxu0 0.0
        %2658 = vmatpush.msra.mxu0 0.0
        %2659 = vmatpush.msra.mxu0 0.0
        %2660 = vmatpush.msra.mxu0 0.0
        %2661 = vmatpush.msra.mxu0 0.0
        %2662 = vmatpush.msra.mxu0 0.0
        %2663 = vmatpush.msra.mxu0 0.0
        %2664 = vmatpush.msra.mxu0 0.0
        %2665 = vmatpush.msra.mxu0 0.0
        %2666 = vmatpush.msra.mxu0 0.0
        %2667 = vmatpush.msra.mxu0 0.0
        %2668 = vmatpush.msra.mxu0 0.0
        %v2669 = vand.u32 %v1873, 4294901760
        %2670 = vmatpush.msra.mxu0 %v2669
        %v2671 = vand.u32 %v1869, 4294901760
        %2672 = vmatpush.msra.mxu0 %v2671
        %v2673 = vand.u32 %v2392, 4294901760
        %v2674 = vsub.f32 %v2392, %v2673
        %v2675 = vand.u32 %v2674, 4294901760
        %v2676 = vsub.f32 %v2674, %v2675
        %v2677 = vand.u32 %v2676, 4294901760
        %2678 = vmatmul.f32.gmra.mxu0 %v2677
        %v2679 = vpop.f32.mrf.mxu0
        %v2680 = vadd.f32 %v2377, %v2679
        %v2681 = vand.u32 %v2395, 4294901760
        %v2682 = vsub.f32 %v2395, %v2681
        %v2683 = vand.u32 %v2682, 4294901760
        %v2684 = vsub.f32 %v2682, %v2683
        %v2685 = vand.u32 %v2684, 4294901760
        %2686 = vmatmul.f32.gmra.mxu0 %v2685
        %v2687 = vpop.f32.mrf.mxu0
        %v2688 = vadd.f32 %v2381, %v2687
        %v2689 = vand.u32 %v2398, 4294901760
        %v2690 = vsub.f32 %v2398, %v2689
        %v2691 = vand.u32 %v2690, 4294901760
        %v2692 = vsub.f32 %v2690, %v2691
        %v2693 = vand.u32 %v2692, 4294901760
        %2694 = vmatmul.f32.gmra.mxu0 %v2693
        %v2695 = vpop.f32.mrf.mxu0
        %v2696 = vadd.f32 %v2385, %v2695
        %v2697 = vand.u32 %v2401, 4294901760
        %v2698 = vsub.f32 %v2401, %v2697
        %v2699 = vand.u32 %v2698, 4294901760
        %v2700 = vsub.f32 %v2698, %v2699
        %v2701 = vand.u32 %v2700, 4294901760
        %2702 = vmatmul.f32.gmra.mxu0 %v2701
        %v2703 = vpop.f32.mrf.mxu0
        %v2704 = vadd.f32 %v2389, %v2703
        %2705 = vdwg.mxu0
        %2706 = vmatpush.msra.mxu0 0.0
        %2707 = vmatpush.msra.mxu0 0.0
        %2708 = vmatpush.msra.mxu0 0.0
        %2709 = vmatpush.msra.mxu0 0.0
        %2710 = vmatpush.msra.mxu0 0.0
        %2711 = vmatpush.msra.mxu0 0.0
        %2712 = vmatpush.msra.mxu0 0.0
        %2713 = vmatpush.msra.mxu0 0.0
        %2714 = vmatpush.msra.mxu0 0.0
        %2715 = vmatpush.msra.mxu0 0.0
        %2716 = vmatpush.msra.mxu0 0.0
        %2717 = vmatpush.msra.mxu0 0.0
        %2718 = vmatpush.msra.mxu0 0.0
        %2719 = vmatpush.msra.mxu0 0.0
        %v2720 = vand.u32 %v1873, 4294901760
        %v2721 = vsub.f32 %v1873, %v2720
        %v2722 = vand.u32 %v2721, 4294901760
        %v2723 = vsub.f32 %v2721, %v2722
        %v2724 = vand.u32 %v2723, 4294901760
        %2725 = vmatpush.msra.mxu0 %v2724
        %v2726 = vand.u32 %v1869, 4294901760
        %v2727 = vsub.f32 %v1869, %v2726
        %v2728 = vand.u32 %v2727, 4294901760
        %v2729 = vsub.f32 %v2727, %v2728
        %v2730 = vand.u32 %v2729, 4294901760
        %2731 = vmatpush.msra.mxu0 %v2730
        %v2732 = vand.u32 %v2392, 4294901760
        %2733 = vmatmul.f32.gmra.mxu0 %v2732
        %v2734 = vpop.f32.mrf.mxu0
        %v2735 = vadd.f32 %v2680, %v2734
        %v2736 = vand.u32 %v2395, 4294901760
        %2737 = vmatmul.f32.gmra.mxu0 %v2736
        %v2738 = vpop.f32.mrf.mxu0
        %v2739 = vadd.f32 %v2688, %v2738
        %v2740 = vand.u32 %v2398, 4294901760
        %2741 = vmatmul.f32.gmra.mxu0 %v2740
        %v2742 = vpop.f32.mrf.mxu0
        %v2743 = vadd.f32 %v2696, %v2742
        %v2744 = vand.u32 %v2401, 4294901760
        %2745 = vmatmul.f32.gmra.mxu0 %v2744
        %v2746 = vpop.f32.mrf.mxu0
        %v2747 = vadd.f32 %v2704, %v2746
        %2748 = vdwg.mxu0
        %2749 = vmatpush.msra.mxu0 0.0
        %2750 = vmatpush.msra.mxu0 0.0
        %2751 = vmatpush.msra.mxu0 0.0
        %2752 = vmatpush.msra.mxu0 0.0
        %2753 = vmatpush.msra.mxu0 0.0
        %2754 = vmatpush.msra.mxu0 0.0
        %2755 = vmatpush.msra.mxu0 0.0
        %2756 = vmatpush.msra.mxu0 0.0
        %2757 = vmatpush.msra.mxu0 0.0
        %2758 = vmatpush.msra.mxu0 0.0
        %2759 = vmatpush.msra.mxu0 0.0
        %2760 = vmatpush.msra.mxu0 0.0
        %2761 = vmatpush.msra.mxu0 0.0
        %2762 = vmatpush.msra.mxu0 0.0
        %v2763 = vand.u32 %v1873, 4294901760
        %v2764 = vsub.f32 %v1873, %v2763
        %2765 = vmatpush.msra.mxu0 %v2764
        %v2766 = vand.u32 %v1869, 4294901760
        %v2767 = vsub.f32 %v1869, %v2766
        %2768 = vmatpush.msra.mxu0 %v2767
        %v2769 = vand.u32 %v2392, 4294901760
        %v2770 = vsub.f32 %v2392, %v2769
        %2771 = vmatmul.f32.gmra.mxu0 %v2770
        %v2772 = vpop.f32.mrf.mxu0
        %v2773 = vadd.f32 %v2735, %v2772
        %v2774 = vand.u32 %v2395, 4294901760
        %v2775 = vsub.f32 %v2395, %v2774
        %2776 = vmatmul.f32.gmra.mxu0 %v2775
        %v2777 = vpop.f32.mrf.mxu0
        %v2778 = vadd.f32 %v2739, %v2777
        %v2779 = vand.u32 %v2398, 4294901760
        %v2780 = vsub.f32 %v2398, %v2779
        %2781 = vmatmul.f32.gmra.mxu0 %v2780
        %v2782 = vpop.f32.mrf.mxu0
        %v2783 = vadd.f32 %v2743, %v2782
        %v2784 = vand.u32 %v2401, 4294901760
        %v2785 = vsub.f32 %v2401, %v2784
        %2786 = vmatmul.f32.gmra.mxu0 %v2785
        %v2787 = vpop.f32.mrf.mxu0
        %v2788 = vadd.f32 %v2747, %v2787
        %2789 = vdwg.mxu0
        %2790 = vmatpush.msra.mxu0 0.0
        %2791 = vmatpush.msra.mxu0 0.0
        %2792 = vmatpush.msra.mxu0 0.0
        %2793 = vmatpush.msra.mxu0 0.0
        %2794 = vmatpush.msra.mxu0 0.0
        %2795 = vmatpush.msra.mxu0 0.0
        %2796 = vmatpush.msra.mxu0 0.0
        %2797 = vmatpush.msra.mxu0 0.0
        %2798 = vmatpush.msra.mxu0 0.0
        %2799 = vmatpush.msra.mxu0 0.0
        %2800 = vmatpush.msra.mxu0 0.0
        %2801 = vmatpush.msra.mxu0 0.0
        %2802 = vmatpush.msra.mxu0 0.0
        %2803 = vmatpush.msra.mxu0 0.0
        %v2804 = vand.u32 %v1873, 4294901760
        %2805 = vmatpush.msra.mxu0 %v2804
        %v2806 = vand.u32 %v1869, 4294901760
        %2807 = vmatpush.msra.mxu0 %v2806
        %v2808 = vand.u32 %v2392, 4294901760
        %v2809 = vsub.f32 %v2392, %v2808
        %v2810 = vand.u32 %v2809, 4294901760
        %2811 = vmatmul.f32.gmra.mxu0 %v2810
        %v2812 = vpop.f32.mrf.mxu0
        %v2813 = vadd.f32 %v2773, %v2812
        %v2814 = vand.u32 %v2395, 4294901760
        %v2815 = vsub.f32 %v2395, %v2814
        %v2816 = vand.u32 %v2815, 4294901760
        %2817 = vmatmul.f32.gmra.mxu0 %v2816
        %v2818 = vpop.f32.mrf.mxu0
        %v2819 = vadd.f32 %v2778, %v2818
        %v2820 = vand.u32 %v2398, 4294901760
        %v2821 = vsub.f32 %v2398, %v2820
        %v2822 = vand.u32 %v2821, 4294901760
        %2823 = vmatmul.f32.gmra.mxu0 %v2822
        %v2824 = vpop.f32.mrf.mxu0
        %v2825 = vadd.f32 %v2783, %v2824
        %v2826 = vand.u32 %v2401, 4294901760
        %v2827 = vsub.f32 %v2401, %v2826
        %v2828 = vand.u32 %v2827, 4294901760
        %2829 = vmatmul.f32.gmra.mxu0 %v2828
        %v2830 = vpop.f32.mrf.mxu0
        %v2831 = vadd.f32 %v2788, %v2830
        %2832 = vdwg.mxu0
        %2833 = vmatpush.msra.mxu0 0.0
        %2834 = vmatpush.msra.mxu0 0.0
        %2835 = vmatpush.msra.mxu0 0.0
        %2836 = vmatpush.msra.mxu0 0.0
        %2837 = vmatpush.msra.mxu0 0.0
        %2838 = vmatpush.msra.mxu0 0.0
        %2839 = vmatpush.msra.mxu0 0.0
        %2840 = vmatpush.msra.mxu0 0.0
        %2841 = vmatpush.msra.mxu0 0.0
        %2842 = vmatpush.msra.mxu0 0.0
        %2843 = vmatpush.msra.mxu0 0.0
        %2844 = vmatpush.msra.mxu0 0.0
        %2845 = vmatpush.msra.mxu0 0.0
        %2846 = vmatpush.msra.mxu0 0.0
        %v2847 = vand.u32 %v1873, 4294901760
        %v2848 = vsub.f32 %v1873, %v2847
        %v2849 = vand.u32 %v2848, 4294901760
        %2850 = vmatpush.msra.mxu0 %v2849
        %v2851 = vand.u32 %v1869, 4294901760
        %v2852 = vsub.f32 %v1869, %v2851
        %v2853 = vand.u32 %v2852, 4294901760
        %2854 = vmatpush.msra.mxu0 %v2853
        %v2855 = vand.u32 %v2392, 4294901760
        %2856 = vmatmul.f32.gmra.mxu0 %v2855
        %v2857 = vpop.f32.mrf.mxu0
        %v2858 = vadd.f32 %v2813, %v2857
        %v2859 = vand.u32 %v2395, 4294901760
        %2860 = vmatmul.f32.gmra.mxu0 %v2859
        %v2861 = vpop.f32.mrf.mxu0
        %v2862 = vadd.f32 %v2819, %v2861
        %v2863 = vand.u32 %v2398, 4294901760
        %2864 = vmatmul.f32.gmra.mxu0 %v2863
        %v2865 = vpop.f32.mrf.mxu0
        %v2866 = vadd.f32 %v2825, %v2865
        %v2867 = vand.u32 %v2401, 4294901760
        %2868 = vmatmul.f32.gmra.mxu0 %v2867
        %v2869 = vpop.f32.mrf.mxu0
        %v2870 = vadd.f32 %v2831, %v2869
        %2871 = vdwg.mxu0
        %2872 = vmatpush.msra.mxu0 0.0
        %2873 = vmatpush.msra.mxu0 0.0
        %2874 = vmatpush.msra.mxu0 0.0
        %2875 = vmatpush.msra.mxu0 0.0
        %2876 = vmatpush.msra.mxu0 0.0
        %2877 = vmatpush.msra.mxu0 0.0
        %2878 = vmatpush.msra.mxu0 0.0
        %2879 = vmatpush.msra.mxu0 0.0
        %2880 = vmatpush.msra.mxu0 0.0
        %2881 = vmatpush.msra.mxu0 0.0
        %2882 = vmatpush.msra.mxu0 0.0
        %2883 = vmatpush.msra.mxu0 0.0
        %2884 = vmatpush.msra.mxu0 0.0
        %2885 = vmatpush.msra.mxu0 0.0
        %v2886 = vand.u32 %v1873, 4294901760
        %2887 = vmatpush.msra.mxu0 %v2886
        %v2888 = vand.u32 %v1869, 4294901760
        %2889 = vmatpush.msra.mxu0 %v2888
        %v2890 = vand.u32 %v2392, 4294901760
        %2891 = vmatmul.f32.gmra.mxu0 %v2890
        %v2892 = vpop.f32.mrf.mxu0
        %v2893 = vadd.f32 %v2858, %v2892
        %v2894 = vand.u32 %v2395, 4294901760
        %2895 = vmatmul.f32.gmra.mxu0 %v2894
        %v2896 = vpop.f32.mrf.mxu0
        %v2897 = vadd.f32 %v2862, %v2896
        %v2898 = vand.u32 %v2398, 4294901760
        %2899 = vmatmul.f32.gmra.mxu0 %v2898
        %v2900 = vpop.f32.mrf.mxu0
        %v2901 = vadd.f32 %v2866, %v2900
        %v2902 = vand.u32 %v2401, 4294901760
        %2903 = vmatmul.f32.gmra.mxu0 %v2902
        %v2904 = vpop.f32.mrf.mxu0
        %v2905 = vadd.f32 %v2870, %v2904
        %2906 = vdwg.mxu0
        %v2907 = vadd.f32 %v2641, %v596
        %v2908 = vadd.f32 %v2893, %v597
        %v2909 = vadd.f32 %v2645, %v598
        %v2910 = vadd.f32 %v2897, %v599
        %v2911 = vadd.f32 %v2649, %v600
        %v2912 = vadd.f32 %v2901, %v601
        %v2913 = vadd.f32 %v2653, %v602
        %v2914 = vadd.f32 %v2905, %v603
        %2916 = vset.pattern.permute.xlu0 4
        %2917 = vperm.xlu0 %2916, %v588
        %v2918 = vpop.permute.xlu0 %2917
        %2921 = vset.pattern.permute.xlu0 4
        %2922 = vperm.xlu0 %2921, %v589
        %v2923 = vpop.permute.xlu0 %2922
        %2926 = vset.pattern.permute.xlu0 4
        %2927 = vperm.xlu0 %2926, %v590
        %v2928 = vpop.permute.xlu0 %2927
        %2931 = vset.pattern.permute.xlu0 4
        %2932 = vperm.xlu0 %2931, %v591
        %v2933 = vpop.permute.xlu0 %2932
        %v2935 = vmul.f32 %v2907, %v2918
        %v2936 = vmul.f32 %v2908, %v2918
        %v2937 = vmul.f32 %v2909, %v2923
        %v2938 = vmul.f32 %v2910, %v2923
        %v2939 = vmul.f32 %v2911, %v2928
        %v2940 = vmul.f32 %v2912, %v2928
        %v2941 = vmul.f32 %v2913, %v2933
        %v2942 = vmul.f32 %v2914, %v2933
        %2944 = vset.pattern.permute.xlu0 0
        %2945 = vperm.xlu0 %2944, %v592
        %v2946 = vpop.permute.xlu0 %2945
        %2949 = vset.pattern.permute.xlu0 0
        %2950 = vperm.xlu0 %2949, %v593
        %v2951 = vpop.permute.xlu0 %2950
        %2954 = vset.pattern.permute.xlu0 0
        %2955 = vperm.xlu0 %2954, %v594
        %v2956 = vpop.permute.xlu0 %2955
        %2959 = vset.pattern.permute.xlu0 0
        %2960 = vperm.xlu0 %2959, %v595
        %v2961 = vpop.permute.xlu0 %2960
        %v2963 = vadd.f32 %v2935, %v2946
        %v2964 = vadd.f32 %v2936, %v2946
        %v2965 = vadd.f32 %v2937, %v2951
        %v2966 = vadd.f32 %v2938, %v2951
        %v2967 = vadd.f32 %v2939, %v2956
        %v2968 = vadd.f32 %v2940, %v2956
        %v2969 = vadd.f32 %v2941, %v2961
        %v2970 = vadd.f32 %v2942, %v2961
        %2971 = vrot.lane.b32.xlu0 %v2907, 17
        %v2972 = vpop.permute.xlu0 %2971
        %2973 = vrot.lane.b32.xlu0 %v2909, 17
        %v2974 = vpop.permute.xlu0 %2973
        %2975 = vrot.lane.b32.xlu0 %v2911, 17
        %v2976 = vpop.permute.xlu0 %2975
        %2977 = vrot.lane.b32.xlu0 %v2913, 17
        %v2978 = vpop.permute.xlu0 %2977
        %2979 = vrot.lane.b32.xlu0 %v2908, 17
        %v2980 = vpop.permute.xlu0 %2979
        %2981 = vrot.lane.b32.xlu0 %v2910, 17
        %v2982 = vpop.permute.xlu0 %2981
        %2983 = vrot.lane.b32.xlu0 %v2912, 17
        %v2984 = vpop.permute.xlu0 %2983
        %2985 = vrot.lane.b32.xlu0 %v2914, 17
        %v2986 = vpop.permute.xlu0 %2985
        %v2987 = vlaneseq
        %v2988 = vand.u32 %v2987, 127
        %vm2989 = vcmp.lt.s32.totalorder %v2988, 17
        %v2990 = vsel %vm2989, %v2972, %v2980
        %v2991 = vsel %vm2989, %v2974, %v2982
        %v2992 = vsel %vm2989, %v2976, %v2984
        %v2993 = vsel %vm2989, %v2978, %v2986
        %v2994 = vsel %vm2989, %v2980, %v2972
        %v2995 = vsel %vm2989, %v2982, %v2974
        %v2996 = vsel %vm2989, %v2984, %v2976
        %v2997 = vsel %vm2989, %v2986, %v2978
        %vm2998 = vcmp.ge.f32.partialorder %v545, 1.0
        %vm2999 = vcmp.ge.f32.partialorder %v547, 1.0
        %vm3000 = vmand %vm2998, %vm2999
        %v3001 = vsel %vm3000, 1, 0
        %v3002 = vperm.slane %v3001, 0
        %v3003 = vperm.slane %v3001, 1
        %vm3004 = vcmp.eq.s32.totalorder %v3002, 1
        %vm3005 = vcmp.eq.s32.totalorder %v3003, 1
        %v3006 = vsel %vm3004, %v2994, 0.0
        %v3007 = vsel %vm3005, %v2990, 0.0
        %v3008 = vsel %vm3004, %v2995, 0.0
        %v3009 = vsel %vm3005, %v2991, 0.0
        %v3010 = vsel %vm3004, %v2996, 0.0
        %v3011 = vsel %vm3005, %v2992, 0.0
        %v3012 = vsel %vm3004, %v2997, 0.0
        %v3013 = vsel %vm3005, %v2993, 0.0
        %3014 = vset.pattern.permute.xlu0 0
        %3015 = vperm.xlu0 %3014, %v588
        %v3016 = vpop.permute.xlu0 %3015
        %3018 = vset.pattern.permute.xlu0 0
        %3019 = vperm.xlu0 %3018, %v589
        %v3020 = vpop.permute.xlu0 %3019
        %3022 = vset.pattern.permute.xlu0 0
        %3023 = vperm.xlu0 %3022, %v590
        %v3024 = vpop.permute.xlu0 %3023
        %3026 = vset.pattern.permute.xlu0 0
        %3027 = vperm.xlu0 %3026, %v591
        %v3028 = vpop.permute.xlu0 %3027
        %v3030 = vmul.f32 %v3006, %v3016
        %v3031 = vmul.f32 %v3007, %v3016
        %v3032 = vmul.f32 %v3008, %v3020
        %v3033 = vmul.f32 %v3009, %v3020
        %v3034 = vmul.f32 %v3010, %v3024
        %v3035 = vmul.f32 %v3011, %v3024
        %v3036 = vmul.f32 %v3012, %v3028
        %v3037 = vmul.f32 %v3013, %v3028
        %v3038 = vadd.f32 %v2963, %v3030
        %v3039 = vadd.f32 %v2964, %v3031
        %v3040 = vadd.f32 %v2965, %v3032
        %v3041 = vadd.f32 %v2966, %v3033
        %v3042 = vadd.f32 %v2967, %v3034
        %v3043 = vadd.f32 %v2968, %v3035
        %v3044 = vadd.f32 %v2969, %v3036
        %v3045 = vadd.f32 %v2970, %v3037
        %3046 = vrot.lane.b32.xlu0 %v2907, 16
        %v3047 = vpop.permute.xlu0 %3046
        %3048 = vrot.lane.b32.xlu0 %v2909, 16
        %v3049 = vpop.permute.xlu0 %3048
        %3050 = vrot.lane.b32.xlu0 %v2911, 16
        %v3051 = vpop.permute.xlu0 %3050
        %3052 = vrot.lane.b32.xlu0 %v2913, 16
        %v3053 = vpop.permute.xlu0 %3052
        %3054 = vrot.lane.b32.xlu0 %v2908, 16
        %v3055 = vpop.permute.xlu0 %3054
        %3056 = vrot.lane.b32.xlu0 %v2910, 16
        %v3057 = vpop.permute.xlu0 %3056
        %3058 = vrot.lane.b32.xlu0 %v2912, 16
        %v3059 = vpop.permute.xlu0 %3058
        %3060 = vrot.lane.b32.xlu0 %v2914, 16
        %v3061 = vpop.permute.xlu0 %3060
        %vm3062 = vcmp.lt.s32.totalorder %v2988, 16
        %v3063 = vsel %vm3062, %v3047, %v3055
        %v3064 = vsel %vm3062, %v3049, %v3057
        %v3065 = vsel %vm3062, %v3051, %v3059
        %v3066 = vsel %vm3062, %v3053, %v3061
        %v3067 = vsel %vm3062, %v3055, %v3047
        %v3068 = vsel %vm3062, %v3057, %v3049
        %v3069 = vsel %vm3062, %v3059, %v3051
        %v3070 = vsel %vm3062, %v3061, %v3053
        %v3071 = vsel %vm2998, 1, 0
        %v3072 = vperm.slane %v3071, 0
        %v3073 = vperm.slane %v3071, 1
        %vm3074 = vcmp.eq.s32.totalorder %v3072, 1
        %vm3075 = vcmp.eq.s32.totalorder %v3073, 1
        %v3076 = vsel %vm3074, %v3067, 0.0
        %v3077 = vsel %vm3075, %v3063, 0.0
        %v3078 = vsel %vm3074, %v3068, 0.0
        %v3079 = vsel %vm3075, %v3064, 0.0
        %v3080 = vsel %vm3074, %v3069, 0.0
        %v3081 = vsel %vm3075, %v3065, 0.0
        %v3082 = vsel %vm3074, %v3070, 0.0
        %v3083 = vsel %vm3075, %v3066, 0.0
        %3084 = vset.pattern.permute.xlu0 1
        %3085 = vperm.xlu0 %3084, %v588
        %v3086 = vpop.permute.xlu0 %3085
        %3088 = vset.pattern.permute.xlu0 1
        %3089 = vperm.xlu0 %3088, %v589
        %v3090 = vpop.permute.xlu0 %3089
        %3092 = vset.pattern.permute.xlu0 1
        %3093 = vperm.xlu0 %3092, %v590
        %v3094 = vpop.permute.xlu0 %3093
        %3096 = vset.pattern.permute.xlu0 1
        %3097 = vperm.xlu0 %3096, %v591
        %v3098 = vpop.permute.xlu0 %3097
        %v3100 = vmul.f32 %v3076, %v3086
        %v3101 = vmul.f32 %v3077, %v3086
        %v3102 = vmul.f32 %v3078, %v3090
        %v3103 = vmul.f32 %v3079, %v3090
        %v3104 = vmul.f32 %v3080, %v3094
        %v3105 = vmul.f32 %v3081, %v3094
        %v3106 = vmul.f32 %v3082, %v3098
        %v3107 = vmul.f32 %v3083, %v3098
        %v3108 = vadd.f32 %v3038, %v3100
        %v3109 = vadd.f32 %v3039, %v3101
        %v3110 = vadd.f32 %v3040, %v3102
        %v3111 = vadd.f32 %v3041, %v3103
        %v3112 = vadd.f32 %v3042, %v3104
        %v3113 = vadd.f32 %v3043, %v3105
        %v3114 = vadd.f32 %v3044, %v3106
        %v3115 = vadd.f32 %v3045, %v3107
        %3116 = vrot.lane.b32.xlu0 %v2907, 15
        %v3117 = vpop.permute.xlu0 %3116
        %3118 = vrot.lane.b32.xlu0 %v2909, 15
        %v3119 = vpop.permute.xlu0 %3118
        %3120 = vrot.lane.b32.xlu0 %v2911, 15
        %v3121 = vpop.permute.xlu0 %3120
        %3122 = vrot.lane.b32.xlu0 %v2913, 15
        %v3123 = vpop.permute.xlu0 %3122
        %3124 = vrot.lane.b32.xlu0 %v2908, 15
        %v3125 = vpop.permute.xlu0 %3124
        %3126 = vrot.lane.b32.xlu0 %v2910, 15
        %v3127 = vpop.permute.xlu0 %3126
        %3128 = vrot.lane.b32.xlu0 %v2912, 15
        %v3129 = vpop.permute.xlu0 %3128
        %3130 = vrot.lane.b32.xlu0 %v2914, 15
        %v3131 = vpop.permute.xlu0 %3130
        %vm3132 = vcmp.lt.s32.totalorder %v2988, 15
        %v3133 = vsel %vm3132, %v3117, %v3125
        %v3134 = vsel %vm3132, %v3119, %v3127
        %v3135 = vsel %vm3132, %v3121, %v3129
        %v3136 = vsel %vm3132, %v3123, %v3131
        %v3137 = vsel %vm3132, %v3125, %v3117
        %v3138 = vsel %vm3132, %v3127, %v3119
        %v3139 = vsel %vm3132, %v3129, %v3121
        %v3140 = vsel %vm3132, %v3131, %v3123
        %vm3141 = vcmp.lt.f32.partialorder %v547, 15.0
        %vm3142 = vmand %vm2998, %vm3141
        %v3143 = vsel %vm3142, 1, 0
        %v3144 = vperm.slane %v3143, 0
        %v3145 = vperm.slane %v3143, 1
        %vm3146 = vcmp.eq.s32.totalorder %v3144, 1
        %vm3147 = vcmp.eq.s32.totalorder %v3145, 1
        %v3148 = vsel %vm3146, %v3137, 0.0
        %v3149 = vsel %vm3147, %v3133, 0.0
        %v3150 = vsel %vm3146, %v3138, 0.0
        %v3151 = vsel %vm3147, %v3134, 0.0
        %v3152 = vsel %vm3146, %v3139, 0.0
        %v3153 = vsel %vm3147, %v3135, 0.0
        %v3154 = vsel %vm3146, %v3140, 0.0
        %v3155 = vsel %vm3147, %v3136, 0.0
        %3156 = vset.pattern.permute.xlu0 2
        %3157 = vperm.xlu0 %3156, %v588
        %v3158 = vpop.permute.xlu0 %3157
        %3160 = vset.pattern.permute.xlu0 2
        %3161 = vperm.xlu0 %3160, %v589
        %v3162 = vpop.permute.xlu0 %3161
        %3164 = vset.pattern.permute.xlu0 2
        %3165 = vperm.xlu0 %3164, %v590
        %v3166 = vpop.permute.xlu0 %3165
        %3168 = vset.pattern.permute.xlu0 2
        %3169 = vperm.xlu0 %3168, %v591
        %v3170 = vpop.permute.xlu0 %3169
        %v3172 = vmul.f32 %v3148, %v3158
        %v3173 = vmul.f32 %v3149, %v3158
        %v3174 = vmul.f32 %v3150, %v3162
        %v3175 = vmul.f32 %v3151, %v3162
        %v3176 = vmul.f32 %v3152, %v3166
        %v3177 = vmul.f32 %v3153, %v3166
        %v3178 = vmul.f32 %v3154, %v3170
        %v3179 = vmul.f32 %v3155, %v3170
        %v3180 = vadd.f32 %v3108, %v3172
        %v3181 = vadd.f32 %v3109, %v3173
        %v3182 = vadd.f32 %v3110, %v3174
        %v3183 = vadd.f32 %v3111, %v3175
        %v3184 = vadd.f32 %v3112, %v3176
        %v3185 = vadd.f32 %v3113, %v3177
        %v3186 = vadd.f32 %v3114, %v3178
        %v3187 = vadd.f32 %v3115, %v3179
        %3188 = vrot.lane.b32.xlu0 %v2907, 1
        %v3189 = vpop.permute.xlu0 %3188
        %3190 = vrot.lane.b32.xlu0 %v2909, 1
        %v3191 = vpop.permute.xlu0 %3190
        %3192 = vrot.lane.b32.xlu0 %v2911, 1
        %v3193 = vpop.permute.xlu0 %3192
        %3194 = vrot.lane.b32.xlu0 %v2913, 1
        %v3195 = vpop.permute.xlu0 %3194
        %3196 = vrot.lane.b32.xlu0 %v2908, 1
        %v3197 = vpop.permute.xlu0 %3196
        %3198 = vrot.lane.b32.xlu0 %v2910, 1
        %v3199 = vpop.permute.xlu0 %3198
        %3200 = vrot.lane.b32.xlu0 %v2912, 1
        %v3201 = vpop.permute.xlu0 %3200
        %3202 = vrot.lane.b32.xlu0 %v2914, 1
        %v3203 = vpop.permute.xlu0 %3202
        %vm3204 = vcmp.lt.s32.totalorder %v2988, 1
        %v3205 = vsel %vm3204, %v3189, %v3197
        %v3206 = vsel %vm3204, %v3191, %v3199
        %v3207 = vsel %vm3204, %v3193, %v3201
        %v3208 = vsel %vm3204, %v3195, %v3203
        %v3209 = vsel %vm3204, %v3197, %v3189
        %v3210 = vsel %vm3204, %v3199, %v3191
        %v3211 = vsel %vm3204, %v3201, %v3193
        %v3212 = vsel %vm3204, %v3203, %v3195
        %v3213 = vsel %vm2999, 1, 0
        %v3214 = vperm.slane %v3213, 0
        %v3215 = vperm.slane %v3213, 1
        %vm3216 = vcmp.eq.s32.totalorder %v3214, 1
        %vm3217 = vcmp.eq.s32.totalorder %v3215, 1
        %v3218 = vsel %vm3216, %v3209, 0.0
        %v3219 = vsel %vm3217, %v3205, 0.0
        %v3220 = vsel %vm3216, %v3210, 0.0
        %v3221 = vsel %vm3217, %v3206, 0.0
        %v3222 = vsel %vm3216, %v3211, 0.0
        %v3223 = vsel %vm3217, %v3207, 0.0
        %v3224 = vsel %vm3216, %v3212, 0.0
        %v3225 = vsel %vm3217, %v3208, 0.0
        %3226 = vset.pattern.permute.xlu0 3
        %3227 = vperm.xlu0 %3226, %v588
        %v3228 = vpop.permute.xlu0 %3227
        %3230 = vset.pattern.permute.xlu0 3
        %3231 = vperm.xlu0 %3230, %v589
        %v3232 = vpop.permute.xlu0 %3231
        %3234 = vset.pattern.permute.xlu0 3
        %3235 = vperm.xlu0 %3234, %v590
        %v3236 = vpop.permute.xlu0 %3235
        %3238 = vset.pattern.permute.xlu0 3
        %3239 = vperm.xlu0 %3238, %v591
        %v3240 = vpop.permute.xlu0 %3239
        %v3242 = vmul.f32 %v3218, %v3228
        %v3243 = vmul.f32 %v3219, %v3228
        %v3244 = vmul.f32 %v3220, %v3232
        %v3245 = vmul.f32 %v3221, %v3232
        %v3246 = vmul.f32 %v3222, %v3236
        %v3247 = vmul.f32 %v3223, %v3236
        %v3248 = vmul.f32 %v3224, %v3240
        %v3249 = vmul.f32 %v3225, %v3240
        %v3250 = vadd.f32 %v3180, %v3242
        %v3251 = vadd.f32 %v3181, %v3243
        %v3252 = vadd.f32 %v3182, %v3244
        %v3253 = vadd.f32 %v3183, %v3245
        %v3254 = vadd.f32 %v3184, %v3246
        %v3255 = vadd.f32 %v3185, %v3247
        %v3256 = vadd.f32 %v3186, %v3248
        %v3257 = vadd.f32 %v3187, %v3249
        %3258 = vrot.lane.b32.xlu0 %v2907, 127
        %v3259 = vpop.permute.xlu0 %3258
        %3260 = vrot.lane.b32.xlu0 %v2909, 127
        %v3261 = vpop.permute.xlu0 %3260
        %3262 = vrot.lane.b32.xlu0 %v2911, 127
        %v3263 = vpop.permute.xlu0 %3262
        %3264 = vrot.lane.b32.xlu0 %v2913, 127
        %v3265 = vpop.permute.xlu0 %3264
        %3266 = vrot.lane.b32.xlu0 %v2908, 127
        %v3267 = vpop.permute.xlu0 %3266
        %3268 = vrot.lane.b32.xlu0 %v2910, 127
        %v3269 = vpop.permute.xlu0 %3268
        %3270 = vrot.lane.b32.xlu0 %v2912, 127
        %v3271 = vpop.permute.xlu0 %3270
        %3272 = vrot.lane.b32.xlu0 %v2914, 127
        %v3273 = vpop.permute.xlu0 %3272
        %vm3274 = vcmp.lt.s32.totalorder %v2988, 127
        %v3275 = vsel %vm3274, %v3259, %v3267
        %v3276 = vsel %vm3274, %v3261, %v3269
        %v3277 = vsel %vm3274, %v3263, %v3271
        %v3278 = vsel %vm3274, %v3265, %v3273
        %v3279 = vsel %vm3274, %v3267, %v3259
        %v3280 = vsel %vm3274, %v3269, %v3261
        %v3281 = vsel %vm3274, %v3271, %v3263
        %v3282 = vsel %vm3274, %v3273, %v3265
        %v3283 = vsel %vm3141, 1, 0
        %v3284 = vperm.slane %v3283, 0
        %v3285 = vperm.slane %v3283, 1
        %vm3286 = vcmp.eq.s32.totalorder %v3284, 1
        %vm3287 = vcmp.eq.s32.totalorder %v3285, 1
        %v3288 = vsel %vm3286, %v3275, 0.0
        %v3289 = vsel %vm3287, %v3279, 0.0
        %v3290 = vsel %vm3286, %v3276, 0.0
        %v3291 = vsel %vm3287, %v3280, 0.0
        %v3292 = vsel %vm3286, %v3277, 0.0
        %v3293 = vsel %vm3287, %v3281, 0.0
        %v3294 = vsel %vm3286, %v3278, 0.0
        %v3295 = vsel %vm3287, %v3282, 0.0
        %3296 = vset.pattern.permute.xlu0 5
        %3297 = vperm.xlu0 %3296, %v588
        %v3298 = vpop.permute.xlu0 %3297
        %3300 = vset.pattern.permute.xlu0 5
        %3301 = vperm.xlu0 %3300, %v589
        %v3302 = vpop.permute.xlu0 %3301
        %3304 = vset.pattern.permute.xlu0 5
        %3305 = vperm.xlu0 %3304, %v590
        %v3306 = vpop.permute.xlu0 %3305
        %3308 = vset.pattern.permute.xlu0 5
        %3309 = vperm.xlu0 %3308, %v591
        %v3310 = vpop.permute.xlu0 %3309
        %v3312 = vmul.f32 %v3288, %v3298
        %v3313 = vmul.f32 %v3289, %v3298
        %v3314 = vmul.f32 %v3290, %v3302
        %v3315 = vmul.f32 %v3291, %v3302
        %v3316 = vmul.f32 %v3292, %v3306
        %v3317 = vmul.f32 %v3293, %v3306
        %v3318 = vmul.f32 %v3294, %v3310
        %v3319 = vmul.f32 %v3295, %v3310
        %v3320 = vadd.f32 %v3250, %v3312
        %v3321 = vadd.f32 %v3251, %v3313
        %v3322 = vadd.f32 %v3252, %v3314
        %v3323 = vadd.f32 %v3253, %v3315
        %v3324 = vadd.f32 %v3254, %v3316
        %v3325 = vadd.f32 %v3255, %v3317
        %v3326 = vadd.f32 %v3256, %v3318
        %v3327 = vadd.f32 %v3257, %v3319
        %3328 = vrot.lane.b32.xlu0 %v2907, 113
        %v3329 = vpop.permute.xlu0 %3328
        %3330 = vrot.lane.b32.xlu0 %v2909, 113
        %v3331 = vpop.permute.xlu0 %3330
        %3332 = vrot.lane.b32.xlu0 %v2911, 113
        %v3333 = vpop.permute.xlu0 %3332
        %3334 = vrot.lane.b32.xlu0 %v2913, 113
        %v3335 = vpop.permute.xlu0 %3334
        %3336 = vrot.lane.b32.xlu0 %v2908, 113
        %v3337 = vpop.permute.xlu0 %3336
        %3338 = vrot.lane.b32.xlu0 %v2910, 113
        %v3339 = vpop.permute.xlu0 %3338
        %3340 = vrot.lane.b32.xlu0 %v2912, 113
        %v3341 = vpop.permute.xlu0 %3340
        %3342 = vrot.lane.b32.xlu0 %v2914, 113
        %v3343 = vpop.permute.xlu0 %3342
        %vm3344 = vcmp.lt.s32.totalorder %v2988, 113
        %v3345 = vsel %vm3344, %v3329, %v3337
        %v3346 = vsel %vm3344, %v3331, %v3339
        %v3347 = vsel %vm3344, %v3333, %v3341
        %v3348 = vsel %vm3344, %v3335, %v3343
        %v3349 = vsel %vm3344, %v3337, %v3329
        %v3350 = vsel %vm3344, %v3339, %v3331
        %v3351 = vsel %vm3344, %v3341, %v3333
        %v3352 = vsel %vm3344, %v3343, %v3335
        %vm3353 = vcmp.lt.f32.partialorder %v545, 15.0
        %vm3354 = vmand %vm3353, %vm2999
        %v3355 = vsel %vm3354, 1, 0
        %v3356 = vperm.slane %v3355, 0
        %v3357 = vperm.slane %v3355, 1
        %vm3358 = vcmp.eq.s32.totalorder %v3356, 1
        %vm3359 = vcmp.eq.s32.totalorder %v3357, 1
        %v3360 = vsel %vm3358, %v3345, 0.0
        %v3361 = vsel %vm3359, %v3349, 0.0
        %v3362 = vsel %vm3358, %v3346, 0.0
        %v3363 = vsel %vm3359, %v3350, 0.0
        %v3364 = vsel %vm3358, %v3347, 0.0
        %v3365 = vsel %vm3359, %v3351, 0.0
        %v3366 = vsel %vm3358, %v3348, 0.0
        %v3367 = vsel %vm3359, %v3352, 0.0
        %3368 = vset.pattern.permute.xlu0 6
        %3369 = vperm.xlu0 %3368, %v588
        %v3370 = vpop.permute.xlu0 %3369
        %3372 = vset.pattern.permute.xlu0 6
        %3373 = vperm.xlu0 %3372, %v589
        %v3374 = vpop.permute.xlu0 %3373
        %3376 = vset.pattern.permute.xlu0 6
        %3377 = vperm.xlu0 %3376, %v590
        %v3378 = vpop.permute.xlu0 %3377
        %3380 = vset.pattern.permute.xlu0 6
        %3381 = vperm.xlu0 %3380, %v591
        %v3382 = vpop.permute.xlu0 %3381
        %v3384 = vmul.f32 %v3360, %v3370
        %v3385 = vmul.f32 %v3361, %v3370
        %v3386 = vmul.f32 %v3362, %v3374
        %v3387 = vmul.f32 %v3363, %v3374
        %v3388 = vmul.f32 %v3364, %v3378
        %v3389 = vmul.f32 %v3365, %v3378
        %v3390 = vmul.f32 %v3366, %v3382
        %v3391 = vmul.f32 %v3367, %v3382
        %v3392 = vadd.f32 %v3320, %v3384
        %v3393 = vadd.f32 %v3321, %v3385
        %v3394 = vadd.f32 %v3322, %v3386
        %v3395 = vadd.f32 %v3323, %v3387
        %v3396 = vadd.f32 %v3324, %v3388
        %v3397 = vadd.f32 %v3325, %v3389
        %v3398 = vadd.f32 %v3326, %v3390
        %v3399 = vadd.f32 %v3327, %v3391
        %3400 = vrot.lane.b32.xlu0 %v2907, 112
        %v3401 = vpop.permute.xlu0 %3400
        %3402 = vrot.lane.b32.xlu0 %v2909, 112
        %v3403 = vpop.permute.xlu0 %3402
        %3404 = vrot.lane.b32.xlu0 %v2911, 112
        %v3405 = vpop.permute.xlu0 %3404
        %3406 = vrot.lane.b32.xlu0 %v2913, 112
        %v3407 = vpop.permute.xlu0 %3406
        %3408 = vrot.lane.b32.xlu0 %v2908, 112
        %v3409 = vpop.permute.xlu0 %3408
        %3410 = vrot.lane.b32.xlu0 %v2910, 112
        %v3411 = vpop.permute.xlu0 %3410
        %3412 = vrot.lane.b32.xlu0 %v2912, 112
        %v3413 = vpop.permute.xlu0 %3412
        %3414 = vrot.lane.b32.xlu0 %v2914, 112
        %v3415 = vpop.permute.xlu0 %3414
        %vm3416 = vcmp.lt.s32.totalorder %v2988, 112
        %v3417 = vsel %vm3416, %v3401, %v3409
        %v3418 = vsel %vm3416, %v3403, %v3411
        %v3419 = vsel %vm3416, %v3405, %v3413
        %v3420 = vsel %vm3416, %v3407, %v3415
        %v3421 = vsel %vm3416, %v3409, %v3401
        %v3422 = vsel %vm3416, %v3411, %v3403
        %v3423 = vsel %vm3416, %v3413, %v3405
        %v3424 = vsel %vm3416, %v3415, %v3407
        %v3425 = vsel %vm3353, 1, 0
        %v3426 = vperm.slane %v3425, 0
        %v3427 = vperm.slane %v3425, 1
        %vm3428 = vcmp.eq.s32.totalorder %v3426, 1
        %vm3429 = vcmp.eq.s32.totalorder %v3427, 1
        %v3430 = vsel %vm3428, %v3417, 0.0
        %v3431 = vsel %vm3429, %v3421, 0.0
        %v3432 = vsel %vm3428, %v3418, 0.0
        %v3433 = vsel %vm3429, %v3422, 0.0
        %v3434 = vsel %vm3428, %v3419, 0.0
        %v3435 = vsel %vm3429, %v3423, 0.0
        %v3436 = vsel %vm3428, %v3420, 0.0
        %v3437 = vsel %vm3429, %v3424, 0.0
        %3438 = vset.pattern.permute.xlu0 7
        %3439 = vperm.xlu0 %3438, %v588
        %v3440 = vpop.permute.xlu0 %3439
        %3442 = vset.pattern.permute.xlu0 7
        %3443 = vperm.xlu0 %3442, %v589
        %v3444 = vpop.permute.xlu0 %3443
        %3446 = vset.pattern.permute.xlu0 7
        %3447 = vperm.xlu0 %3446, %v590
        %v3448 = vpop.permute.xlu0 %3447
        %3450 = vset.pattern.permute.xlu0 7
        %3451 = vperm.xlu0 %3450, %v591
        %v3452 = vpop.permute.xlu0 %3451
        %v3454 = vmul.f32 %v3430, %v3440
        %v3455 = vmul.f32 %v3431, %v3440
        %v3456 = vmul.f32 %v3432, %v3444
        %v3457 = vmul.f32 %v3433, %v3444
        %v3458 = vmul.f32 %v3434, %v3448
        %v3459 = vmul.f32 %v3435, %v3448
        %v3460 = vmul.f32 %v3436, %v3452
        %v3461 = vmul.f32 %v3437, %v3452
        %v3462 = vadd.f32 %v3392, %v3454
        %v3463 = vadd.f32 %v3393, %v3455
        %v3464 = vadd.f32 %v3394, %v3456
        %v3465 = vadd.f32 %v3395, %v3457
        %v3466 = vadd.f32 %v3396, %v3458
        %v3467 = vadd.f32 %v3397, %v3459
        %v3468 = vadd.f32 %v3398, %v3460
        %v3469 = vadd.f32 %v3399, %v3461
        %3470 = vrot.lane.b32.xlu0 %v2907, 111
        %v3471 = vpop.permute.xlu0 %3470
        %3472 = vrot.lane.b32.xlu0 %v2909, 111
        %v3473 = vpop.permute.xlu0 %3472
        %3474 = vrot.lane.b32.xlu0 %v2911, 111
        %v3475 = vpop.permute.xlu0 %3474
        %3476 = vrot.lane.b32.xlu0 %v2913, 111
        %v3477 = vpop.permute.xlu0 %3476
        %3478 = vrot.lane.b32.xlu0 %v2908, 111
        %v3479 = vpop.permute.xlu0 %3478
        %3480 = vrot.lane.b32.xlu0 %v2910, 111
        %v3481 = vpop.permute.xlu0 %3480
        %3482 = vrot.lane.b32.xlu0 %v2912, 111
        %v3483 = vpop.permute.xlu0 %3482
        %3484 = vrot.lane.b32.xlu0 %v2914, 111
        %v3485 = vpop.permute.xlu0 %3484
        %vm3486 = vcmp.lt.s32.totalorder %v2988, 111
        %v3487 = vsel %vm3486, %v3471, %v3479
        %v3488 = vsel %vm3486, %v3473, %v3481
        %v3489 = vsel %vm3486, %v3475, %v3483
        %v3490 = vsel %vm3486, %v3477, %v3485
        %v3491 = vsel %vm3486, %v3479, %v3471
        %v3492 = vsel %vm3486, %v3481, %v3473
        %v3493 = vsel %vm3486, %v3483, %v3475
        %v3494 = vsel %vm3486, %v3485, %v3477
        %vm3495 = vmand %vm3353, %vm3141
        %v3496 = vsel %vm3495, 1, 0
        %v3497 = vperm.slane %v3496, 0
        %v3498 = vperm.slane %v3496, 1
        %vm3499 = vcmp.eq.s32.totalorder %v3497, 1
        %vm3500 = vcmp.eq.s32.totalorder %v3498, 1
        %v3501 = vsel %vm3499, %v3487, 0.0
        %v3502 = vsel %vm3500, %v3491, 0.0
        %v3503 = vsel %vm3499, %v3488, 0.0
        %v3504 = vsel %vm3500, %v3492, 0.0
        %v3505 = vsel %vm3499, %v3489, 0.0
        %v3506 = vsel %vm3500, %v3493, 0.0
        %v3507 = vsel %vm3499, %v3490, 0.0
        %v3508 = vsel %vm3500, %v3494, 0.0
        %3509 = vset.pattern.permute.xlu0 8
        %3510 = vperm.xlu0 %3509, %v588
        %v3511 = vpop.permute.xlu0 %3510
        %3513 = vset.pattern.permute.xlu0 8
        %3514 = vperm.xlu0 %3513, %v589
        %v3515 = vpop.permute.xlu0 %3514
        %3517 = vset.pattern.permute.xlu0 8
        %3518 = vperm.xlu0 %3517, %v590
        %v3519 = vpop.permute.xlu0 %3518
        %3521 = vset.pattern.permute.xlu0 8
        %3522 = vperm.xlu0 %3521, %v591
        %v3523 = vpop.permute.xlu0 %3522
        %v3525 = vmul.f32 %v3501, %v3511
        %v3526 = vmul.f32 %v3502, %v3511
        %v3527 = vmul.f32 %v3503, %v3515
        %v3528 = vmul.f32 %v3504, %v3515
        %v3529 = vmul.f32 %v3505, %v3519
        %v3530 = vmul.f32 %v3506, %v3519
        %v3531 = vmul.f32 %v3507, %v3523
        %v3532 = vmul.f32 %v3508, %v3523
        %v3533 = vadd.f32 %v3462, %v3525
        %v3534 = vadd.f32 %v3463, %v3526
        %v3535 = vadd.f32 %v3464, %v3527
        %v3536 = vadd.f32 %v3465, %v3528
        %v3537 = vadd.f32 %v3466, %v3529
        %v3538 = vadd.f32 %v3467, %v3530
        %v3539 = vadd.f32 %v3468, %v3531
        %v3540 = vadd.f32 %v3469, %v3532
        %v3541 = vadd.f32 %v3533, %v3535
        %v3542 = vadd.f32 %v3541, %v3537
        %v3543 = vadd.f32 %v3542, %v3539
        %v3544 = vrot.slane %v3543, 4
        %v3545 = vadd.f32 %v3543, %v3544
        %v3546 = vrot.slane %v3545, 2
        %v3547 = vadd.f32 %v3545, %v3546
        %v3548 = vrot.slane %v3547, 1
        %v3549 = vadd.f32 %v3547, %v3548
        %v3550 = vadd.f32 %v3534, %v3536
        %v3551 = vadd.f32 %v3550, %v3538
        %v3552 = vadd.f32 %v3551, %v3540
        %v3553 = vrot.slane %v3552, 4
        %v3554 = vadd.f32 %v3552, %v3553
        %v3555 = vrot.slane %v3554, 2
        %v3556 = vadd.f32 %v3554, %v3555
        %v3557 = vrot.slane %v3556, 1
        %v3558 = vadd.f32 %v3556, %v3557
        %v3559 = vmul.f32 %v3549, %v628
        %v3560 = vmul.f32 %v3558, %v628
        %v3561 = vmul.f32 %v3533, %v3533
        %v3562 = vmul.f32 %v3534, %v3534
        %v3563 = vmul.f32 %v3535, %v3535
        %v3564 = vmul.f32 %v3536, %v3536
        %v3565 = vmul.f32 %v3537, %v3537
        %v3566 = vmul.f32 %v3538, %v3538
        %v3567 = vmul.f32 %v3539, %v3539
        %v3568 = vmul.f32 %v3540, %v3540
        %v3569 = vadd.f32 %v3561, %v3563
        %v3570 = vadd.f32 %v3569, %v3565
        %v3571 = vadd.f32 %v3570, %v3567
        %v3572 = vrot.slane %v3571, 4
        %v3573 = vadd.f32 %v3571, %v3572
        %v3574 = vrot.slane %v3573, 2
        %v3575 = vadd.f32 %v3573, %v3574
        %v3576 = vrot.slane %v3575, 1
        %v3577 = vadd.f32 %v3575, %v3576
        %v3578 = vadd.f32 %v3562, %v3564
        %v3579 = vadd.f32 %v3578, %v3566
        %v3580 = vadd.f32 %v3579, %v3568
        %v3581 = vrot.slane %v3580, 4
        %v3582 = vadd.f32 %v3580, %v3581
        %v3583 = vrot.slane %v3582, 2
        %v3584 = vadd.f32 %v3582, %v3583
        %v3585 = vrot.slane %v3584, 1
        %v3586 = vadd.f32 %v3584, %v3585
        %v3587 = vmul.f32 %v3577, %v628
        %v3588 = vmul.f32 %v3586, %v628
        %v3589 = vmul.f32 %v3559, %v3559
        %v3590 = vmul.f32 %v3560, %v3560
        %v3591 = vsub.f32 %v3587, %v3589
        %v3592 = vsub.f32 %v3588, %v3590
        %v3593 = vsub.f32 %v3533, %v3559
        %v3594 = vsub.f32 %v3534, %v3560
        %v3595 = vsub.f32 %v3535, %v3559
        %v3596 = vsub.f32 %v3536, %v3560
        %v3597 = vsub.f32 %v3537, %v3559
        %v3598 = vsub.f32 %v3538, %v3560
        %v3599 = vsub.f32 %v3539, %v3559
        %v3600 = vsub.f32 %v3540, %v3560
        %v3601 = vadd.f32 %v3591, 1e-05
        %v3602 = vadd.f32 %v3592, 1e-05
        %v3603 = vrsqrt.pop %v3601
        %v3604 = vmul.f32 %v3603, %v3601
        %v3605 = vmul.f32 %v3604, %v3603
        %v3606 = vmul.f32 0.5, %v3605
        %v3607 = vsub.f32 1.5, %v3606
        %v3608 = vmul.f32 %v3603, %v3607
        %vm3609 = vweird.f32 %v3601
        %vm3610 = vweird.f32 %v3603
        %vm3611 = vmor %vm3609, %vm3610
        %v3612 = vsel %vm3611, %v3603, %v3608
        %v3613 = vrsqrt.pop %v3602
        %v3614 = vmul.f32 %v3613, %v3602
        %v3615 = vmul.f32 %v3614, %v3613
        %v3616 = vmul.f32 0.5, %v3615
        %v3617 = vsub.f32 1.5, %v3616
        %v3618 = vmul.f32 %v3613, %v3617
        %vm3619 = vweird.f32 %v3602
        %vm3620 = vweird.f32 %v3613
        %vm3621 = vmor %vm3619, %vm3620
        %v3622 = vsel %vm3621, %v3613, %v3618
        %v3623 = vmul.f32 %v3593, %v3612
        %v3624 = vmul.f32 %v3594, %v3622
        %v3625 = vmul.f32 %v3595, %v3612
        %v3626 = vmul.f32 %v3596, %v3622
        %v3627 = vmul.f32 %v3597, %v3612
        %v3628 = vmul.f32 %v3598, %v3622
        %v3629 = vmul.f32 %v3599, %v3612
        %v3630 = vmul.f32 %v3600, %v3622
        %3632 = vset.pattern.permute.xlu0 0
        %3633 = vperm.xlu0 %3632, %v552
        %v3634 = vpop.permute.xlu0 %3633
        %3637 = vset.pattern.permute.xlu0 0
        %3638 = vperm.xlu0 %3637, %v553
        %v3639 = vpop.permute.xlu0 %3638
        %3642 = vset.pattern.permute.xlu0 0
        %3643 = vperm.xlu0 %3642, %v554
        %v3644 = vpop.permute.xlu0 %3643
        %3647 = vset.pattern.permute.xlu0 0
        %3648 = vperm.xlu0 %3647, %v555
        %v3649 = vpop.permute.xlu0 %3648
        %v3651 = vmul.f32 %v3623, %v3634
        %v3652 = vmul.f32 %v3624, %v3634
        %v3653 = vmul.f32 %v3625, %v3639
        %v3654 = vmul.f32 %v3626, %v3639
        %v3655 = vmul.f32 %v3627, %v3644
        %v3656 = vmul.f32 %v3628, %v3644
        %v3657 = vmul.f32 %v3629, %v3649
        %v3658 = vmul.f32 %v3630, %v3649
        %3660 = vset.pattern.permute.xlu0 0
        %3661 = vperm.xlu0 %3660, %v572
        %v3662 = vpop.permute.xlu0 %3661
        %3665 = vset.pattern.permute.xlu0 0
        %3666 = vperm.xlu0 %3665, %v573
        %v3667 = vpop.permute.xlu0 %3666
        %3670 = vset.pattern.permute.xlu0 0
        %3671 = vperm.xlu0 %3670, %v574
        %v3672 = vpop.permute.xlu0 %3671
        %3675 = vset.pattern.permute.xlu0 0
        %3676 = vperm.xlu0 %3675, %v575
        %v3677 = vpop.permute.xlu0 %3676
        %v3680 = vsel %vm749, %v568, 0
        %v3683 = vsel %vm749, %v569, 0
        %v3686 = vsel %vm749, %v570, 0
        %v3689 = vsel %vm749, %v571, 0
        %3691 = vmatpush.msra.mxu0 0.0
        %3692 = vmatpush.msra.mxu0 0.0
        %3693 = vmatpush.msra.mxu0 0.0
        %3694 = vmatpush.msra.mxu0 0.0
        %3695 = vmatpush.msra.mxu0 0.0
        %3696 = vmatpush.msra.mxu0 0.0
        %3697 = vmatpush.msra.mxu0 0.0
        %3698 = vmatpush.msra.mxu0 0.0
        %3699 = vmatpush.msra.mxu0 0.0
        %3700 = vmatpush.msra.mxu0 0.0
        %3701 = vmatpush.msra.mxu0 0.0
        %3702 = vmatpush.msra.mxu0 0.0
        %3703 = vmatpush.msra.mxu0 0.0
        %3704 = vmatpush.msra.mxu0 0.0
        %v3705 = vand.u32 %v3653, 4294901760
        %3706 = vmatpush.msra.mxu0 %v3705
        %v3707 = vand.u32 %v3651, 4294901760
        %3708 = vmatpush.msra.mxu0 %v3707
        %v3709 = vand.u32 %v3680, 4294901760
        %v3710 = vsub.f32 %v3680, %v3709
        %v3711 = vand.u32 %v3710, 4294901760
        %v3712 = vsub.f32 %v3710, %v3711
        %v3713 = vand.u32 %v3712, 4294901760
        %3714 = vmatmul.f32.gmra.mxu0 %v3713
        %v3715 = vpop.f32.mrf.mxu0
        %v3716 = vadd.f32 %v3662, %v3715
        %v3717 = vand.u32 %v3683, 4294901760
        %v3718 = vsub.f32 %v3683, %v3717
        %v3719 = vand.u32 %v3718, 4294901760
        %v3720 = vsub.f32 %v3718, %v3719
        %v3721 = vand.u32 %v3720, 4294901760
        %3722 = vmatmul.f32.gmra.mxu0 %v3721
        %v3723 = vpop.f32.mrf.mxu0
        %v3724 = vadd.f32 %v3667, %v3723
        %v3725 = vand.u32 %v3686, 4294901760
        %v3726 = vsub.f32 %v3686, %v3725
        %v3727 = vand.u32 %v3726, 4294901760
        %v3728 = vsub.f32 %v3726, %v3727
        %v3729 = vand.u32 %v3728, 4294901760
        %3730 = vmatmul.f32.gmra.mxu0 %v3729
        %v3731 = vpop.f32.mrf.mxu0
        %v3732 = vadd.f32 %v3672, %v3731
        %v3733 = vand.u32 %v3689, 4294901760
        %v3734 = vsub.f32 %v3689, %v3733
        %v3735 = vand.u32 %v3734, 4294901760
        %v3736 = vsub.f32 %v3734, %v3735
        %v3737 = vand.u32 %v3736, 4294901760
        %3738 = vmatmul.f32.gmra.mxu0 %v3737
        %v3739 = vpop.f32.mrf.mxu0
        %v3740 = vadd.f32 %v3677, %v3739
        %3741 = vdwg.mxu0
        %3742 = vmatpush.msra.mxu0 0.0
        %3743 = vmatpush.msra.mxu0 0.0
        %3744 = vmatpush.msra.mxu0 0.0
        %3745 = vmatpush.msra.mxu0 0.0
        %3746 = vmatpush.msra.mxu0 0.0
        %3747 = vmatpush.msra.mxu0 0.0
        %3748 = vmatpush.msra.mxu0 0.0
        %3749 = vmatpush.msra.mxu0 0.0
        %3750 = vmatpush.msra.mxu0 0.0
        %3751 = vmatpush.msra.mxu0 0.0
        %3752 = vmatpush.msra.mxu0 0.0
        %3753 = vmatpush.msra.mxu0 0.0
        %3754 = vmatpush.msra.mxu0 0.0
        %3755 = vmatpush.msra.mxu0 0.0
        %v3756 = vand.u32 %v3653, 4294901760
        %v3757 = vsub.f32 %v3653, %v3756
        %v3758 = vand.u32 %v3757, 4294901760
        %v3759 = vsub.f32 %v3757, %v3758
        %v3760 = vand.u32 %v3759, 4294901760
        %3761 = vmatpush.msra.mxu0 %v3760
        %v3762 = vand.u32 %v3651, 4294901760
        %v3763 = vsub.f32 %v3651, %v3762
        %v3764 = vand.u32 %v3763, 4294901760
        %v3765 = vsub.f32 %v3763, %v3764
        %v3766 = vand.u32 %v3765, 4294901760
        %3767 = vmatpush.msra.mxu0 %v3766
        %v3768 = vand.u32 %v3680, 4294901760
        %3769 = vmatmul.f32.gmra.mxu0 %v3768
        %v3770 = vpop.f32.mrf.mxu0
        %v3771 = vadd.f32 %v3716, %v3770
        %v3772 = vand.u32 %v3683, 4294901760
        %3773 = vmatmul.f32.gmra.mxu0 %v3772
        %v3774 = vpop.f32.mrf.mxu0
        %v3775 = vadd.f32 %v3724, %v3774
        %v3776 = vand.u32 %v3686, 4294901760
        %3777 = vmatmul.f32.gmra.mxu0 %v3776
        %v3778 = vpop.f32.mrf.mxu0
        %v3779 = vadd.f32 %v3732, %v3778
        %v3780 = vand.u32 %v3689, 4294901760
        %3781 = vmatmul.f32.gmra.mxu0 %v3780
        %v3782 = vpop.f32.mrf.mxu0
        %v3783 = vadd.f32 %v3740, %v3782
        %3784 = vdwg.mxu0
        %3785 = vmatpush.msra.mxu0 0.0
        %3786 = vmatpush.msra.mxu0 0.0
        %3787 = vmatpush.msra.mxu0 0.0
        %3788 = vmatpush.msra.mxu0 0.0
        %3789 = vmatpush.msra.mxu0 0.0
        %3790 = vmatpush.msra.mxu0 0.0
        %3791 = vmatpush.msra.mxu0 0.0
        %3792 = vmatpush.msra.mxu0 0.0
        %3793 = vmatpush.msra.mxu0 0.0
        %3794 = vmatpush.msra.mxu0 0.0
        %3795 = vmatpush.msra.mxu0 0.0
        %3796 = vmatpush.msra.mxu0 0.0
        %3797 = vmatpush.msra.mxu0 0.0
        %3798 = vmatpush.msra.mxu0 0.0
        %v3799 = vand.u32 %v3653, 4294901760
        %v3800 = vsub.f32 %v3653, %v3799
        %3801 = vmatpush.msra.mxu0 %v3800
        %v3802 = vand.u32 %v3651, 4294901760
        %v3803 = vsub.f32 %v3651, %v3802
        %3804 = vmatpush.msra.mxu0 %v3803
        %v3805 = vand.u32 %v3680, 4294901760
        %v3806 = vsub.f32 %v3680, %v3805
        %3807 = vmatmul.f32.gmra.mxu0 %v3806
        %v3808 = vpop.f32.mrf.mxu0
        %v3809 = vadd.f32 %v3771, %v3808
        %v3810 = vand.u32 %v3683, 4294901760
        %v3811 = vsub.f32 %v3683, %v3810
        %3812 = vmatmul.f32.gmra.mxu0 %v3811
        %v3813 = vpop.f32.mrf.mxu0
        %v3814 = vadd.f32 %v3775, %v3813
        %v3815 = vand.u32 %v3686, 4294901760
        %v3816 = vsub.f32 %v3686, %v3815
        %3817 = vmatmul.f32.gmra.mxu0 %v3816
        %v3818 = vpop.f32.mrf.mxu0
        %v3819 = vadd.f32 %v3779, %v3818
        %v3820 = vand.u32 %v3689, 4294901760
        %v3821 = vsub.f32 %v3689, %v3820
        %3822 = vmatmul.f32.gmra.mxu0 %v3821
        %v3823 = vpop.f32.mrf.mxu0
        %v3824 = vadd.f32 %v3783, %v3823
        %3825 = vdwg.mxu0
        %3826 = vmatpush.msra.mxu0 0.0
        %3827 = vmatpush.msra.mxu0 0.0
        %3828 = vmatpush.msra.mxu0 0.0
        %3829 = vmatpush.msra.mxu0 0.0
        %3830 = vmatpush.msra.mxu0 0.0
        %3831 = vmatpush.msra.mxu0 0.0
        %3832 = vmatpush.msra.mxu0 0.0
        %3833 = vmatpush.msra.mxu0 0.0
        %3834 = vmatpush.msra.mxu0 0.0
        %3835 = vmatpush.msra.mxu0 0.0
        %3836 = vmatpush.msra.mxu0 0.0
        %3837 = vmatpush.msra.mxu0 0.0
        %3838 = vmatpush.msra.mxu0 0.0
        %3839 = vmatpush.msra.mxu0 0.0
        %v3840 = vand.u32 %v3653, 4294901760
        %3841 = vmatpush.msra.mxu0 %v3840
        %v3842 = vand.u32 %v3651, 4294901760
        %3843 = vmatpush.msra.mxu0 %v3842
        %v3844 = vand.u32 %v3680, 4294901760
        %v3845 = vsub.f32 %v3680, %v3844
        %v3846 = vand.u32 %v3845, 4294901760
        %3847 = vmatmul.f32.gmra.mxu0 %v3846
        %v3848 = vpop.f32.mrf.mxu0
        %v3849 = vadd.f32 %v3809, %v3848
        %v3850 = vand.u32 %v3683, 4294901760
        %v3851 = vsub.f32 %v3683, %v3850
        %v3852 = vand.u32 %v3851, 4294901760
        %3853 = vmatmul.f32.gmra.mxu0 %v3852
        %v3854 = vpop.f32.mrf.mxu0
        %v3855 = vadd.f32 %v3814, %v3854
        %v3856 = vand.u32 %v3686, 4294901760
        %v3857 = vsub.f32 %v3686, %v3856
        %v3858 = vand.u32 %v3857, 4294901760
        %3859 = vmatmul.f32.gmra.mxu0 %v3858
        %v3860 = vpop.f32.mrf.mxu0
        %v3861 = vadd.f32 %v3819, %v3860
        %v3862 = vand.u32 %v3689, 4294901760
        %v3863 = vsub.f32 %v3689, %v3862
        %v3864 = vand.u32 %v3863, 4294901760
        %3865 = vmatmul.f32.gmra.mxu0 %v3864
        %v3866 = vpop.f32.mrf.mxu0
        %v3867 = vadd.f32 %v3824, %v3866
        %3868 = vdwg.mxu0
        %3869 = vmatpush.msra.mxu0 0.0
        %3870 = vmatpush.msra.mxu0 0.0
        %3871 = vmatpush.msra.mxu0 0.0
        %3872 = vmatpush.msra.mxu0 0.0
        %3873 = vmatpush.msra.mxu0 0.0
        %3874 = vmatpush.msra.mxu0 0.0
        %3875 = vmatpush.msra.mxu0 0.0
        %3876 = vmatpush.msra.mxu0 0.0
        %3877 = vmatpush.msra.mxu0 0.0
        %3878 = vmatpush.msra.mxu0 0.0
        %3879 = vmatpush.msra.mxu0 0.0
        %3880 = vmatpush.msra.mxu0 0.0
        %3881 = vmatpush.msra.mxu0 0.0
        %3882 = vmatpush.msra.mxu0 0.0
        %v3883 = vand.u32 %v3653, 4294901760
        %v3884 = vsub.f32 %v3653, %v3883
        %v3885 = vand.u32 %v3884, 4294901760
        %3886 = vmatpush.msra.mxu0 %v3885
        %v3887 = vand.u32 %v3651, 4294901760
        %v3888 = vsub.f32 %v3651, %v3887
        %v3889 = vand.u32 %v3888, 4294901760
        %3890 = vmatpush.msra.mxu0 %v3889
        %v3891 = vand.u32 %v3680, 4294901760
        %3892 = vmatmul.f32.gmra.mxu0 %v3891
        %v3893 = vpop.f32.mrf.mxu0
        %v3894 = vadd.f32 %v3849, %v3893
        %v3895 = vand.u32 %v3683, 4294901760
        %3896 = vmatmul.f32.gmra.mxu0 %v3895
        %v3897 = vpop.f32.mrf.mxu0
        %v3898 = vadd.f32 %v3855, %v3897
        %v3899 = vand.u32 %v3686, 4294901760
        %3900 = vmatmul.f32.gmra.mxu0 %v3899
        %v3901 = vpop.f32.mrf.mxu0
        %v3902 = vadd.f32 %v3861, %v3901
        %v3903 = vand.u32 %v3689, 4294901760
        %3904 = vmatmul.f32.gmra.mxu0 %v3903
        %v3905 = vpop.f32.mrf.mxu0
        %v3906 = vadd.f32 %v3867, %v3905
        %3907 = vdwg.mxu0
        %3908 = vmatpush.msra.mxu0 0.0
        %3909 = vmatpush.msra.mxu0 0.0
        %3910 = vmatpush.msra.mxu0 0.0
        %3911 = vmatpush.msra.mxu0 0.0
        %3912 = vmatpush.msra.mxu0 0.0
        %3913 = vmatpush.msra.mxu0 0.0
        %3914 = vmatpush.msra.mxu0 0.0
        %3915 = vmatpush.msra.mxu0 0.0
        %3916 = vmatpush.msra.mxu0 0.0
        %3917 = vmatpush.msra.mxu0 0.0
        %3918 = vmatpush.msra.mxu0 0.0
        %3919 = vmatpush.msra.mxu0 0.0
        %3920 = vmatpush.msra.mxu0 0.0
        %3921 = vmatpush.msra.mxu0 0.0
        %v3922 = vand.u32 %v3653, 4294901760
        %3923 = vmatpush.msra.mxu0 %v3922
        %v3924 = vand.u32 %v3651, 4294901760
        %3925 = vmatpush.msra.mxu0 %v3924
        %v3926 = vand.u32 %v3680, 4294901760
        %3927 = vmatmul.f32.gmra.mxu0 %v3926
        %v3928 = vpop.f32.mrf.mxu0
        %v3929 = vadd.f32 %v3894, %v3928
        %v3930 = vand.u32 %v3683, 4294901760
        %3931 = vmatmul.f32.gmra.mxu0 %v3930
        %v3932 = vpop.f32.mrf.mxu0
        %v3933 = vadd.f32 %v3898, %v3932
        %v3934 = vand.u32 %v3686, 4294901760
        %3935 = vmatmul.f32.gmra.mxu0 %v3934
        %v3936 = vpop.f32.mrf.mxu0
        %v3937 = vadd.f32 %v3902, %v3936
        %v3938 = vand.u32 %v3689, 4294901760
        %3939 = vmatmul.f32.gmra.mxu0 %v3938
        %v3940 = vpop.f32.mrf.mxu0
        %v3941 = vadd.f32 %v3906, %v3940
        %3942 = vdwg.mxu0
        %3943 = vmatpush.msra.mxu0 0.0
        %3944 = vmatpush.msra.mxu0 0.0
        %3945 = vmatpush.msra.mxu0 0.0
        %3946 = vmatpush.msra.mxu0 0.0
        %3947 = vmatpush.msra.mxu0 0.0
        %3948 = vmatpush.msra.mxu0 0.0
        %3949 = vmatpush.msra.mxu0 0.0
        %3950 = vmatpush.msra.mxu0 0.0
        %3951 = vmatpush.msra.mxu0 0.0
        %3952 = vmatpush.msra.mxu0 0.0
        %3953 = vmatpush.msra.mxu0 0.0
        %3954 = vmatpush.msra.mxu0 0.0
        %3955 = vmatpush.msra.mxu0 0.0
        %3956 = vmatpush.msra.mxu0 0.0
        %v3957 = vand.u32 %v3654, 4294901760
        %3958 = vmatpush.msra.mxu0 %v3957
        %v3959 = vand.u32 %v3652, 4294901760
        %3960 = vmatpush.msra.mxu0 %v3959
        %v3961 = vand.u32 %v3680, 4294901760
        %v3962 = vsub.f32 %v3680, %v3961
        %v3963 = vand.u32 %v3962, 4294901760
        %v3964 = vsub.f32 %v3962, %v3963
        %v3965 = vand.u32 %v3964, 4294901760
        %3966 = vmatmul.f32.gmra.mxu0 %v3965
        %v3967 = vpop.f32.mrf.mxu0
        %v3968 = vadd.f32 %v3662, %v3967
        %v3969 = vand.u32 %v3683, 4294901760
        %v3970 = vsub.f32 %v3683, %v3969
        %v3971 = vand.u32 %v3970, 4294901760
        %v3972 = vsub.f32 %v3970, %v3971
        %v3973 = vand.u32 %v3972, 4294901760
        %3974 = vmatmul.f32.gmra.mxu0 %v3973
        %v3975 = vpop.f32.mrf.mxu0
        %v3976 = vadd.f32 %v3667, %v3975
        %v3977 = vand.u32 %v3686, 4294901760
        %v3978 = vsub.f32 %v3686, %v3977
        %v3979 = vand.u32 %v3978, 4294901760
        %v3980 = vsub.f32 %v3978, %v3979
        %v3981 = vand.u32 %v3980, 4294901760
        %3982 = vmatmul.f32.gmra.mxu0 %v3981
        %v3983 = vpop.f32.mrf.mxu0
        %v3984 = vadd.f32 %v3672, %v3983
        %v3985 = vand.u32 %v3689, 4294901760
        %v3986 = vsub.f32 %v3689, %v3985
        %v3987 = vand.u32 %v3986, 4294901760
        %v3988 = vsub.f32 %v3986, %v3987
        %v3989 = vand.u32 %v3988, 4294901760
        %3990 = vmatmul.f32.gmra.mxu0 %v3989
        %v3991 = vpop.f32.mrf.mxu0
        %v3992 = vadd.f32 %v3677, %v3991
        %3993 = vdwg.mxu0
        %3994 = vmatpush.msra.mxu0 0.0
        %3995 = vmatpush.msra.mxu0 0.0
        %3996 = vmatpush.msra.mxu0 0.0
        %3997 = vmatpush.msra.mxu0 0.0
        %3998 = vmatpush.msra.mxu0 0.0
        %3999 = vmatpush.msra.mxu0 0.0
        %4000 = vmatpush.msra.mxu0 0.0
        %4001 = vmatpush.msra.mxu0 0.0
        %4002 = vmatpush.msra.mxu0 0.0
        %4003 = vmatpush.msra.mxu0 0.0
        %4004 = vmatpush.msra.mxu0 0.0
        %4005 = vmatpush.msra.mxu0 0.0
        %4006 = vmatpush.msra.mxu0 0.0
        %4007 = vmatpush.msra.mxu0 0.0
        %v4008 = vand.u32 %v3654, 4294901760
        %v4009 = vsub.f32 %v3654, %v4008
        %v4010 = vand.u32 %v4009, 4294901760
        %v4011 = vsub.f32 %v4009, %v4010
        %v4012 = vand.u32 %v4011, 4294901760
        %4013 = vmatpush.msra.mxu0 %v4012
        %v4014 = vand.u32 %v3652, 4294901760
        %v4015 = vsub.f32 %v3652, %v4014
        %v4016 = vand.u32 %v4015, 4294901760
        %v4017 = vsub.f32 %v4015, %v4016
        %v4018 = vand.u32 %v4017, 4294901760
        %4019 = vmatpush.msra.mxu0 %v4018
        %v4020 = vand.u32 %v3680, 4294901760
        %4021 = vmatmul.f32.gmra.mxu0 %v4020
        %v4022 = vpop.f32.mrf.mxu0
        %v4023 = vadd.f32 %v3968, %v4022
        %v4024 = vand.u32 %v3683, 4294901760
        %4025 = vmatmul.f32.gmra.mxu0 %v4024
        %v4026 = vpop.f32.mrf.mxu0
        %v4027 = vadd.f32 %v3976, %v4026
        %v4028 = vand.u32 %v3686, 4294901760
        %4029 = vmatmul.f32.gmra.mxu0 %v4028
        %v4030 = vpop.f32.mrf.mxu0
        %v4031 = vadd.f32 %v3984, %v4030
        %v4032 = vand.u32 %v3689, 4294901760
        %4033 = vmatmul.f32.gmra.mxu0 %v4032
        %v4034 = vpop.f32.mrf.mxu0
        %v4035 = vadd.f32 %v3992, %v4034
        %4036 = vdwg.mxu0
        %4037 = vmatpush.msra.mxu0 0.0
        %4038 = vmatpush.msra.mxu0 0.0
        %4039 = vmatpush.msra.mxu0 0.0
        %4040 = vmatpush.msra.mxu0 0.0
        %4041 = vmatpush.msra.mxu0 0.0
        %4042 = vmatpush.msra.mxu0 0.0
        %4043 = vmatpush.msra.mxu0 0.0
        %4044 = vmatpush.msra.mxu0 0.0
        %4045 = vmatpush.msra.mxu0 0.0
        %4046 = vmatpush.msra.mxu0 0.0
        %4047 = vmatpush.msra.mxu0 0.0
        %4048 = vmatpush.msra.mxu0 0.0
        %4049 = vmatpush.msra.mxu0 0.0
        %4050 = vmatpush.msra.mxu0 0.0
        %v4051 = vand.u32 %v3654, 4294901760
        %v4052 = vsub.f32 %v3654, %v4051
        %4053 = vmatpush.msra.mxu0 %v4052
        %v4054 = vand.u32 %v3652, 4294901760
        %v4055 = vsub.f32 %v3652, %v4054
        %4056 = vmatpush.msra.mxu0 %v4055
        %v4057 = vand.u32 %v3680, 4294901760
        %v4058 = vsub.f32 %v3680, %v4057
        %4059 = vmatmul.f32.gmra.mxu0 %v4058
        %v4060 = vpop.f32.mrf.mxu0
        %v4061 = vadd.f32 %v4023, %v4060
        %v4062 = vand.u32 %v3683, 4294901760
        %v4063 = vsub.f32 %v3683, %v4062
        %4064 = vmatmul.f32.gmra.mxu0 %v4063
        %v4065 = vpop.f32.mrf.mxu0
        %v4066 = vadd.f32 %v4027, %v4065
        %v4067 = vand.u32 %v3686, 4294901760
        %v4068 = vsub.f32 %v3686, %v4067
        %4069 = vmatmul.f32.gmra.mxu0 %v4068
        %v4070 = vpop.f32.mrf.mxu0
        %v4071 = vadd.f32 %v4031, %v4070
        %v4072 = vand.u32 %v3689, 4294901760
        %v4073 = vsub.f32 %v3689, %v4072
        %4074 = vmatmul.f32.gmra.mxu0 %v4073
        %v4075 = vpop.f32.mrf.mxu0
        %v4076 = vadd.f32 %v4035, %v4075
        %4077 = vdwg.mxu0
        %4078 = vmatpush.msra.mxu0 0.0
        %4079 = vmatpush.msra.mxu0 0.0
        %4080 = vmatpush.msra.mxu0 0.0
        %4081 = vmatpush.msra.mxu0 0.0
        %4082 = vmatpush.msra.mxu0 0.0
        %4083 = vmatpush.msra.mxu0 0.0
        %4084 = vmatpush.msra.mxu0 0.0
        %4085 = vmatpush.msra.mxu0 0.0
        %4086 = vmatpush.msra.mxu0 0.0
        %4087 = vmatpush.msra.mxu0 0.0
        %4088 = vmatpush.msra.mxu0 0.0
        %4089 = vmatpush.msra.mxu0 0.0
        %4090 = vmatpush.msra.mxu0 0.0
        %4091 = vmatpush.msra.mxu0 0.0
        %v4092 = vand.u32 %v3654, 4294901760
        %4093 = vmatpush.msra.mxu0 %v4092
        %v4094 = vand.u32 %v3652, 4294901760
        %4095 = vmatpush.msra.mxu0 %v4094
        %v4096 = vand.u32 %v3680, 4294901760
        %v4097 = vsub.f32 %v3680, %v4096
        %v4098 = vand.u32 %v4097, 4294901760
        %4099 = vmatmul.f32.gmra.mxu0 %v4098
        %v4100 = vpop.f32.mrf.mxu0
        %v4101 = vadd.f32 %v4061, %v4100
        %v4102 = vand.u32 %v3683, 4294901760
        %v4103 = vsub.f32 %v3683, %v4102
        %v4104 = vand.u32 %v4103, 4294901760
        %4105 = vmatmul.f32.gmra.mxu0 %v4104
        %v4106 = vpop.f32.mrf.mxu0
        %v4107 = vadd.f32 %v4066, %v4106
        %v4108 = vand.u32 %v3686, 4294901760
        %v4109 = vsub.f32 %v3686, %v4108
        %v4110 = vand.u32 %v4109, 4294901760
        %4111 = vmatmul.f32.gmra.mxu0 %v4110
        %v4112 = vpop.f32.mrf.mxu0
        %v4113 = vadd.f32 %v4071, %v4112
        %v4114 = vand.u32 %v3689, 4294901760
        %v4115 = vsub.f32 %v3689, %v4114
        %v4116 = vand.u32 %v4115, 4294901760
        %4117 = vmatmul.f32.gmra.mxu0 %v4116
        %v4118 = vpop.f32.mrf.mxu0
        %v4119 = vadd.f32 %v4076, %v4118
        %4120 = vdwg.mxu0
        %4121 = vmatpush.msra.mxu0 0.0
        %4122 = vmatpush.msra.mxu0 0.0
        %4123 = vmatpush.msra.mxu0 0.0
        %4124 = vmatpush.msra.mxu0 0.0
        %4125 = vmatpush.msra.mxu0 0.0
        %4126 = vmatpush.msra.mxu0 0.0
        %4127 = vmatpush.msra.mxu0 0.0
        %4128 = vmatpush.msra.mxu0 0.0
        %4129 = vmatpush.msra.mxu0 0.0
        %4130 = vmatpush.msra.mxu0 0.0
        %4131 = vmatpush.msra.mxu0 0.0
        %4132 = vmatpush.msra.mxu0 0.0
        %4133 = vmatpush.msra.mxu0 0.0
        %4134 = vmatpush.msra.mxu0 0.0
        %v4135 = vand.u32 %v3654, 4294901760
        %v4136 = vsub.f32 %v3654, %v4135
        %v4137 = vand.u32 %v4136, 4294901760
        %4138 = vmatpush.msra.mxu0 %v4137
        %v4139 = vand.u32 %v3652, 4294901760
        %v4140 = vsub.f32 %v3652, %v4139
        %v4141 = vand.u32 %v4140, 4294901760
        %4142 = vmatpush.msra.mxu0 %v4141
        %v4143 = vand.u32 %v3680, 4294901760
        %4144 = vmatmul.f32.gmra.mxu0 %v4143
        %v4145 = vpop.f32.mrf.mxu0
        %v4146 = vadd.f32 %v4101, %v4145
        %v4147 = vand.u32 %v3683, 4294901760
        %4148 = vmatmul.f32.gmra.mxu0 %v4147
        %v4149 = vpop.f32.mrf.mxu0
        %v4150 = vadd.f32 %v4107, %v4149
        %v4151 = vand.u32 %v3686, 4294901760
        %4152 = vmatmul.f32.gmra.mxu0 %v4151
        %v4153 = vpop.f32.mrf.mxu0
        %v4154 = vadd.f32 %v4113, %v4153
        %v4155 = vand.u32 %v3689, 4294901760
        %4156 = vmatmul.f32.gmra.mxu0 %v4155
        %v4157 = vpop.f32.mrf.mxu0
        %v4158 = vadd.f32 %v4119, %v4157
        %4159 = vdwg.mxu0
        %4160 = vmatpush.msra.mxu0 0.0
        %4161 = vmatpush.msra.mxu0 0.0
        %4162 = vmatpush.msra.mxu0 0.0
        %4163 = vmatpush.msra.mxu0 0.0
        %4164 = vmatpush.msra.mxu0 0.0
        %4165 = vmatpush.msra.mxu0 0.0
        %4166 = vmatpush.msra.mxu0 0.0
        %4167 = vmatpush.msra.mxu0 0.0
        %4168 = vmatpush.msra.mxu0 0.0
        %4169 = vmatpush.msra.mxu0 0.0
        %4170 = vmatpush.msra.mxu0 0.0
        %4171 = vmatpush.msra.mxu0 0.0
        %4172 = vmatpush.msra.mxu0 0.0
        %4173 = vmatpush.msra.mxu0 0.0
        %v4174 = vand.u32 %v3654, 4294901760
        %4175 = vmatpush.msra.mxu0 %v4174
        %v4176 = vand.u32 %v3652, 4294901760
        %4177 = vmatpush.msra.mxu0 %v4176
        %v4178 = vand.u32 %v3680, 4294901760
        %4179 = vmatmul.f32.gmra.mxu0 %v4178
        %v4180 = vpop.f32.mrf.mxu0
        %v4181 = vadd.f32 %v4146, %v4180
        %v4182 = vand.u32 %v3683, 4294901760
        %4183 = vmatmul.f32.gmra.mxu0 %v4182
        %v4184 = vpop.f32.mrf.mxu0
        %v4185 = vadd.f32 %v4150, %v4184
        %v4186 = vand.u32 %v3686, 4294901760
        %4187 = vmatmul.f32.gmra.mxu0 %v4186
        %v4188 = vpop.f32.mrf.mxu0
        %v4189 = vadd.f32 %v4154, %v4188
        %v4190 = vand.u32 %v3689, 4294901760
        %4191 = vmatmul.f32.gmra.mxu0 %v4190
        %v4192 = vpop.f32.mrf.mxu0
        %v4193 = vadd.f32 %v4158, %v4192
        %4194 = vdwg.mxu0
        %v4195 = vxor.u32 %v3929, 2147483648
        %v4196 = vxor.u32 %v4181, 2147483648
        %v4197 = vxor.u32 %v3933, 2147483648
        %v4198 = vxor.u32 %v4185, 2147483648
        %v4199 = vxor.u32 %v3937, 2147483648
        %v4200 = vxor.u32 %v4189, 2147483648
        %v4201 = vxor.u32 %v3941, 2147483648
        %v4202 = vxor.u32 %v4193, 2147483648
        %v4203 = vmul.f32 %v4195, 1.442695
        %v4204 = vpow.pop %v4203
        %v4205 = vmul.f32 %v4196, 1.442695
        %v4206 = vpow.pop %v4205
        %v4207 = vmul.f32 %v4197, 1.442695
        %v4208 = vpow.pop %v4207
        %v4209 = vmul.f32 %v4198, 1.442695
        %v4210 = vpow.pop %v4209
        %v4211 = vmul.f32 %v4199, 1.442695
        %v4212 = vpow.pop %v4211
        %v4213 = vmul.f32 %v4200, 1.442695
        %v4214 = vpow.pop %v4213
        %v4215 = vmul.f32 %v4201, 1.442695
        %v4216 = vpow.pop %v4215
        %v4217 = vmul.f32 %v4202, 1.442695
        %v4218 = vpow.pop %v4217
        %v4219 = vadd.f32 %v4204, 1.0
        %v4220 = vadd.f32 %v4206, 1.0
        %v4221 = vadd.f32 %v4208, 1.0
        %v4222 = vadd.f32 %v4210, 1.0
        %v4223 = vadd.f32 %v4212, 1.0
        %v4224 = vadd.f32 %v4214, 1.0
        %v4225 = vadd.f32 %v4216, 1.0
        %v4226 = vadd.f32 %v4218, 1.0
        %v4227 = vrcp.pop %v4219
        %v4228 = vmul.f32 %v4219, %v4227
        %v4229 = vsub.f32 1.0, %v4228
        %v4230 = vmul.f32 %v4227, %v4229
        %v4231 = vadd.f32 %v4227, %v4230
        %vm4232 = vweird.f32 %v4219
        %vm4233 = vweird.f32 %v4227
        %vm4234 = vmor %vm4232, %vm4233
        %v4235 = vsel %vm4234, %v4227, %v4231
        %v4236 = vand.u32 2147483647, %v4219
        %vm4237 = vcmp.eq.f32.partialorder %v4236, 8.507059e+37
        %v4238 = vand.u32 %v4219, 2147483648
        %v4239 = vor.u32 1.1754944e-38, %v4238
        %v4240 = vsel %vm4237, %v4239, %v4235
        %v4241 = vmul.f32 1.0, %v4240
        %v4242 = vrcp.pop %v4220
        %v4243 = vmul.f32 %v4220, %v4242
        %v4244 = vsub.f32 1.0, %v4243
        %v4245 = vmul.f32 %v4242, %v4244
        %v4246 = vadd.f32 %v4242, %v4245
        %vm4247 = vweird.f32 %v4220
        %vm4248 = vweird.f32 %v4242
        %vm4249 = vmor %vm4247, %vm4248
        %v4250 = vsel %vm4249, %v4242, %v4246
        %v4251 = vand.u32 2147483647, %v4220
        %vm4252 = vcmp.eq.f32.partialorder %v4251, 8.507059e+37
        %v4253 = vand.u32 %v4220, 2147483648
        %v4254 = vor.u32 1.1754944e-38, %v4253
        %v4255 = vsel %vm4252, %v4254, %v4250
        %v4256 = vmul.f32 1.0, %v4255
        %v4257 = vrcp.pop %v4221
        %v4258 = vmul.f32 %v4221, %v4257
        %v4259 = vsub.f32 1.0, %v4258
        %v4260 = vmul.f32 %v4257, %v4259
        %v4261 = vadd.f32 %v4257, %v4260
        %vm4262 = vweird.f32 %v4221
        %vm4263 = vweird.f32 %v4257
        %vm4264 = vmor %vm4262, %vm4263
        %v4265 = vsel %vm4264, %v4257, %v4261
        %v4266 = vand.u32 2147483647, %v4221
        %vm4267 = vcmp.eq.f32.partialorder %v4266, 8.507059e+37
        %v4268 = vand.u32 %v4221, 2147483648
        %v4269 = vor.u32 1.1754944e-38, %v4268
        %v4270 = vsel %vm4267, %v4269, %v4265
        %v4271 = vmul.f32 1.0, %v4270
        %v4272 = vrcp.pop %v4222
        %v4273 = vmul.f32 %v4222, %v4272
        %v4274 = vsub.f32 1.0, %v4273
        %v4275 = vmul.f32 %v4272, %v4274
        %v4276 = vadd.f32 %v4272, %v4275
        %vm4277 = vweird.f32 %v4222
        %vm4278 = vweird.f32 %v4272
        %vm4279 = vmor %vm4277, %vm4278
        %v4280 = vsel %vm4279, %v4272, %v4276
        %v4281 = vand.u32 2147483647, %v4222
        %vm4282 = vcmp.eq.f32.partialorder %v4281, 8.507059e+37
        %v4283 = vand.u32 %v4222, 2147483648
        %v4284 = vor.u32 1.1754944e-38, %v4283
        %v4285 = vsel %vm4282, %v4284, %v4280
        %v4286 = vmul.f32 1.0, %v4285
        %v4287 = vrcp.pop %v4223
        %v4288 = vmul.f32 %v4223, %v4287
        %v4289 = vsub.f32 1.0, %v4288
        %v4290 = vmul.f32 %v4287, %v4289
        %v4291 = vadd.f32 %v4287, %v4290
        %vm4292 = vweird.f32 %v4223
        %vm4293 = vweird.f32 %v4287
        %vm4294 = vmor %vm4292, %vm4293
        %v4295 = vsel %vm4294, %v4287, %v4291
        %v4296 = vand.u32 2147483647, %v4223
        %vm4297 = vcmp.eq.f32.partialorder %v4296, 8.507059e+37
        %v4298 = vand.u32 %v4223, 2147483648
        %v4299 = vor.u32 1.1754944e-38, %v4298
        %v4300 = vsel %vm4297, %v4299, %v4295
        %v4301 = vmul.f32 1.0, %v4300
        %v4302 = vrcp.pop %v4224
        %v4303 = vmul.f32 %v4224, %v4302
        %v4304 = vsub.f32 1.0, %v4303
        %v4305 = vmul.f32 %v4302, %v4304
        %v4306 = vadd.f32 %v4302, %v4305
        %vm4307 = vweird.f32 %v4224
        %vm4308 = vweird.f32 %v4302
        %vm4309 = vmor %vm4307, %vm4308
        %v4310 = vsel %vm4309, %v4302, %v4306
        %v4311 = vand.u32 2147483647, %v4224
        %vm4312 = vcmp.eq.f32.partialorder %v4311, 8.507059e+37
        %v4313 = vand.u32 %v4224, 2147483648
        %v4314 = vor.u32 1.1754944e-38, %v4313
        %v4315 = vsel %vm4312, %v4314, %v4310
        %v4316 = vmul.f32 1.0, %v4315
        %v4317 = vrcp.pop %v4225
        %v4318 = vmul.f32 %v4225, %v4317
        %v4319 = vsub.f32 1.0, %v4318
        %v4320 = vmul.f32 %v4317, %v4319
        %v4321 = vadd.f32 %v4317, %v4320
        %vm4322 = vweird.f32 %v4225
        %vm4323 = vweird.f32 %v4317
        %vm4324 = vmor %vm4322, %vm4323
        %v4325 = vsel %vm4324, %v4317, %v4321
        %v4326 = vand.u32 2147483647, %v4225
        %vm4327 = vcmp.eq.f32.partialorder %v4326, 8.507059e+37
        %v4328 = vand.u32 %v4225, 2147483648
        %v4329 = vor.u32 1.1754944e-38, %v4328
        %v4330 = vsel %vm4327, %v4329, %v4325
        %v4331 = vmul.f32 1.0, %v4330
        %v4332 = vrcp.pop %v4226
        %v4333 = vmul.f32 %v4226, %v4332
        %v4334 = vsub.f32 1.0, %v4333
        %v4335 = vmul.f32 %v4332, %v4334
        %v4336 = vadd.f32 %v4332, %v4335
        %vm4337 = vweird.f32 %v4226
        %vm4338 = vweird.f32 %v4332
        %vm4339 = vmor %vm4337, %vm4338
        %v4340 = vsel %vm4339, %v4332, %v4336
        %v4341 = vand.u32 2147483647, %v4226
        %vm4342 = vcmp.eq.f32.partialorder %v4341, 8.507059e+37
        %v4343 = vand.u32 %v4226, 2147483648
        %v4344 = vor.u32 1.1754944e-38, %v4343
        %v4345 = vsel %vm4342, %v4344, %v4340
        %v4346 = vmul.f32 1.0, %v4345
        %v4347 = vmul.f32 %v3929, %v4241
        %v4348 = vmul.f32 %v4181, %v4256
        %v4349 = vmul.f32 %v3933, %v4271
        %v4350 = vmul.f32 %v4185, %v4286
        %v4351 = vmul.f32 %v3937, %v4301
        %v4352 = vmul.f32 %v4189, %v4316
        %v4353 = vmul.f32 %v3941, %v4331
        %v4354 = vmul.f32 %v4193, %v4346
        %4356 = vset.pattern.permute.xlu0 0
        %4357 = vperm.xlu0 %4356, %v578
        %v4358 = vpop.permute.xlu0 %4357
        %4361 = vset.pattern.permute.xlu0 0
        %4362 = vperm.xlu0 %4361, %v579
        %v4363 = vpop.permute.xlu0 %4362
        %v4366 = vsel %vm1436, %v576, 0
        %v4369 = vsel %vm1436, %v577, 0
        %4371 = vmatpush.msra.mxu0 0.0
        %4372 = vmatpush.msra.mxu0 0.0
        %4373 = vmatpush.msra.mxu0 0.0
        %4374 = vmatpush.msra.mxu0 0.0
        %4375 = vmatpush.msra.mxu0 0.0
        %4376 = vmatpush.msra.mxu0 0.0
        %4377 = vmatpush.msra.mxu0 0.0
        %4378 = vmatpush.msra.mxu0 0.0
        %4379 = vmatpush.msra.mxu0 0.0
        %4380 = vmatpush.msra.mxu0 0.0
        %4381 = vmatpush.msra.mxu0 0.0
        %4382 = vmatpush.msra.mxu0 0.0
        %v4383 = vand.u32 %v4353, 4294901760
        %4384 = vmatpush.msra.mxu0 %v4383
        %v4385 = vand.u32 %v4351, 4294901760
        %4386 = vmatpush.msra.mxu0 %v4385
        %v4387 = vand.u32 %v4349, 4294901760
        %4388 = vmatpush.msra.mxu0 %v4387
        %v4389 = vand.u32 %v4347, 4294901760
        %4390 = vmatpush.msra.mxu0 %v4389
        %v4391 = vand.u32 %v4366, 4294901760
        %v4392 = vsub.f32 %v4366, %v4391
        %v4393 = vand.u32 %v4392, 4294901760
        %v4394 = vsub.f32 %v4392, %v4393
        %v4395 = vand.u32 %v4394, 4294901760
        %4396 = vmatmul.f32.gmra.mxu0 %v4395
        %v4397 = vpop.f32.mrf.mxu0
        %v4398 = vadd.f32 %v4358, %v4397
        %v4399 = vand.u32 %v4369, 4294901760
        %v4400 = vsub.f32 %v4369, %v4399
        %v4401 = vand.u32 %v4400, 4294901760
        %v4402 = vsub.f32 %v4400, %v4401
        %v4403 = vand.u32 %v4402, 4294901760
        %4404 = vmatmul.f32.gmra.mxu0 %v4403
        %v4405 = vpop.f32.mrf.mxu0
        %v4406 = vadd.f32 %v4363, %v4405
        %4407 = vdwg.mxu0
        %4408 = vmatpush.msra.mxu0 0.0
        %4409 = vmatpush.msra.mxu0 0.0
        %4410 = vmatpush.msra.mxu0 0.0
        %4411 = vmatpush.msra.mxu0 0.0
        %4412 = vmatpush.msra.mxu0 0.0
        %4413 = vmatpush.msra.mxu0 0.0
        %4414 = vmatpush.msra.mxu0 0.0
        %4415 = vmatpush.msra.mxu0 0.0
        %4416 = vmatpush.msra.mxu0 0.0
        %4417 = vmatpush.msra.mxu0 0.0
        %4418 = vmatpush.msra.mxu0 0.0
        %4419 = vmatpush.msra.mxu0 0.0
        %v4420 = vand.u32 %v4353, 4294901760
        %v4421 = vsub.f32 %v4353, %v4420
        %v4422 = vand.u32 %v4421, 4294901760
        %v4423 = vsub.f32 %v4421, %v4422
        %v4424 = vand.u32 %v4423, 4294901760
        %4425 = vmatpush.msra.mxu0 %v4424
        %v4426 = vand.u32 %v4351, 4294901760
        %v4427 = vsub.f32 %v4351, %v4426
        %v4428 = vand.u32 %v4427, 4294901760
        %v4429 = vsub.f32 %v4427, %v4428
        %v4430 = vand.u32 %v4429, 4294901760
        %4431 = vmatpush.msra.mxu0 %v4430
        %v4432 = vand.u32 %v4349, 4294901760
        %v4433 = vsub.f32 %v4349, %v4432
        %v4434 = vand.u32 %v4433, 4294901760
        %v4435 = vsub.f32 %v4433, %v4434
        %v4436 = vand.u32 %v4435, 4294901760
        %4437 = vmatpush.msra.mxu0 %v4436
        %v4438 = vand.u32 %v4347, 4294901760
        %v4439 = vsub.f32 %v4347, %v4438
        %v4440 = vand.u32 %v4439, 4294901760
        %v4441 = vsub.f32 %v4439, %v4440
        %v4442 = vand.u32 %v4441, 4294901760
        %4443 = vmatpush.msra.mxu0 %v4442
        %v4444 = vand.u32 %v4366, 4294901760
        %4445 = vmatmul.f32.gmra.mxu0 %v4444
        %v4446 = vpop.f32.mrf.mxu0
        %v4447 = vadd.f32 %v4398, %v4446
        %v4448 = vand.u32 %v4369, 4294901760
        %4449 = vmatmul.f32.gmra.mxu0 %v4448
        %v4450 = vpop.f32.mrf.mxu0
        %v4451 = vadd.f32 %v4406, %v4450
        %4452 = vdwg.mxu0
        %4453 = vmatpush.msra.mxu0 0.0
        %4454 = vmatpush.msra.mxu0 0.0
        %4455 = vmatpush.msra.mxu0 0.0
        %4456 = vmatpush.msra.mxu0 0.0
        %4457 = vmatpush.msra.mxu0 0.0
        %4458 = vmatpush.msra.mxu0 0.0
        %4459 = vmatpush.msra.mxu0 0.0
        %4460 = vmatpush.msra.mxu0 0.0
        %4461 = vmatpush.msra.mxu0 0.0
        %4462 = vmatpush.msra.mxu0 0.0
        %4463 = vmatpush.msra.mxu0 0.0
        %4464 = vmatpush.msra.mxu0 0.0
        %v4465 = vand.u32 %v4353, 4294901760
        %v4466 = vsub.f32 %v4353, %v4465
        %4467 = vmatpush.msra.mxu0 %v4466
        %v4468 = vand.u32 %v4351, 4294901760
        %v4469 = vsub.f32 %v4351, %v4468
        %4470 = vmatpush.msra.mxu0 %v4469
        %v4471 = vand.u32 %v4349, 4294901760
        %v4472 = vsub.f32 %v4349, %v4471
        %4473 = vmatpush.msra.mxu0 %v4472
        %v4474 = vand.u32 %v4347, 4294901760
        %v4475 = vsub.f32 %v4347, %v4474
        %4476 = vmatpush.msra.mxu0 %v4475
        %v4477 = vand.u32 %v4366, 4294901760
        %v4478 = vsub.f32 %v4366, %v4477
        %4479 = vmatmul.f32.gmra.mxu0 %v4478
        %v4480 = vpop.f32.mrf.mxu0
        %v4481 = vadd.f32 %v4447, %v4480
        %v4482 = vand.u32 %v4369, 4294901760
        %v4483 = vsub.f32 %v4369, %v4482
        %4484 = vmatmul.f32.gmra.mxu0 %v4483
        %v4485 = vpop.f32.mrf.mxu0
        %v4486 = vadd.f32 %v4451, %v4485
        %4487 = vdwg.mxu0
        %4488 = vmatpush.msra.mxu0 0.0
        %4489 = vmatpush.msra.mxu0 0.0
        %4490 = vmatpush.msra.mxu0 0.0
        %4491 = vmatpush.msra.mxu0 0.0
        %4492 = vmatpush.msra.mxu0 0.0
        %4493 = vmatpush.msra.mxu0 0.0
        %4494 = vmatpush.msra.mxu0 0.0
        %4495 = vmatpush.msra.mxu0 0.0
        %4496 = vmatpush.msra.mxu0 0.0
        %4497 = vmatpush.msra.mxu0 0.0
        %4498 = vmatpush.msra.mxu0 0.0
        %4499 = vmatpush.msra.mxu0 0.0
        %v4500 = vand.u32 %v4353, 4294901760
        %4501 = vmatpush.msra.mxu0 %v4500
        %v4502 = vand.u32 %v4351, 4294901760
        %4503 = vmatpush.msra.mxu0 %v4502
        %v4504 = vand.u32 %v4349, 4294901760
        %4505 = vmatpush.msra.mxu0 %v4504
        %v4506 = vand.u32 %v4347, 4294901760
        %4507 = vmatpush.msra.mxu0 %v4506
        %v4508 = vand.u32 %v4366, 4294901760
        %v4509 = vsub.f32 %v4366, %v4508
        %v4510 = vand.u32 %v4509, 4294901760
        %4511 = vmatmul.f32.gmra.mxu0 %v4510
        %v4512 = vpop.f32.mrf.mxu0
        %v4513 = vadd.f32 %v4481, %v4512
        %v4514 = vand.u32 %v4369, 4294901760
        %v4515 = vsub.f32 %v4369, %v4514
        %v4516 = vand.u32 %v4515, 4294901760
        %4517 = vmatmul.f32.gmra.mxu0 %v4516
        %v4518 = vpop.f32.mrf.mxu0
        %v4519 = vadd.f32 %v4486, %v4518
        %4520 = vdwg.mxu0
        %4521 = vmatpush.msra.mxu0 0.0
        %4522 = vmatpush.msra.mxu0 0.0
        %4523 = vmatpush.msra.mxu0 0.0
        %4524 = vmatpush.msra.mxu0 0.0
        %4525 = vmatpush.msra.mxu0 0.0
        %4526 = vmatpush.msra.mxu0 0.0
        %4527 = vmatpush.msra.mxu0 0.0
        %4528 = vmatpush.msra.mxu0 0.0
        %4529 = vmatpush.msra.mxu0 0.0
        %4530 = vmatpush.msra.mxu0 0.0
        %4531 = vmatpush.msra.mxu0 0.0
        %4532 = vmatpush.msra.mxu0 0.0
        %v4533 = vand.u32 %v4353, 4294901760
        %v4534 = vsub.f32 %v4353, %v4533
        %v4535 = vand.u32 %v4534, 4294901760
        %4536 = vmatpush.msra.mxu0 %v4535
        %v4537 = vand.u32 %v4351, 4294901760
        %v4538 = vsub.f32 %v4351, %v4537
        %v4539 = vand.u32 %v4538, 4294901760
        %4540 = vmatpush.msra.mxu0 %v4539
        %v4541 = vand.u32 %v4349, 4294901760
        %v4542 = vsub.f32 %v4349, %v4541
        %v4543 = vand.u32 %v4542, 4294901760
        %4544 = vmatpush.msra.mxu0 %v4543
        %v4545 = vand.u32 %v4347, 4294901760
        %v4546 = vsub.f32 %v4347, %v4545
        %v4547 = vand.u32 %v4546, 4294901760
        %4548 = vmatpush.msra.mxu0 %v4547
        %v4549 = vand.u32 %v4366, 4294901760
        %4550 = vmatmul.f32.gmra.mxu0 %v4549
        %v4551 = vpop.f32.mrf.mxu0
        %v4552 = vadd.f32 %v4513, %v4551
        %v4553 = vand.u32 %v4369, 4294901760
        %4554 = vmatmul.f32.gmra.mxu0 %v4553
        %v4555 = vpop.f32.mrf.mxu0
        %v4556 = vadd.f32 %v4519, %v4555
        %4557 = vdwg.mxu0
        %4558 = vmatpush.msra.mxu0 0.0
        %4559 = vmatpush.msra.mxu0 0.0
        %4560 = vmatpush.msra.mxu0 0.0
        %4561 = vmatpush.msra.mxu0 0.0
        %4562 = vmatpush.msra.mxu0 0.0
        %4563 = vmatpush.msra.mxu0 0.0
        %4564 = vmatpush.msra.mxu0 0.0
        %4565 = vmatpush.msra.mxu0 0.0
        %4566 = vmatpush.msra.mxu0 0.0
        %4567 = vmatpush.msra.mxu0 0.0
        %4568 = vmatpush.msra.mxu0 0.0
        %4569 = vmatpush.msra.mxu0 0.0
        %v4570 = vand.u32 %v4353, 4294901760
        %4571 = vmatpush.msra.mxu0 %v4570
        %v4572 = vand.u32 %v4351, 4294901760
        %4573 = vmatpush.msra.mxu0 %v4572
        %v4574 = vand.u32 %v4349, 4294901760
        %4575 = vmatpush.msra.mxu0 %v4574
        %v4576 = vand.u32 %v4347, 4294901760
        %4577 = vmatpush.msra.mxu0 %v4576
        %v4578 = vand.u32 %v4366, 4294901760
        %4579 = vmatmul.f32.gmra.mxu0 %v4578
        %v4580 = vpop.f32.mrf.mxu0
        %v4581 = vadd.f32 %v4552, %v4580
        %v4582 = vand.u32 %v4369, 4294901760
        %4583 = vmatmul.f32.gmra.mxu0 %v4582
        %v4584 = vpop.f32.mrf.mxu0
        %v4585 = vadd.f32 %v4556, %v4584
        %4586 = vdwg.mxu0
        %4587 = vmatpush.msra.mxu0 0.0
        %4588 = vmatpush.msra.mxu0 0.0
        %4589 = vmatpush.msra.mxu0 0.0
        %4590 = vmatpush.msra.mxu0 0.0
        %4591 = vmatpush.msra.mxu0 0.0
        %4592 = vmatpush.msra.mxu0 0.0
        %4593 = vmatpush.msra.mxu0 0.0
        %4594 = vmatpush.msra.mxu0 0.0
        %4595 = vmatpush.msra.mxu0 0.0
        %4596 = vmatpush.msra.mxu0 0.0
        %4597 = vmatpush.msra.mxu0 0.0
        %4598 = vmatpush.msra.mxu0 0.0
        %v4599 = vand.u32 %v4354, 4294901760
        %4600 = vmatpush.msra.mxu0 %v4599
        %v4601 = vand.u32 %v4352, 4294901760
        %4602 = vmatpush.msra.mxu0 %v4601
        %v4603 = vand.u32 %v4350, 4294901760
        %4604 = vmatpush.msra.mxu0 %v4603
        %v4605 = vand.u32 %v4348, 4294901760
        %4606 = vmatpush.msra.mxu0 %v4605
        %v4607 = vand.u32 %v4366, 4294901760
        %v4608 = vsub.f32 %v4366, %v4607
        %v4609 = vand.u32 %v4608, 4294901760
        %v4610 = vsub.f32 %v4608, %v4609
        %v4611 = vand.u32 %v4610, 4294901760
        %4612 = vmatmul.f32.gmra.mxu0 %v4611
        %v4613 = vpop.f32.mrf.mxu0
        %v4614 = vadd.f32 %v4358, %v4613
        %v4615 = vand.u32 %v4369, 4294901760
        %v4616 = vsub.f32 %v4369, %v4615
        %v4617 = vand.u32 %v4616, 4294901760
        %v4618 = vsub.f32 %v4616, %v4617
        %v4619 = vand.u32 %v4618, 4294901760
        %4620 = vmatmul.f32.gmra.mxu0 %v4619
        %v4621 = vpop.f32.mrf.mxu0
        %v4622 = vadd.f32 %v4363, %v4621
        %4623 = vdwg.mxu0
        %4624 = vmatpush.msra.mxu0 0.0
        %4625 = vmatpush.msra.mxu0 0.0
        %4626 = vmatpush.msra.mxu0 0.0
        %4627 = vmatpush.msra.mxu0 0.0
        %4628 = vmatpush.msra.mxu0 0.0
        %4629 = vmatpush.msra.mxu0 0.0
        %4630 = vmatpush.msra.mxu0 0.0
        %4631 = vmatpush.msra.mxu0 0.0
        %4632 = vmatpush.msra.mxu0 0.0
        %4633 = vmatpush.msra.mxu0 0.0
        %4634 = vmatpush.msra.mxu0 0.0
        %4635 = vmatpush.msra.mxu0 0.0
        %v4636 = vand.u32 %v4354, 4294901760
        %v4637 = vsub.f32 %v4354, %v4636
        %v4638 = vand.u32 %v4637, 4294901760
        %v4639 = vsub.f32 %v4637, %v4638
        %v4640 = vand.u32 %v4639, 4294901760
        %4641 = vmatpush.msra.mxu0 %v4640
        %v4642 = vand.u32 %v4352, 4294901760
        %v4643 = vsub.f32 %v4352, %v4642
        %v4644 = vand.u32 %v4643, 4294901760
        %v4645 = vsub.f32 %v4643, %v4644
        %v4646 = vand.u32 %v4645, 4294901760
        %4647 = vmatpush.msra.mxu0 %v4646
        %v4648 = vand.u32 %v4350, 4294901760
        %v4649 = vsub.f32 %v4350, %v4648
        %v4650 = vand.u32 %v4649, 4294901760
        %v4651 = vsub.f32 %v4649, %v4650
        %v4652 = vand.u32 %v4651, 4294901760
        %4653 = vmatpush.msra.mxu0 %v4652
        %v4654 = vand.u32 %v4348, 4294901760
        %v4655 = vsub.f32 %v4348, %v4654
        %v4656 = vand.u32 %v4655, 4294901760
        %v4657 = vsub.f32 %v4655, %v4656
        %v4658 = vand.u32 %v4657, 4294901760
        %4659 = vmatpush.msra.mxu0 %v4658
        %v4660 = vand.u32 %v4366, 4294901760
        %4661 = vmatmul.f32.gmra.mxu0 %v4660
        %v4662 = vpop.f32.mrf.mxu0
        %v4663 = vadd.f32 %v4614, %v4662
        %v4664 = vand.u32 %v4369, 4294901760
        %4665 = vmatmul.f32.gmra.mxu0 %v4664
        %v4666 = vpop.f32.mrf.mxu0
        %v4667 = vadd.f32 %v4622, %v4666
        %4668 = vdwg.mxu0
        %4669 = vmatpush.msra.mxu0 0.0
        %4670 = vmatpush.msra.mxu0 0.0
        %4671 = vmatpush.msra.mxu0 0.0
        %4672 = vmatpush.msra.mxu0 0.0
        %4673 = vmatpush.msra.mxu0 0.0
        %4674 = vmatpush.msra.mxu0 0.0
        %4675 = vmatpush.msra.mxu0 0.0
        %4676 = vmatpush.msra.mxu0 0.0
        %4677 = vmatpush.msra.mxu0 0.0
        %4678 = vmatpush.msra.mxu0 0.0
        %4679 = vmatpush.msra.mxu0 0.0
        %4680 = vmatpush.msra.mxu0 0.0
        %v4681 = vand.u32 %v4354, 4294901760
        %v4682 = vsub.f32 %v4354, %v4681
        %4683 = vmatpush.msra.mxu0 %v4682
        %v4684 = vand.u32 %v4352, 4294901760
        %v4685 = vsub.f32 %v4352, %v4684
        %4686 = vmatpush.msra.mxu0 %v4685
        %v4687 = vand.u32 %v4350, 4294901760
        %v4688 = vsub.f32 %v4350, %v4687
        %4689 = vmatpush.msra.mxu0 %v4688
        %v4690 = vand.u32 %v4348, 4294901760
        %v4691 = vsub.f32 %v4348, %v4690
        %4692 = vmatpush.msra.mxu0 %v4691
        %v4693 = vand.u32 %v4366, 4294901760
        %v4694 = vsub.f32 %v4366, %v4693
        %4695 = vmatmul.f32.gmra.mxu0 %v4694
        %v4696 = vpop.f32.mrf.mxu0
        %v4697 = vadd.f32 %v4663, %v4696
        %v4698 = vand.u32 %v4369, 4294901760
        %v4699 = vsub.f32 %v4369, %v4698
        %4700 = vmatmul.f32.gmra.mxu0 %v4699
        %v4701 = vpop.f32.mrf.mxu0
        %v4702 = vadd.f32 %v4667, %v4701
        %4703 = vdwg.mxu0
        %4704 = vmatpush.msra.mxu0 0.0
        %4705 = vmatpush.msra.mxu0 0.0
        %4706 = vmatpush.msra.mxu0 0.0
        %4707 = vmatpush.msra.mxu0 0.0
        %4708 = vmatpush.msra.mxu0 0.0
        %4709 = vmatpush.msra.mxu0 0.0
        %4710 = vmatpush.msra.mxu0 0.0
        %4711 = vmatpush.msra.mxu0 0.0
        %4712 = vmatpush.msra.mxu0 0.0
        %4713 = vmatpush.msra.mxu0 0.0
        %4714 = vmatpush.msra.mxu0 0.0
        %4715 = vmatpush.msra.mxu0 0.0
        %v4716 = vand.u32 %v4354, 4294901760
        %4717 = vmatpush.msra.mxu0 %v4716
        %v4718 = vand.u32 %v4352, 4294901760
        %4719 = vmatpush.msra.mxu0 %v4718
        %v4720 = vand.u32 %v4350, 4294901760
        %4721 = vmatpush.msra.mxu0 %v4720
        %v4722 = vand.u32 %v4348, 4294901760
        %4723 = vmatpush.msra.mxu0 %v4722
        %v4724 = vand.u32 %v4366, 4294901760
        %v4725 = vsub.f32 %v4366, %v4724
        %v4726 = vand.u32 %v4725, 4294901760
        %4727 = vmatmul.f32.gmra.mxu0 %v4726
        %v4728 = vpop.f32.mrf.mxu0
        %v4729 = vadd.f32 %v4697, %v4728
        %v4730 = vand.u32 %v4369, 4294901760
        %v4731 = vsub.f32 %v4369, %v4730
        %v4732 = vand.u32 %v4731, 4294901760
        %4733 = vmatmul.f32.gmra.mxu0 %v4732
        %v4734 = vpop.f32.mrf.mxu0
        %v4735 = vadd.f32 %v4702, %v4734
        %4736 = vdwg.mxu0
        %4737 = vmatpush.msra.mxu0 0.0
        %4738 = vmatpush.msra.mxu0 0.0
        %4739 = vmatpush.msra.mxu0 0.0
        %4740 = vmatpush.msra.mxu0 0.0
        %4741 = vmatpush.msra.mxu0 0.0
        %4742 = vmatpush.msra.mxu0 0.0
        %4743 = vmatpush.msra.mxu0 0.0
        %4744 = vmatpush.msra.mxu0 0.0
        %4745 = vmatpush.msra.mxu0 0.0
        %4746 = vmatpush.msra.mxu0 0.0
        %4747 = vmatpush.msra.mxu0 0.0
        %4748 = vmatpush.msra.mxu0 0.0
        %v4749 = vand.u32 %v4354, 4294901760
        %v4750 = vsub.f32 %v4354, %v4749
        %v4751 = vand.u32 %v4750, 4294901760
        %4752 = vmatpush.msra.mxu0 %v4751
        %v4753 = vand.u32 %v4352, 4294901760
        %v4754 = vsub.f32 %v4352, %v4753
        %v4755 = vand.u32 %v4754, 4294901760
        %4756 = vmatpush.msra.mxu0 %v4755
        %v4757 = vand.u32 %v4350, 4294901760
        %v4758 = vsub.f32 %v4350, %v4757
        %v4759 = vand.u32 %v4758, 4294901760
        %4760 = vmatpush.msra.mxu0 %v4759
        %v4761 = vand.u32 %v4348, 4294901760
        %v4762 = vsub.f32 %v4348, %v4761
        %v4763 = vand.u32 %v4762, 4294901760
        %4764 = vmatpush.msra.mxu0 %v4763
        %v4765 = vand.u32 %v4366, 4294901760
        %4766 = vmatmul.f32.gmra.mxu0 %v4765
        %v4767 = vpop.f32.mrf.mxu0
        %v4768 = vadd.f32 %v4729, %v4767
        %v4769 = vand.u32 %v4369, 4294901760
        %4770 = vmatmul.f32.gmra.mxu0 %v4769
        %v4771 = vpop.f32.mrf.mxu0
        %v4772 = vadd.f32 %v4735, %v4771
        %4773 = vdwg.mxu0
        %4774 = vmatpush.msra.mxu0 0.0
        %4775 = vmatpush.msra.mxu0 0.0
        %4776 = vmatpush.msra.mxu0 0.0
        %4777 = vmatpush.msra.mxu0 0.0
        %4778 = vmatpush.msra.mxu0 0.0
        %4779 = vmatpush.msra.mxu0 0.0
        %4780 = vmatpush.msra.mxu0 0.0
        %4781 = vmatpush.msra.mxu0 0.0
        %4782 = vmatpush.msra.mxu0 0.0
        %4783 = vmatpush.msra.mxu0 0.0
        %4784 = vmatpush.msra.mxu0 0.0
        %4785 = vmatpush.msra.mxu0 0.0
        %v4786 = vand.u32 %v4354, 4294901760
        %4787 = vmatpush.msra.mxu0 %v4786
        %v4788 = vand.u32 %v4352, 4294901760
        %4789 = vmatpush.msra.mxu0 %v4788
        %v4790 = vand.u32 %v4350, 4294901760
        %4791 = vmatpush.msra.mxu0 %v4790
        %v4792 = vand.u32 %v4348, 4294901760
        %4793 = vmatpush.msra.mxu0 %v4792
        %v4794 = vand.u32 %v4366, 4294901760
        %4795 = vmatmul.f32.gmra.mxu0 %v4794
        %v4796 = vpop.f32.mrf.mxu0
        %v4797 = vadd.f32 %v4768, %v4796
        %v4798 = vand.u32 %v4369, 4294901760
        %4799 = vmatmul.f32.gmra.mxu0 %v4798
        %v4800 = vpop.f32.mrf.mxu0
        %v4801 = vadd.f32 %v4772, %v4800
        %4802 = vdwg.mxu0
        %4803 = vmatpush.msra.mxu0 0.0
        %4804 = vmatpush.msra.mxu0 0.0
        %4805 = vmatpush.msra.mxu0 0.0
        %4806 = vmatpush.msra.mxu0 0.0
        %4807 = vmatpush.msra.mxu0 0.0
        %4808 = vmatpush.msra.mxu0 0.0
        %4809 = vmatpush.msra.mxu0 0.0
        %4810 = vmatpush.msra.mxu0 0.0
        %4811 = vmatpush.msra.mxu0 0.0
        %4812 = vmatpush.msra.mxu0 0.0
        %4813 = vmatpush.msra.mxu0 0.0
        %4814 = vmatpush.msra.mxu0 0.0
        %4815 = vmatpush.msra.mxu0 0.0
        %4816 = vmatpush.msra.mxu0 0.0
        %v4817 = vand.u32 %v3657, 4294901760
        %4818 = vmatpush.msra.mxu0 %v4817
        %v4819 = vand.u32 %v3655, 4294901760
        %4820 = vmatpush.msra.mxu0 %v4819
        %v4821 = vand.u32 %v1876, 4294901760
        %v4822 = vsub.f32 %v1876, %v4821
        %v4823 = vand.u32 %v4822, 4294901760
        %v4824 = vsub.f32 %v4822, %v4823
        %v4825 = vand.u32 %v4824, 4294901760
        %4826 = vmatmul.f32.gmra.mxu0 %v4825
        %v4827 = vpop.f32.mrf.mxu0
        %v4828 = vadd.f32 0.0, %v4827
        %v4829 = vand.u32 %v1879, 4294901760
        %v4830 = vsub.f32 %v1879, %v4829
        %v4831 = vand.u32 %v4830, 4294901760
        %v4832 = vsub.f32 %v4830, %v4831
        %v4833 = vand.u32 %v4832, 4294901760
        %4834 = vmatmul.f32.gmra.mxu0 %v4833
        %v4835 = vpop.f32.mrf.mxu0
        %v4836 = vadd.f32 0.0, %v4835
        %v4837 = vand.u32 %v1882, 4294901760
        %v4838 = vsub.f32 %v1882, %v4837
        %v4839 = vand.u32 %v4838, 4294901760
        %v4840 = vsub.f32 %v4838, %v4839
        %v4841 = vand.u32 %v4840, 4294901760
        %4842 = vmatmul.f32.gmra.mxu0 %v4841
        %v4843 = vpop.f32.mrf.mxu0
        %v4844 = vadd.f32 0.0, %v4843
        %v4845 = vand.u32 %v1885, 4294901760
        %v4846 = vsub.f32 %v1885, %v4845
        %v4847 = vand.u32 %v4846, 4294901760
        %v4848 = vsub.f32 %v4846, %v4847
        %v4849 = vand.u32 %v4848, 4294901760
        %4850 = vmatmul.f32.gmra.mxu0 %v4849
        %v4851 = vpop.f32.mrf.mxu0
        %v4852 = vadd.f32 0.0, %v4851
        %4853 = vdwg.mxu0
        %4854 = vmatpush.msra.mxu0 0.0
        %4855 = vmatpush.msra.mxu0 0.0
        %4856 = vmatpush.msra.mxu0 0.0
        %4857 = vmatpush.msra.mxu0 0.0
        %4858 = vmatpush.msra.mxu0 0.0
        %4859 = vmatpush.msra.mxu0 0.0
        %4860 = vmatpush.msra.mxu0 0.0
        %4861 = vmatpush.msra.mxu0 0.0
        %4862 = vmatpush.msra.mxu0 0.0
        %4863 = vmatpush.msra.mxu0 0.0
        %4864 = vmatpush.msra.mxu0 0.0
        %4865 = vmatpush.msra.mxu0 0.0
        %4866 = vmatpush.msra.mxu0 0.0
        %4867 = vmatpush.msra.mxu0 0.0
        %v4868 = vand.u32 %v3657, 4294901760
        %v4869 = vsub.f32 %v3657, %v4868
        %v4870 = vand.u32 %v4869, 4294901760
        %v4871 = vsub.f32 %v4869, %v4870
        %v4872 = vand.u32 %v4871, 4294901760
        %4873 = vmatpush.msra.mxu0 %v4872
        %v4874 = vand.u32 %v3655, 4294901760
        %v4875 = vsub.f32 %v3655, %v4874
        %v4876 = vand.u32 %v4875, 4294901760
        %v4877 = vsub.f32 %v4875, %v4876
        %v4878 = vand.u32 %v4877, 4294901760
        %4879 = vmatpush.msra.mxu0 %v4878
        %v4880 = vand.u32 %v1876, 4294901760
        %4881 = vmatmul.f32.gmra.mxu0 %v4880
        %v4882 = vpop.f32.mrf.mxu0
        %v4883 = vadd.f32 %v4828, %v4882
        %v4884 = vand.u32 %v1879, 4294901760
        %4885 = vmatmul.f32.gmra.mxu0 %v4884
        %v4886 = vpop.f32.mrf.mxu0
        %v4887 = vadd.f32 %v4836, %v4886
        %v4888 = vand.u32 %v1882, 4294901760
        %4889 = vmatmul.f32.gmra.mxu0 %v4888
        %v4890 = vpop.f32.mrf.mxu0
        %v4891 = vadd.f32 %v4844, %v4890
        %v4892 = vand.u32 %v1885, 4294901760
        %4893 = vmatmul.f32.gmra.mxu0 %v4892
        %v4894 = vpop.f32.mrf.mxu0
        %v4895 = vadd.f32 %v4852, %v4894
        %4896 = vdwg.mxu0
        %4897 = vmatpush.msra.mxu0 0.0
        %4898 = vmatpush.msra.mxu0 0.0
        %4899 = vmatpush.msra.mxu0 0.0
        %4900 = vmatpush.msra.mxu0 0.0
        %4901 = vmatpush.msra.mxu0 0.0
        %4902 = vmatpush.msra.mxu0 0.0
        %4903 = vmatpush.msra.mxu0 0.0
        %4904 = vmatpush.msra.mxu0 0.0
        %4905 = vmatpush.msra.mxu0 0.0
        %4906 = vmatpush.msra.mxu0 0.0
        %4907 = vmatpush.msra.mxu0 0.0
        %4908 = vmatpush.msra.mxu0 0.0
        %4909 = vmatpush.msra.mxu0 0.0
        %4910 = vmatpush.msra.mxu0 0.0
        %v4911 = vand.u32 %v3657, 4294901760
        %v4912 = vsub.f32 %v3657, %v4911
        %4913 = vmatpush.msra.mxu0 %v4912
        %v4914 = vand.u32 %v3655, 4294901760
        %v4915 = vsub.f32 %v3655, %v4914
        %4916 = vmatpush.msra.mxu0 %v4915
        %v4917 = vand.u32 %v1876, 4294901760
        %v4918 = vsub.f32 %v1876, %v4917
        %4919 = vmatmul.f32.gmra.mxu0 %v4918
        %v4920 = vpop.f32.mrf.mxu0
        %v4921 = vadd.f32 %v4883, %v4920
        %v4922 = vand.u32 %v1879, 4294901760
        %v4923 = vsub.f32 %v1879, %v4922
        %4924 = vmatmul.f32.gmra.mxu0 %v4923
        %v4925 = vpop.f32.mrf.mxu0
        %v4926 = vadd.f32 %v4887, %v4925
        %v4927 = vand.u32 %v1882, 4294901760
        %v4928 = vsub.f32 %v1882, %v4927
        %4929 = vmatmul.f32.gmra.mxu0 %v4928
        %v4930 = vpop.f32.mrf.mxu0
        %v4931 = vadd.f32 %v4891, %v4930
        %v4932 = vand.u32 %v1885, 4294901760
        %v4933 = vsub.f32 %v1885, %v4932
        %4934 = vmatmul.f32.gmra.mxu0 %v4933
        %v4935 = vpop.f32.mrf.mxu0
        %v4936 = vadd.f32 %v4895, %v4935
        %4937 = vdwg.mxu0
        %4938 = vmatpush.msra.mxu0 0.0
        %4939 = vmatpush.msra.mxu0 0.0
        %4940 = vmatpush.msra.mxu0 0.0
        %4941 = vmatpush.msra.mxu0 0.0
        %4942 = vmatpush.msra.mxu0 0.0
        %4943 = vmatpush.msra.mxu0 0.0
        %4944 = vmatpush.msra.mxu0 0.0
        %4945 = vmatpush.msra.mxu0 0.0
        %4946 = vmatpush.msra.mxu0 0.0
        %4947 = vmatpush.msra.mxu0 0.0
        %4948 = vmatpush.msra.mxu0 0.0
        %4949 = vmatpush.msra.mxu0 0.0
        %4950 = vmatpush.msra.mxu0 0.0
        %4951 = vmatpush.msra.mxu0 0.0
        %v4952 = vand.u32 %v3657, 4294901760
        %4953 = vmatpush.msra.mxu0 %v4952
        %v4954 = vand.u32 %v3655, 4294901760
        %4955 = vmatpush.msra.mxu0 %v4954
        %v4956 = vand.u32 %v1876, 4294901760
        %v4957 = vsub.f32 %v1876, %v4956
        %v4958 = vand.u32 %v4957, 4294901760
        %4959 = vmatmul.f32.gmra.mxu0 %v4958
        %v4960 = vpop.f32.mrf.mxu0
        %v4961 = vadd.f32 %v4921, %v4960
        %v4962 = vand.u32 %v1879, 4294901760
        %v4963 = vsub.f32 %v1879, %v4962
        %v4964 = vand.u32 %v4963, 4294901760
        %4965 = vmatmul.f32.gmra.mxu0 %v4964
        %v4966 = vpop.f32.mrf.mxu0
        %v4967 = vadd.f32 %v4926, %v4966
        %v4968 = vand.u32 %v1882, 4294901760
        %v4969 = vsub.f32 %v1882, %v4968
        %v4970 = vand.u32 %v4969, 4294901760
        %4971 = vmatmul.f32.gmra.mxu0 %v4970
        %v4972 = vpop.f32.mrf.mxu0
        %v4973 = vadd.f32 %v4931, %v4972
        %v4974 = vand.u32 %v1885, 4294901760
        %v4975 = vsub.f32 %v1885, %v4974
        %v4976 = vand.u32 %v4975, 4294901760
        %4977 = vmatmul.f32.gmra.mxu0 %v4976
        %v4978 = vpop.f32.mrf.mxu0
        %v4979 = vadd.f32 %v4936, %v4978
        %4980 = vdwg.mxu0
        %4981 = vmatpush.msra.mxu0 0.0
        %4982 = vmatpush.msra.mxu0 0.0
        %4983 = vmatpush.msra.mxu0 0.0
        %4984 = vmatpush.msra.mxu0 0.0
        %4985 = vmatpush.msra.mxu0 0.0
        %4986 = vmatpush.msra.mxu0 0.0
        %4987 = vmatpush.msra.mxu0 0.0
        %4988 = vmatpush.msra.mxu0 0.0
        %4989 = vmatpush.msra.mxu0 0.0
        %4990 = vmatpush.msra.mxu0 0.0
        %4991 = vmatpush.msra.mxu0 0.0
        %4992 = vmatpush.msra.mxu0 0.0
        %4993 = vmatpush.msra.mxu0 0.0
        %4994 = vmatpush.msra.mxu0 0.0
        %v4995 = vand.u32 %v3657, 4294901760
        %v4996 = vsub.f32 %v3657, %v4995
        %v4997 = vand.u32 %v4996, 4294901760
        %4998 = vmatpush.msra.mxu0 %v4997
        %v4999 = vand.u32 %v3655, 4294901760
        %v5000 = vsub.f32 %v3655, %v4999
        %v5001 = vand.u32 %v5000, 4294901760
        %5002 = vmatpush.msra.mxu0 %v5001
        %v5003 = vand.u32 %v1876, 4294901760
        %5004 = vmatmul.f32.gmra.mxu0 %v5003
        %v5005 = vpop.f32.mrf.mxu0
        %v5006 = vadd.f32 %v4961, %v5005
        %v5007 = vand.u32 %v1879, 4294901760
        %5008 = vmatmul.f32.gmra.mxu0 %v5007
        %v5009 = vpop.f32.mrf.mxu0
        %v5010 = vadd.f32 %v4967, %v5009
        %v5011 = vand.u32 %v1882, 4294901760
        %5012 = vmatmul.f32.gmra.mxu0 %v5011
        %v5013 = vpop.f32.mrf.mxu0
        %v5014 = vadd.f32 %v4973, %v5013
        %v5015 = vand.u32 %v1885, 4294901760
        %5016 = vmatmul.f32.gmra.mxu0 %v5015
        %v5017 = vpop.f32.mrf.mxu0
        %v5018 = vadd.f32 %v4979, %v5017
        %5019 = vdwg.mxu0
        %5020 = vmatpush.msra.mxu0 0.0
        %5021 = vmatpush.msra.mxu0 0.0
        %5022 = vmatpush.msra.mxu0 0.0
        %5023 = vmatpush.msra.mxu0 0.0
        %5024 = vmatpush.msra.mxu0 0.0
        %5025 = vmatpush.msra.mxu0 0.0
        %5026 = vmatpush.msra.mxu0 0.0
        %5027 = vmatpush.msra.mxu0 0.0
        %5028 = vmatpush.msra.mxu0 0.0
        %5029 = vmatpush.msra.mxu0 0.0
        %5030 = vmatpush.msra.mxu0 0.0
        %5031 = vmatpush.msra.mxu0 0.0
        %5032 = vmatpush.msra.mxu0 0.0
        %5033 = vmatpush.msra.mxu0 0.0
        %v5034 = vand.u32 %v3657, 4294901760
        %5035 = vmatpush.msra.mxu0 %v5034
        %v5036 = vand.u32 %v3655, 4294901760
        %5037 = vmatpush.msra.mxu0 %v5036
        %v5038 = vand.u32 %v1876, 4294901760
        %5039 = vmatmul.f32.gmra.mxu0 %v5038
        %v5040 = vpop.f32.mrf.mxu0
        %v5041 = vadd.f32 %v5006, %v5040
        %v5042 = vand.u32 %v1879, 4294901760
        %5043 = vmatmul.f32.gmra.mxu0 %v5042
        %v5044 = vpop.f32.mrf.mxu0
        %v5045 = vadd.f32 %v5010, %v5044
        %v5046 = vand.u32 %v1882, 4294901760
        %5047 = vmatmul.f32.gmra.mxu0 %v5046
        %v5048 = vpop.f32.mrf.mxu0
        %v5049 = vadd.f32 %v5014, %v5048
        %v5050 = vand.u32 %v1885, 4294901760
        %5051 = vmatmul.f32.gmra.mxu0 %v5050
        %v5052 = vpop.f32.mrf.mxu0
        %v5053 = vadd.f32 %v5018, %v5052
        %5054 = vdwg.mxu0
        %5055 = vmatpush.msra.mxu0 0.0
        %5056 = vmatpush.msra.mxu0 0.0
        %5057 = vmatpush.msra.mxu0 0.0
        %5058 = vmatpush.msra.mxu0 0.0
        %5059 = vmatpush.msra.mxu0 0.0
        %5060 = vmatpush.msra.mxu0 0.0
        %5061 = vmatpush.msra.mxu0 0.0
        %5062 = vmatpush.msra.mxu0 0.0
        %5063 = vmatpush.msra.mxu0 0.0
        %5064 = vmatpush.msra.mxu0 0.0
        %5065 = vmatpush.msra.mxu0 0.0
        %5066 = vmatpush.msra.mxu0 0.0
        %5067 = vmatpush.msra.mxu0 0.0
        %5068 = vmatpush.msra.mxu0 0.0
        %v5069 = vand.u32 %v3658, 4294901760
        %5070 = vmatpush.msra.mxu0 %v5069
        %v5071 = vand.u32 %v3656, 4294901760
        %5072 = vmatpush.msra.mxu0 %v5071
        %v5073 = vand.u32 %v1876, 4294901760
        %v5074 = vsub.f32 %v1876, %v5073
        %v5075 = vand.u32 %v5074, 4294901760
        %v5076 = vsub.f32 %v5074, %v5075
        %v5077 = vand.u32 %v5076, 4294901760
        %5078 = vmatmul.f32.gmra.mxu0 %v5077
        %v5079 = vpop.f32.mrf.mxu0
        %v5080 = vadd.f32 0.0, %v5079
        %v5081 = vand.u32 %v1879, 4294901760
        %v5082 = vsub.f32 %v1879, %v5081
        %v5083 = vand.u32 %v5082, 4294901760
        %v5084 = vsub.f32 %v5082, %v5083
        %v5085 = vand.u32 %v5084, 4294901760
        %5086 = vmatmul.f32.gmra.mxu0 %v5085
        %v5087 = vpop.f32.mrf.mxu0
        %v5088 = vadd.f32 0.0, %v5087
        %v5089 = vand.u32 %v1882, 4294901760
        %v5090 = vsub.f32 %v1882, %v5089
        %v5091 = vand.u32 %v5090, 4294901760
        %v5092 = vsub.f32 %v5090, %v5091
        %v5093 = vand.u32 %v5092, 4294901760
        %5094 = vmatmul.f32.gmra.mxu0 %v5093
        %v5095 = vpop.f32.mrf.mxu0
        %v5096 = vadd.f32 0.0, %v5095
        %v5097 = vand.u32 %v1885, 4294901760
        %v5098 = vsub.f32 %v1885, %v5097
        %v5099 = vand.u32 %v5098, 4294901760
        %v5100 = vsub.f32 %v5098, %v5099
        %v5101 = vand.u32 %v5100, 4294901760
        %5102 = vmatmul.f32.gmra.mxu0 %v5101
        %v5103 = vpop.f32.mrf.mxu0
        %v5104 = vadd.f32 0.0, %v5103
        %5105 = vdwg.mxu0
        %5106 = vmatpush.msra.mxu0 0.0
        %5107 = vmatpush.msra.mxu0 0.0
        %5108 = vmatpush.msra.mxu0 0.0
        %5109 = vmatpush.msra.mxu0 0.0
        %5110 = vmatpush.msra.mxu0 0.0
        %5111 = vmatpush.msra.mxu0 0.0
        %5112 = vmatpush.msra.mxu0 0.0
        %5113 = vmatpush.msra.mxu0 0.0
        %5114 = vmatpush.msra.mxu0 0.0
        %5115 = vmatpush.msra.mxu0 0.0
        %5116 = vmatpush.msra.mxu0 0.0
        %5117 = vmatpush.msra.mxu0 0.0
        %5118 = vmatpush.msra.mxu0 0.0
        %5119 = vmatpush.msra.mxu0 0.0
        %v5120 = vand.u32 %v3658, 4294901760
        %v5121 = vsub.f32 %v3658, %v5120
        %v5122 = vand.u32 %v5121, 4294901760
        %v5123 = vsub.f32 %v5121, %v5122
        %v5124 = vand.u32 %v5123, 4294901760
        %5125 = vmatpush.msra.mxu0 %v5124
        %v5126 = vand.u32 %v3656, 4294901760
        %v5127 = vsub.f32 %v3656, %v5126
        %v5128 = vand.u32 %v5127, 4294901760
        %v5129 = vsub.f32 %v5127, %v5128
        %v5130 = vand.u32 %v5129, 4294901760
        %5131 = vmatpush.msra.mxu0 %v5130
        %v5132 = vand.u32 %v1876, 4294901760
        %5133 = vmatmul.f32.gmra.mxu0 %v5132
        %v5134 = vpop.f32.mrf.mxu0
        %v5135 = vadd.f32 %v5080, %v5134
        %v5136 = vand.u32 %v1879, 4294901760
        %5137 = vmatmul.f32.gmra.mxu0 %v5136
        %v5138 = vpop.f32.mrf.mxu0
        %v5139 = vadd.f32 %v5088, %v5138
        %v5140 = vand.u32 %v1882, 4294901760
        %5141 = vmatmul.f32.gmra.mxu0 %v5140
        %v5142 = vpop.f32.mrf.mxu0
        %v5143 = vadd.f32 %v5096, %v5142
        %v5144 = vand.u32 %v1885, 4294901760
        %5145 = vmatmul.f32.gmra.mxu0 %v5144
        %v5146 = vpop.f32.mrf.mxu0
        %v5147 = vadd.f32 %v5104, %v5146
        %5148 = vdwg.mxu0
        %5149 = vmatpush.msra.mxu0 0.0
        %5150 = vmatpush.msra.mxu0 0.0
        %5151 = vmatpush.msra.mxu0 0.0
        %5152 = vmatpush.msra.mxu0 0.0
        %5153 = vmatpush.msra.mxu0 0.0
        %5154 = vmatpush.msra.mxu0 0.0
        %5155 = vmatpush.msra.mxu0 0.0
        %5156 = vmatpush.msra.mxu0 0.0
        %5157 = vmatpush.msra.mxu0 0.0
        %5158 = vmatpush.msra.mxu0 0.0
        %5159 = vmatpush.msra.mxu0 0.0
        %5160 = vmatpush.msra.mxu0 0.0
        %5161 = vmatpush.msra.mxu0 0.0
        %5162 = vmatpush.msra.mxu0 0.0
        %v5163 = vand.u32 %v3658, 4294901760
        %v5164 = vsub.f32 %v3658, %v5163
        %5165 = vmatpush.msra.mxu0 %v5164
        %v5166 = vand.u32 %v3656, 4294901760
        %v5167 = vsub.f32 %v3656, %v5166
        %5168 = vmatpush.msra.mxu0 %v5167
        %v5169 = vand.u32 %v1876, 4294901760
        %v5170 = vsub.f32 %v1876, %v5169
        %5171 = vmatmul.f32.gmra.mxu0 %v5170
        %v5172 = vpop.f32.mrf.mxu0
        %v5173 = vadd.f32 %v5135, %v5172
        %v5174 = vand.u32 %v1879, 4294901760
        %v5175 = vsub.f32 %v1879, %v5174
        %5176 = vmatmul.f32.gmra.mxu0 %v5175
        %v5177 = vpop.f32.mrf.mxu0
        %v5178 = vadd.f32 %v5139, %v5177
        %v5179 = vand.u32 %v1882, 4294901760
        %v5180 = vsub.f32 %v1882, %v5179
        %5181 = vmatmul.f32.gmra.mxu0 %v5180
        %v5182 = vpop.f32.mrf.mxu0
        %v5183 = vadd.f32 %v5143, %v5182
        %v5184 = vand.u32 %v1885, 4294901760
        %v5185 = vsub.f32 %v1885, %v5184
        %5186 = vmatmul.f32.gmra.mxu0 %v5185
        %v5187 = vpop.f32.mrf.mxu0
        %v5188 = vadd.f32 %v5147, %v5187
        %5189 = vdwg.mxu0
        %5190 = vmatpush.msra.mxu0 0.0
        %5191 = vmatpush.msra.mxu0 0.0
        %5192 = vmatpush.msra.mxu0 0.0
        %5193 = vmatpush.msra.mxu0 0.0
        %5194 = vmatpush.msra.mxu0 0.0
        %5195 = vmatpush.msra.mxu0 0.0
        %5196 = vmatpush.msra.mxu0 0.0
        %5197 = vmatpush.msra.mxu0 0.0
        %5198 = vmatpush.msra.mxu0 0.0
        %5199 = vmatpush.msra.mxu0 0.0
        %5200 = vmatpush.msra.mxu0 0.0
        %5201 = vmatpush.msra.mxu0 0.0
        %5202 = vmatpush.msra.mxu0 0.0
        %5203 = vmatpush.msra.mxu0 0.0
        %v5204 = vand.u32 %v3658, 4294901760
        %5205 = vmatpush.msra.mxu0 %v5204
        %v5206 = vand.u32 %v3656, 4294901760
        %5207 = vmatpush.msra.mxu0 %v5206
        %v5208 = vand.u32 %v1876, 4294901760
        %v5209 = vsub.f32 %v1876, %v5208
        %v5210 = vand.u32 %v5209, 4294901760
        %5211 = vmatmul.f32.gmra.mxu0 %v5210
        %v5212 = vpop.f32.mrf.mxu0
        %v5213 = vadd.f32 %v5173, %v5212
        %v5214 = vand.u32 %v1879, 4294901760
        %v5215 = vsub.f32 %v1879, %v5214
        %v5216 = vand.u32 %v5215, 4294901760
        %5217 = vmatmul.f32.gmra.mxu0 %v5216
        %v5218 = vpop.f32.mrf.mxu0
        %v5219 = vadd.f32 %v5178, %v5218
        %v5220 = vand.u32 %v1882, 4294901760
        %v5221 = vsub.f32 %v1882, %v5220
        %v5222 = vand.u32 %v5221, 4294901760
        %5223 = vmatmul.f32.gmra.mxu0 %v5222
        %v5224 = vpop.f32.mrf.mxu0
        %v5225 = vadd.f32 %v5183, %v5224
        %v5226 = vand.u32 %v1885, 4294901760
        %v5227 = vsub.f32 %v1885, %v5226
        %v5228 = vand.u32 %v5227, 4294901760
        %5229 = vmatmul.f32.gmra.mxu0 %v5228
        %v5230 = vpop.f32.mrf.mxu0
        %v5231 = vadd.f32 %v5188, %v5230
        %5232 = vdwg.mxu0
        %5233 = vmatpush.msra.mxu0 0.0
        %5234 = vmatpush.msra.mxu0 0.0
        %5235 = vmatpush.msra.mxu0 0.0
        %5236 = vmatpush.msra.mxu0 0.0
        %5237 = vmatpush.msra.mxu0 0.0
        %5238 = vmatpush.msra.mxu0 0.0
        %5239 = vmatpush.msra.mxu0 0.0
        %5240 = vmatpush.msra.mxu0 0.0
        %5241 = vmatpush.msra.mxu0 0.0
        %5242 = vmatpush.msra.mxu0 0.0
        %5243 = vmatpush.msra.mxu0 0.0
        %5244 = vmatpush.msra.mxu0 0.0
        %5245 = vmatpush.msra.mxu0 0.0
        %5246 = vmatpush.msra.mxu0 0.0
        %v5247 = vand.u32 %v3658, 4294901760
        %v5248 = vsub.f32 %v3658, %v5247
        %v5249 = vand.u32 %v5248, 4294901760
        %5250 = vmatpush.msra.mxu0 %v5249
        %v5251 = vand.u32 %v3656, 4294901760
        %v5252 = vsub.f32 %v3656, %v5251
        %v5253 = vand.u32 %v5252, 4294901760
        %5254 = vmatpush.msra.mxu0 %v5253
        %v5255 = vand.u32 %v1876, 4294901760
        %5256 = vmatmul.f32.gmra.mxu0 %v5255
        %v5257 = vpop.f32.mrf.mxu0
        %v5258 = vadd.f32 %v5213, %v5257
        %v5259 = vand.u32 %v1879, 4294901760
        %5260 = vmatmul.f32.gmra.mxu0 %v5259
        %v5261 = vpop.f32.mrf.mxu0
        %v5262 = vadd.f32 %v5219, %v5261
        %v5263 = vand.u32 %v1882, 4294901760
        %5264 = vmatmul.f32.gmra.mxu0 %v5263
        %v5265 = vpop.f32.mrf.mxu0
        %v5266 = vadd.f32 %v5225, %v5265
        %v5267 = vand.u32 %v1885, 4294901760
        %5268 = vmatmul.f32.gmra.mxu0 %v5267
        %v5269 = vpop.f32.mrf.mxu0
        %v5270 = vadd.f32 %v5231, %v5269
        %5271 = vdwg.mxu0
        %5272 = vmatpush.msra.mxu0 0.0
        %5273 = vmatpush.msra.mxu0 0.0
        %5274 = vmatpush.msra.mxu0 0.0
        %5275 = vmatpush.msra.mxu0 0.0
        %5276 = vmatpush.msra.mxu0 0.0
        %5277 = vmatpush.msra.mxu0 0.0
        %5278 = vmatpush.msra.mxu0 0.0
        %5279 = vmatpush.msra.mxu0 0.0
        %5280 = vmatpush.msra.mxu0 0.0
        %5281 = vmatpush.msra.mxu0 0.0
        %5282 = vmatpush.msra.mxu0 0.0
        %5283 = vmatpush.msra.mxu0 0.0
        %5284 = vmatpush.msra.mxu0 0.0
        %5285 = vmatpush.msra.mxu0 0.0
        %v5286 = vand.u32 %v3658, 4294901760
        %5287 = vmatpush.msra.mxu0 %v5286
        %v5288 = vand.u32 %v3656, 4294901760
        %5289 = vmatpush.msra.mxu0 %v5288
        %v5290 = vand.u32 %v1876, 4294901760
        %5291 = vmatmul.f32.gmra.mxu0 %v5290
        %v5292 = vpop.f32.mrf.mxu0
        %v5293 = vadd.f32 %v5258, %v5292
        %v5294 = vand.u32 %v1879, 4294901760
        %5295 = vmatmul.f32.gmra.mxu0 %v5294
        %v5296 = vpop.f32.mrf.mxu0
        %v5297 = vadd.f32 %v5262, %v5296
        %v5298 = vand.u32 %v1882, 4294901760
        %5299 = vmatmul.f32.gmra.mxu0 %v5298
        %v5300 = vpop.f32.mrf.mxu0
        %v5301 = vadd.f32 %v5266, %v5300
        %v5302 = vand.u32 %v1885, 4294901760
        %5303 = vmatmul.f32.gmra.mxu0 %v5302
        %v5304 = vpop.f32.mrf.mxu0
        %v5305 = vadd.f32 %v5270, %v5304
        %5306 = vdwg.mxu0
        %5307 = vmatpush.msra.mxu0 0.0
        %5308 = vmatpush.msra.mxu0 0.0
        %5309 = vmatpush.msra.mxu0 0.0
        %5310 = vmatpush.msra.mxu0 0.0
        %5311 = vmatpush.msra.mxu0 0.0
        %5312 = vmatpush.msra.mxu0 0.0
        %5313 = vmatpush.msra.mxu0 0.0
        %5314 = vmatpush.msra.mxu0 0.0
        %5315 = vmatpush.msra.mxu0 0.0
        %5316 = vmatpush.msra.mxu0 0.0
        %5317 = vmatpush.msra.mxu0 0.0
        %5318 = vmatpush.msra.mxu0 0.0
        %5319 = vmatpush.msra.mxu0 0.0
        %5320 = vmatpush.msra.mxu0 0.0
        %v5321 = vand.u32 %v4585, 4294901760
        %5322 = vmatpush.msra.mxu0 %v5321
        %v5323 = vand.u32 %v4581, 4294901760
        %5324 = vmatpush.msra.mxu0 %v5323
        %v5325 = vand.u32 %v2392, 4294901760
        %v5326 = vsub.f32 %v2392, %v5325
        %v5327 = vand.u32 %v5326, 4294901760
        %v5328 = vsub.f32 %v5326, %v5327
        %v5329 = vand.u32 %v5328, 4294901760
        %5330 = vmatmul.f32.gmra.mxu0 %v5329
        %v5331 = vpop.f32.mrf.mxu0
        %v5332 = vadd.f32 %v5041, %v5331
        %v5333 = vand.u32 %v2395, 4294901760
        %v5334 = vsub.f32 %v2395, %v5333
        %v5335 = vand.u32 %v5334, 4294901760
        %v5336 = vsub.f32 %v5334, %v5335
        %v5337 = vand.u32 %v5336, 4294901760
        %5338 = vmatmul.f32.gmra.mxu0 %v5337
        %v5339 = vpop.f32.mrf.mxu0
        %v5340 = vadd.f32 %v5045, %v5339
        %v5341 = vand.u32 %v2398, 4294901760
        %v5342 = vsub.f32 %v2398, %v5341
        %v5343 = vand.u32 %v5342, 4294901760
        %v5344 = vsub.f32 %v5342, %v5343
        %v5345 = vand.u32 %v5344, 4294901760
        %5346 = vmatmul.f32.gmra.mxu0 %v5345
        %v5347 = vpop.f32.mrf.mxu0
        %v5348 = vadd.f32 %v5049, %v5347
        %v5349 = vand.u32 %v2401, 4294901760
        %v5350 = vsub.f32 %v2401, %v5349
        %v5351 = vand.u32 %v5350, 4294901760
        %v5352 = vsub.f32 %v5350, %v5351
        %v5353 = vand.u32 %v5352, 4294901760
        %5354 = vmatmul.f32.gmra.mxu0 %v5353
        %v5355 = vpop.f32.mrf.mxu0
        %v5356 = vadd.f32 %v5053, %v5355
        %5357 = vdwg.mxu0
        %5358 = vmatpush.msra.mxu0 0.0
        %5359 = vmatpush.msra.mxu0 0.0
        %5360 = vmatpush.msra.mxu0 0.0
        %5361 = vmatpush.msra.mxu0 0.0
        %5362 = vmatpush.msra.mxu0 0.0
        %5363 = vmatpush.msra.mxu0 0.0
        %5364 = vmatpush.msra.mxu0 0.0
        %5365 = vmatpush.msra.mxu0 0.0
        %5366 = vmatpush.msra.mxu0 0.0
        %5367 = vmatpush.msra.mxu0 0.0
        %5368 = vmatpush.msra.mxu0 0.0
        %5369 = vmatpush.msra.mxu0 0.0
        %5370 = vmatpush.msra.mxu0 0.0
        %5371 = vmatpush.msra.mxu0 0.0
        %v5372 = vand.u32 %v4585, 4294901760
        %v5373 = vsub.f32 %v4585, %v5372
        %v5374 = vand.u32 %v5373, 4294901760
        %v5375 = vsub.f32 %v5373, %v5374
        %v5376 = vand.u32 %v5375, 4294901760
        %5377 = vmatpush.msra.mxu0 %v5376
        %v5378 = vand.u32 %v4581, 4294901760
        %v5379 = vsub.f32 %v4581, %v5378
        %v5380 = vand.u32 %v5379, 4294901760
        %v5381 = vsub.f32 %v5379, %v5380
        %v5382 = vand.u32 %v5381, 4294901760
        %5383 = vmatpush.msra.mxu0 %v5382
        %v5384 = vand.u32 %v2392, 4294901760
        %5385 = vmatmul.f32.gmra.mxu0 %v5384
        %v5386 = vpop.f32.mrf.mxu0
        %v5387 = vadd.f32 %v5332, %v5386
        %v5388 = vand.u32 %v2395, 4294901760
        %5389 = vmatmul.f32.gmra.mxu0 %v5388
        %v5390 = vpop.f32.mrf.mxu0
        %v5391 = vadd.f32 %v5340, %v5390
        %v5392 = vand.u32 %v2398, 4294901760
        %5393 = vmatmul.f32.gmra.mxu0 %v5392
        %v5394 = vpop.f32.mrf.mxu0
        %v5395 = vadd.f32 %v5348, %v5394
        %v5396 = vand.u32 %v2401, 4294901760
        %5397 = vmatmul.f32.gmra.mxu0 %v5396
        %v5398 = vpop.f32.mrf.mxu0
        %v5399 = vadd.f32 %v5356, %v5398
        %5400 = vdwg.mxu0
        %5401 = vmatpush.msra.mxu0 0.0
        %5402 = vmatpush.msra.mxu0 0.0
        %5403 = vmatpush.msra.mxu0 0.0
        %5404 = vmatpush.msra.mxu0 0.0
        %5405 = vmatpush.msra.mxu0 0.0
        %5406 = vmatpush.msra.mxu0 0.0
        %5407 = vmatpush.msra.mxu0 0.0
        %5408 = vmatpush.msra.mxu0 0.0
        %5409 = vmatpush.msra.mxu0 0.0
        %5410 = vmatpush.msra.mxu0 0.0
        %5411 = vmatpush.msra.mxu0 0.0
        %5412 = vmatpush.msra.mxu0 0.0
        %5413 = vmatpush.msra.mxu0 0.0
        %5414 = vmatpush.msra.mxu0 0.0
        %v5415 = vand.u32 %v4585, 4294901760
        %v5416 = vsub.f32 %v4585, %v5415
        %5417 = vmatpush.msra.mxu0 %v5416
        %v5418 = vand.u32 %v4581, 4294901760
        %v5419 = vsub.f32 %v4581, %v5418
        %5420 = vmatpush.msra.mxu0 %v5419
        %v5421 = vand.u32 %v2392, 4294901760
        %v5422 = vsub.f32 %v2392, %v5421
        %5423 = vmatmul.f32.gmra.mxu0 %v5422
        %v5424 = vpop.f32.mrf.mxu0
        %v5425 = vadd.f32 %v5387, %v5424
        %v5426 = vand.u32 %v2395, 4294901760
        %v5427 = vsub.f32 %v2395, %v5426
        %5428 = vmatmul.f32.gmra.mxu0 %v5427
        %v5429 = vpop.f32.mrf.mxu0
        %v5430 = vadd.f32 %v5391, %v5429
        %v5431 = vand.u32 %v2398, 4294901760
        %v5432 = vsub.f32 %v2398, %v5431
        %5433 = vmatmul.f32.gmra.mxu0 %v5432
        %v5434 = vpop.f32.mrf.mxu0
        %v5435 = vadd.f32 %v5395, %v5434
        %v5436 = vand.u32 %v2401, 4294901760
        %v5437 = vsub.f32 %v2401, %v5436
        %5438 = vmatmul.f32.gmra.mxu0 %v5437
        %v5439 = vpop.f32.mrf.mxu0
        %v5440 = vadd.f32 %v5399, %v5439
        %5441 = vdwg.mxu0
        %5442 = vmatpush.msra.mxu0 0.0
        %5443 = vmatpush.msra.mxu0 0.0
        %5444 = vmatpush.msra.mxu0 0.0
        %5445 = vmatpush.msra.mxu0 0.0
        %5446 = vmatpush.msra.mxu0 0.0
        %5447 = vmatpush.msra.mxu0 0.0
        %5448 = vmatpush.msra.mxu0 0.0
        %5449 = vmatpush.msra.mxu0 0.0
        %5450 = vmatpush.msra.mxu0 0.0
        %5451 = vmatpush.msra.mxu0 0.0
        %5452 = vmatpush.msra.mxu0 0.0
        %5453 = vmatpush.msra.mxu0 0.0
        %5454 = vmatpush.msra.mxu0 0.0
        %5455 = vmatpush.msra.mxu0 0.0
        %v5456 = vand.u32 %v4585, 4294901760
        %5457 = vmatpush.msra.mxu0 %v5456
        %v5458 = vand.u32 %v4581, 4294901760
        %5459 = vmatpush.msra.mxu0 %v5458
        %v5460 = vand.u32 %v2392, 4294901760
        %v5461 = vsub.f32 %v2392, %v5460
        %v5462 = vand.u32 %v5461, 4294901760
        %5463 = vmatmul.f32.gmra.mxu0 %v5462
        %v5464 = vpop.f32.mrf.mxu0
        %v5465 = vadd.f32 %v5425, %v5464
        %v5466 = vand.u32 %v2395, 4294901760
        %v5467 = vsub.f32 %v2395, %v5466
        %v5468 = vand.u32 %v5467, 4294901760
        %5469 = vmatmul.f32.gmra.mxu0 %v5468
        %v5470 = vpop.f32.mrf.mxu0
        %v5471 = vadd.f32 %v5430, %v5470
        %v5472 = vand.u32 %v2398, 4294901760
        %v5473 = vsub.f32 %v2398, %v5472
        %v5474 = vand.u32 %v5473, 4294901760
        %5475 = vmatmul.f32.gmra.mxu0 %v5474
        %v5476 = vpop.f32.mrf.mxu0
        %v5477 = vadd.f32 %v5435, %v5476
        %v5478 = vand.u32 %v2401, 4294901760
        %v5479 = vsub.f32 %v2401, %v5478
        %v5480 = vand.u32 %v5479, 4294901760
        %5481 = vmatmul.f32.gmra.mxu0 %v5480
        %v5482 = vpop.f32.mrf.mxu0
        %v5483 = vadd.f32 %v5440, %v5482
        %5484 = vdwg.mxu0
        %5485 = vmatpush.msra.mxu0 0.0
        %5486 = vmatpush.msra.mxu0 0.0
        %5487 = vmatpush.msra.mxu0 0.0
        %5488 = vmatpush.msra.mxu0 0.0
        %5489 = vmatpush.msra.mxu0 0.0
        %5490 = vmatpush.msra.mxu0 0.0
        %5491 = vmatpush.msra.mxu0 0.0
        %5492 = vmatpush.msra.mxu0 0.0
        %5493 = vmatpush.msra.mxu0 0.0
        %5494 = vmatpush.msra.mxu0 0.0
        %5495 = vmatpush.msra.mxu0 0.0
        %5496 = vmatpush.msra.mxu0 0.0
        %5497 = vmatpush.msra.mxu0 0.0
        %5498 = vmatpush.msra.mxu0 0.0
        %v5499 = vand.u32 %v4585, 4294901760
        %v5500 = vsub.f32 %v4585, %v5499
        %v5501 = vand.u32 %v5500, 4294901760
        %5502 = vmatpush.msra.mxu0 %v5501
        %v5503 = vand.u32 %v4581, 4294901760
        %v5504 = vsub.f32 %v4581, %v5503
        %v5505 = vand.u32 %v5504, 4294901760
        %5506 = vmatpush.msra.mxu0 %v5505
        %v5507 = vand.u32 %v2392, 4294901760
        %5508 = vmatmul.f32.gmra.mxu0 %v5507
        %v5509 = vpop.f32.mrf.mxu0
        %v5510 = vadd.f32 %v5465, %v5509
        %v5511 = vand.u32 %v2395, 4294901760
        %5512 = vmatmul.f32.gmra.mxu0 %v5511
        %v5513 = vpop.f32.mrf.mxu0
        %v5514 = vadd.f32 %v5471, %v5513
        %v5515 = vand.u32 %v2398, 4294901760
        %5516 = vmatmul.f32.gmra.mxu0 %v5515
        %v5517 = vpop.f32.mrf.mxu0
        %v5518 = vadd.f32 %v5477, %v5517
        %v5519 = vand.u32 %v2401, 4294901760
        %5520 = vmatmul.f32.gmra.mxu0 %v5519
        %v5521 = vpop.f32.mrf.mxu0
        %v5522 = vadd.f32 %v5483, %v5521
        %5523 = vdwg.mxu0
        %5524 = vmatpush.msra.mxu0 0.0
        %5525 = vmatpush.msra.mxu0 0.0
        %5526 = vmatpush.msra.mxu0 0.0
        %5527 = vmatpush.msra.mxu0 0.0
        %5528 = vmatpush.msra.mxu0 0.0
        %5529 = vmatpush.msra.mxu0 0.0
        %5530 = vmatpush.msra.mxu0 0.0
        %5531 = vmatpush.msra.mxu0 0.0
        %5532 = vmatpush.msra.mxu0 0.0
        %5533 = vmatpush.msra.mxu0 0.0
        %5534 = vmatpush.msra.mxu0 0.0
        %5535 = vmatpush.msra.mxu0 0.0
        %5536 = vmatpush.msra.mxu0 0.0
        %5537 = vmatpush.msra.mxu0 0.0
        %v5538 = vand.u32 %v4585, 4294901760
        %5539 = vmatpush.msra.mxu0 %v5538
        %v5540 = vand.u32 %v4581, 4294901760
        %5541 = vmatpush.msra.mxu0 %v5540
        %v5542 = vand.u32 %v2392, 4294901760
        %5543 = vmatmul.f32.gmra.mxu0 %v5542
        %v5544 = vpop.f32.mrf.mxu0
        %v5545 = vadd.f32 %v5510, %v5544
        %v5546 = vand.u32 %v2395, 4294901760
        %5547 = vmatmul.f32.gmra.mxu0 %v5546
        %v5548 = vpop.f32.mrf.mxu0
        %v5549 = vadd.f32 %v5514, %v5548
        %v5550 = vand.u32 %v2398, 4294901760
        %5551 = vmatmul.f32.gmra.mxu0 %v5550
        %v5552 = vpop.f32.mrf.mxu0
        %v5553 = vadd.f32 %v5518, %v5552
        %v5554 = vand.u32 %v2401, 4294901760
        %5555 = vmatmul.f32.gmra.mxu0 %v5554
        %v5556 = vpop.f32.mrf.mxu0
        %v5557 = vadd.f32 %v5522, %v5556
        %5558 = vdwg.mxu0
        %5559 = vmatpush.msra.mxu0 0.0
        %5560 = vmatpush.msra.mxu0 0.0
        %5561 = vmatpush.msra.mxu0 0.0
        %5562 = vmatpush.msra.mxu0 0.0
        %5563 = vmatpush.msra.mxu0 0.0
        %5564 = vmatpush.msra.mxu0 0.0
        %5565 = vmatpush.msra.mxu0 0.0
        %5566 = vmatpush.msra.mxu0 0.0
        %5567 = vmatpush.msra.mxu0 0.0
        %5568 = vmatpush.msra.mxu0 0.0
        %5569 = vmatpush.msra.mxu0 0.0
        %5570 = vmatpush.msra.mxu0 0.0
        %5571 = vmatpush.msra.mxu0 0.0
        %5572 = vmatpush.msra.mxu0 0.0
        %v5573 = vand.u32 %v4801, 4294901760
        %5574 = vmatpush.msra.mxu0 %v5573
        %v5575 = vand.u32 %v4797, 4294901760
        %5576 = vmatpush.msra.mxu0 %v5575
        %v5577 = vand.u32 %v2392, 4294901760
        %v5578 = vsub.f32 %v2392, %v5577
        %v5579 = vand.u32 %v5578, 4294901760
        %v5580 = vsub.f32 %v5578, %v5579
        %v5581 = vand.u32 %v5580, 4294901760
        %5582 = vmatmul.f32.gmra.mxu0 %v5581
        %v5583 = vpop.f32.mrf.mxu0
        %v5584 = vadd.f32 %v5293, %v5583
        %v5585 = vand.u32 %v2395, 4294901760
        %v5586 = vsub.f32 %v2395, %v5585
        %v5587 = vand.u32 %v5586, 4294901760
        %v5588 = vsub.f32 %v5586, %v5587
        %v5589 = vand.u32 %v5588, 4294901760
        %5590 = vmatmul.f32.gmra.mxu0 %v5589
        %v5591 = vpop.f32.mrf.mxu0
        %v5592 = vadd.f32 %v5297, %v5591
        %v5593 = vand.u32 %v2398, 4294901760
        %v5594 = vsub.f32 %v2398, %v5593
        %v5595 = vand.u32 %v5594, 4294901760
        %v5596 = vsub.f32 %v5594, %v5595
        %v5597 = vand.u32 %v5596, 4294901760
        %5598 = vmatmul.f32.gmra.mxu0 %v5597
        %v5599 = vpop.f32.mrf.mxu0
        %v5600 = vadd.f32 %v5301, %v5599
        %v5601 = vand.u32 %v2401, 4294901760
        %v5602 = vsub.f32 %v2401, %v5601
        %v5603 = vand.u32 %v5602, 4294901760
        %v5604 = vsub.f32 %v5602, %v5603
        %v5605 = vand.u32 %v5604, 4294901760
        %5606 = vmatmul.f32.gmra.mxu0 %v5605
        %v5607 = vpop.f32.mrf.mxu0
        %v5608 = vadd.f32 %v5305, %v5607
        %5609 = vdwg.mxu0
        %5610 = vmatpush.msra.mxu0 0.0
        %5611 = vmatpush.msra.mxu0 0.0
        %5612 = vmatpush.msra.mxu0 0.0
        %5613 = vmatpush.msra.mxu0 0.0
        %5614 = vmatpush.msra.mxu0 0.0
        %5615 = vmatpush.msra.mxu0 0.0
        %5616 = vmatpush.msra.mxu0 0.0
        %5617 = vmatpush.msra.mxu0 0.0
        %5618 = vmatpush.msra.mxu0 0.0
        %5619 = vmatpush.msra.mxu0 0.0
        %5620 = vmatpush.msra.mxu0 0.0
        %5621 = vmatpush.msra.mxu0 0.0
        %5622 = vmatpush.msra.mxu0 0.0
        %5623 = vmatpush.msra.mxu0 0.0
        %v5624 = vand.u32 %v4801, 4294901760
        %v5625 = vsub.f32 %v4801, %v5624
        %v5626 = vand.u32 %v5625, 4294901760
        %v5627 = vsub.f32 %v5625, %v5626
        %v5628 = vand.u32 %v5627, 4294901760
        %5629 = vmatpush.msra.mxu0 %v5628
        %v5630 = vand.u32 %v4797, 4294901760
        %v5631 = vsub.f32 %v4797, %v5630
        %v5632 = vand.u32 %v5631, 4294901760
        %v5633 = vsub.f32 %v5631, %v5632
        %v5634 = vand.u32 %v5633, 4294901760
        %5635 = vmatpush.msra.mxu0 %v5634
        %v5636 = vand.u32 %v2392, 4294901760
        %5637 = vmatmul.f32.gmra.mxu0 %v5636
        %v5638 = vpop.f32.mrf.mxu0
        %v5639 = vadd.f32 %v5584, %v5638
        %v5640 = vand.u32 %v2395, 4294901760
        %5641 = vmatmul.f32.gmra.mxu0 %v5640
        %v5642 = vpop.f32.mrf.mxu0
        %v5643 = vadd.f32 %v5592, %v5642
        %v5644 = vand.u32 %v2398, 4294901760
        %5645 = vmatmul.f32.gmra.mxu0 %v5644
        %v5646 = vpop.f32.mrf.mxu0
        %v5647 = vadd.f32 %v5600, %v5646
        %v5648 = vand.u32 %v2401, 4294901760
        %5649 = vmatmul.f32.gmra.mxu0 %v5648
        %v5650 = vpop.f32.mrf.mxu0
        %v5651 = vadd.f32 %v5608, %v5650
        %5652 = vdwg.mxu0
        %5653 = vmatpush.msra.mxu0 0.0
        %5654 = vmatpush.msra.mxu0 0.0
        %5655 = vmatpush.msra.mxu0 0.0
        %5656 = vmatpush.msra.mxu0 0.0
        %5657 = vmatpush.msra.mxu0 0.0
        %5658 = vmatpush.msra.mxu0 0.0
        %5659 = vmatpush.msra.mxu0 0.0
        %5660 = vmatpush.msra.mxu0 0.0
        %5661 = vmatpush.msra.mxu0 0.0
        %5662 = vmatpush.msra.mxu0 0.0
        %5663 = vmatpush.msra.mxu0 0.0
        %5664 = vmatpush.msra.mxu0 0.0
        %5665 = vmatpush.msra.mxu0 0.0
        %5666 = vmatpush.msra.mxu0 0.0
        %v5667 = vand.u32 %v4801, 4294901760
        %v5668 = vsub.f32 %v4801, %v5667
        %5669 = vmatpush.msra.mxu0 %v5668
        %v5670 = vand.u32 %v4797, 4294901760
        %v5671 = vsub.f32 %v4797, %v5670
        %5672 = vmatpush.msra.mxu0 %v5671
        %v5673 = vand.u32 %v2392, 4294901760
        %v5674 = vsub.f32 %v2392, %v5673
        %5675 = vmatmul.f32.gmra.mxu0 %v5674
        %v5676 = vpop.f32.mrf.mxu0
        %v5677 = vadd.f32 %v5639, %v5676
        %v5678 = vand.u32 %v2395, 4294901760
        %v5679 = vsub.f32 %v2395, %v5678
        %5680 = vmatmul.f32.gmra.mxu0 %v5679
        %v5681 = vpop.f32.mrf.mxu0
        %v5682 = vadd.f32 %v5643, %v5681
        %v5683 = vand.u32 %v2398, 4294901760
        %v5684 = vsub.f32 %v2398, %v5683
        %5685 = vmatmul.f32.gmra.mxu0 %v5684
        %v5686 = vpop.f32.mrf.mxu0
        %v5687 = vadd.f32 %v5647, %v5686
        %v5688 = vand.u32 %v2401, 4294901760
        %v5689 = vsub.f32 %v2401, %v5688
        %5690 = vmatmul.f32.gmra.mxu0 %v5689
        %v5691 = vpop.f32.mrf.mxu0
        %v5692 = vadd.f32 %v5651, %v5691
        %5693 = vdwg.mxu0
        %5694 = vmatpush.msra.mxu0 0.0
        %5695 = vmatpush.msra.mxu0 0.0
        %5696 = vmatpush.msra.mxu0 0.0
        %5697 = vmatpush.msra.mxu0 0.0
        %5698 = vmatpush.msra.mxu0 0.0
        %5699 = vmatpush.msra.mxu0 0.0
        %5700 = vmatpush.msra.mxu0 0.0
        %5701 = vmatpush.msra.mxu0 0.0
        %5702 = vmatpush.msra.mxu0 0.0
        %5703 = vmatpush.msra.mxu0 0.0
        %5704 = vmatpush.msra.mxu0 0.0
        %5705 = vmatpush.msra.mxu0 0.0
        %5706 = vmatpush.msra.mxu0 0.0
        %5707 = vmatpush.msra.mxu0 0.0
        %v5708 = vand.u32 %v4801, 4294901760
        %5709 = vmatpush.msra.mxu0 %v5708
        %v5710 = vand.u32 %v4797, 4294901760
        %5711 = vmatpush.msra.mxu0 %v5710
        %v5712 = vand.u32 %v2392, 4294901760
        %v5713 = vsub.f32 %v2392, %v5712
        %v5714 = vand.u32 %v5713, 4294901760
        %5715 = vmatmul.f32.gmra.mxu0 %v5714
        %v5716 = vpop.f32.mrf.mxu0
        %v5717 = vadd.f32 %v5677, %v5716
        %v5718 = vand.u32 %v2395, 4294901760
        %v5719 = vsub.f32 %v2395, %v5718
        %v5720 = vand.u32 %v5719, 4294901760
        %5721 = vmatmul.f32.gmra.mxu0 %v5720
        %v5722 = vpop.f32.mrf.mxu0
        %v5723 = vadd.f32 %v5682, %v5722
        %v5724 = vand.u32 %v2398, 4294901760
        %v5725 = vsub.f32 %v2398, %v5724
        %v5726 = vand.u32 %v5725, 4294901760
        %5727 = vmatmul.f32.gmra.mxu0 %v5726
        %v5728 = vpop.f32.mrf.mxu0
        %v5729 = vadd.f32 %v5687, %v5728
        %v5730 = vand.u32 %v2401, 4294901760
        %v5731 = vsub.f32 %v2401, %v5730
        %v5732 = vand.u32 %v5731, 4294901760
        %5733 = vmatmul.f32.gmra.mxu0 %v5732
        %v5734 = vpop.f32.mrf.mxu0
        %v5735 = vadd.f32 %v5692, %v5734
        %5736 = vdwg.mxu0
        %5737 = vmatpush.msra.mxu0 0.0
        %5738 = vmatpush.msra.mxu0 0.0
        %5739 = vmatpush.msra.mxu0 0.0
        %5740 = vmatpush.msra.mxu0 0.0
        %5741 = vmatpush.msra.mxu0 0.0
        %5742 = vmatpush.msra.mxu0 0.0
        %5743 = vmatpush.msra.mxu0 0.0
        %5744 = vmatpush.msra.mxu0 0.0
        %5745 = vmatpush.msra.mxu0 0.0
        %5746 = vmatpush.msra.mxu0 0.0
        %5747 = vmatpush.msra.mxu0 0.0
        %5748 = vmatpush.msra.mxu0 0.0
        %5749 = vmatpush.msra.mxu0 0.0
        %5750 = vmatpush.msra.mxu0 0.0
        %v5751 = vand.u32 %v4801, 4294901760
        %v5752 = vsub.f32 %v4801, %v5751
        %v5753 = vand.u32 %v5752, 4294901760
        %5754 = vmatpush.msra.mxu0 %v5753
        %v5755 = vand.u32 %v4797, 4294901760
        %v5756 = vsub.f32 %v4797, %v5755
        %v5757 = vand.u32 %v5756, 4294901760
        %5758 = vmatpush.msra.mxu0 %v5757
        %v5759 = vand.u32 %v2392, 4294901760
        %5760 = vmatmul.f32.gmra.mxu0 %v5759
        %v5761 = vpop.f32.mrf.mxu0
        %v5762 = vadd.f32 %v5717, %v5761
        %v5763 = vand.u32 %v2395, 4294901760
        %5764 = vmatmul.f32.gmra.mxu0 %v5763
        %v5765 = vpop.f32.mrf.mxu0
        %v5766 = vadd.f32 %v5723, %v5765
        %v5767 = vand.u32 %v2398, 4294901760
        %5768 = vmatmul.f32.gmra.mxu0 %v5767
        %v5769 = vpop.f32.mrf.mxu0
        %v5770 = vadd.f32 %v5729, %v5769
        %v5771 = vand.u32 %v2401, 4294901760
        %5772 = vmatmul.f32.gmra.mxu0 %v5771
        %v5773 = vpop.f32.mrf.mxu0
        %v5774 = vadd.f32 %v5735, %v5773
        %5775 = vdwg.mxu0
        %5776 = vmatpush.msra.mxu0 0.0
        %5777 = vmatpush.msra.mxu0 0.0
        %5778 = vmatpush.msra.mxu0 0.0
        %5779 = vmatpush.msra.mxu0 0.0
        %5780 = vmatpush.msra.mxu0 0.0
        %5781 = vmatpush.msra.mxu0 0.0
        %5782 = vmatpush.msra.mxu0 0.0
        %5783 = vmatpush.msra.mxu0 0.0
        %5784 = vmatpush.msra.mxu0 0.0
        %5785 = vmatpush.msra.mxu0 0.0
        %5786 = vmatpush.msra.mxu0 0.0
        %5787 = vmatpush.msra.mxu0 0.0
        %5788 = vmatpush.msra.mxu0 0.0
        %5789 = vmatpush.msra.mxu0 0.0
        %v5790 = vand.u32 %v4801, 4294901760
        %5791 = vmatpush.msra.mxu0 %v5790
        %v5792 = vand.u32 %v4797, 4294901760
        %5793 = vmatpush.msra.mxu0 %v5792
        %v5794 = vand.u32 %v2392, 4294901760
        %5795 = vmatmul.f32.gmra.mxu0 %v5794
        %v5796 = vpop.f32.mrf.mxu0
        %v5797 = vadd.f32 %v5762, %v5796
        %v5798 = vand.u32 %v2395, 4294901760
        %5799 = vmatmul.f32.gmra.mxu0 %v5798
        %v5800 = vpop.f32.mrf.mxu0
        %v5801 = vadd.f32 %v5766, %v5800
        %v5802 = vand.u32 %v2398, 4294901760
        %5803 = vmatmul.f32.gmra.mxu0 %v5802
        %v5804 = vpop.f32.mrf.mxu0
        %v5805 = vadd.f32 %v5770, %v5804
        %v5806 = vand.u32 %v2401, 4294901760
        %5807 = vmatmul.f32.gmra.mxu0 %v5806
        %v5808 = vpop.f32.mrf.mxu0
        %v5809 = vadd.f32 %v5774, %v5808
        %5810 = vdwg.mxu0
        %v5811 = vadd.f32 %v5545, %v3533
        %v5812 = vadd.f32 %v5797, %v3534
        %v5813 = vadd.f32 %v5549, %v3535
        %v5814 = vadd.f32 %v5801, %v3536
        %v5815 = vadd.f32 %v5553, %v3537
        %v5816 = vadd.f32 %v5805, %v3538
        %v5817 = vadd.f32 %v5557, %v3539
        %v5818 = vadd.f32 %v5809, %v3540
        %5819 = vst [vmem:[%s542] sm:$0xff] %v5811
        %5820 = vst [vmem:[%s542 + $0x8] sm:$0xff] %v5812
        %5821 = vst [vmem:[%s542 + $0x10] sm:$0xff] %v5813
        %5822 = vst [vmem:[%s542 + $0x18] sm:$0xff] %v5814
        %5823 = vst [vmem:[%s542 + $0x20] sm:$0xff] %v5815
        %5824 = vst [vmem:[%s542 + $0x28] sm:$0xff] %v5816
        %5825 = vst [vmem:[%s542 + $0x30] sm:$0xff] %v5817
        %5826 = vst [vmem:[%s542 + $0x38] sm:$0xff] %v5818
        %s5827 = sand.u32 %s382, 1
        %s5828 = scalar_lea.sflag [#allocation4], %s5827
        %s5829 = sand.u32 %s382, 1
        %s5830 = smul.addr %s5829, 64
        %s5831 = scalar_lea.vmem [#allocation5], %s5830
        // Predicated region
        $region89: #{tpu_custom_call.1} parent=83 // pred_check
          %p5832 = pneg %p392
        $region90: #{tpu_custom_call.1} parent=83 // pred_check_branch
          %5834 = sbr.rel (%p5832) target = $region92
        $region91: #{tpu_custom_call.1} parent=83 // pred_region
          %s5835 = smul.u32 4, %s33
          %5837 = vsyncadd %s5828, 0
          %s5838 = smul.addr %s5835, 2
          %s5839 = smul.addr %s5838, 8
          %s5840 = scalar_lea.hbm %s16, %s5839
          %s5841 = sshll.u32 %s5831, 4
          %s5842 = int_to_ptr.vmem [resolvable:$true] %s5841
          %s5843 = sshll.u32 %s5840, 4
          %s5844 = int_to_ptr.hbm [resolvable:$true] %s5843
          %5849 = dma.vmem_to_hbm [thread:$0]  %s5842, 1024, %s5844, %s5828, 256, 256, 16
        $region92: #{tpu_custom_call.1} parent=83 // pred_fallthru
          _
      $region84: #{tpu_custom_call.1} parent=5 // pred_fallthru
        _
      %p5850 = scmp.le.s32.totalorder 2, %s28
      // Predicated region
      $region93: #{tpu_custom_call.1} parent=5 // pred_check
        %p5851 = pneg %p5850
      $region94: #{tpu_custom_call.1} parent=5 // pred_check_branch
        %5853 = sbr.rel (%p5851) target = $region96
      $region95: #{tpu_custom_call.1} parent=5 // pred_region
        %s5854 = ssub.s32 %s28, 2
        // Predicated region
        $region97: #{tpu_custom_call.1} parent=95 // pred_check
          %p5855 = pneg %p398
        $region98: #{tpu_custom_call.1} parent=95 // pred_check_branch
          %5857 = sbr.rel (%p5855) target = $region100
        $region99: #{tpu_custom_call.1} parent=95 // pred_region
          %s5858 = sand.u32 %s383, 1
          %s5859 = scalar_lea.sflag [#allocation4], %s5858
          %s5860 = sand.u32 %s383, 1
          %s5861 = smul.addr %s5860, 64
          %s5862 = scalar_lea.vmem [#allocation5], %s5861
          %5864 = dma.done %s5859, 1024
        $region100: #{tpu_custom_call.1} parent=95 // pred_fallthru
          _
      $region96: #{tpu_custom_call.1} parent=5 // pred_fallthru
        _
    $region6: #{tpu_custom_call.1} parent=1 // loop_footer
      %s32 = sadd.s32 1, %s28
    $region7: #{tpu_custom_call.1} parent=1 // loop_footer_branch
      %27 = sbr.rel target = $region3
    $region8: #{tpu_custom_call.1} parent=1 // loop_exit
      _
    %5865 = vsyncpa [#allocation3], 1
    %s5866 = scalar_lea.sflag [#allocation3], 1
    %5867 = vsyncpa %s5866, 1
    %5868 = vsyncpa [#allocation4], 1
    %s5869 = scalar_lea.sflag [#allocation4], 1
    %5870 = vsyncpa %s5869, 1

</llo_original>
